<compile_context>
chip_gen: v7x
topology: tpu7x:2x2x1
jax: 0.10.0
libtpu: 0.0.40
codegen_flags: <defaults>
</compile_context>

<pallas_src>
import numpy as np
import jax
import jax.numpy as jnp
from jax import lax
from jax.experimental import pallas as pl
from jax.experimental.pallas import tpu as pltpu


# ------------------------------------------------------------------ constants
_JOINT_TO_IGNORE = np.array([0, 1, 6, 11, 16, 20, 23, 24, 28, 31])
_DIMS_TO_IGNORE = np.concatenate(
    (_JOINT_TO_IGNORE * 3, _JOINT_TO_IGNORE * 3 + 1, _JOINT_TO_IGNORE * 3 + 2)
)
DIM_USED = np.setdiff1d(np.arange(96), _DIMS_TO_IGNORE)  # 66 entries

INDEX_2212 = [[0], [1, 2, 3], [4], [5, 6, 7], [8, 9], [10, 11], [12], [13],
              [14, 15, 16], [17], [18], [19, 20, 21]]
INDEX_127 = [[0, 1], [2, 3], [4, 5], [6, 7], [7, 8], [9, 10], [10, 11]]
INDEX_74 = [[0, 2], [1, 2], [3, 4], [5, 6]]


def _selection_matrix(dim_used, in_feats=96):
    """p22 = S @ p32 along the feature axis (pure 0/1 selection)."""
    m = np.zeros((len(dim_used), in_feats), dtype=np.float64)
    m[np.arange(len(dim_used)), np.asarray(dim_used)] = 1.0
    return m


def _down_matrix(index, in_joints):
    """Group-mean over joints, applied separately to each of the 3 coords."""
    out_joints = len(index)
    m = np.zeros((out_joints * 3, in_joints * 3), dtype=np.float64)
    for i, grp in enumerate(index):
        w = 1.0 / len(grp)
        for c in range(3):
            for j in grp:
                m[3 * i + c, 3 * j + c] = w
    return m


# Pre-composed (float64 -> float32) weights: every output level is a single
# independent matmul against the raw 96-feature input.
_S22 = _selection_matrix(DIM_USED)            # (66, 96)
_M12 = _down_matrix(INDEX_2212, 22)           # (36, 66)
_M7 = _down_matrix(INDEX_127, 12)             # (21, 36)
_M4 = _down_matrix(INDEX_74, 7)               # (12, 21)

C22 = jnp.asarray(_S22, dtype=jnp.float32)                    # (66, 96)
C12 = jnp.asarray(_M12 @ _S22, dtype=jnp.float32)             # (36, 96)
C7 = jnp.asarray(_M7 @ _M12 @ _S22, dtype=jnp.float32)        # (21, 96)
C4 = jnp.asarray(_M4 @ _M7 @ _M12 @ _S22, dtype=jnp.float32)  # (12, 96)

_HI = lax.Precision.HIGHEST


# ------------------------------------------------------------------ kernel
def _proc_kernel(x_ref, c22_ref, c12_ref, c7_ref, c4_ref,
                 p22_ref, p12_ref, p7_ref, p4_ref):
    # x_ref block: (NB, 96, T) — NB batch samples, features on sublanes,
    # sequence on lanes.  Weights are hoisted out of the loop (loaded once).
    c22 = c22_ref[...]
    c12 = c12_ref[...]
    c7 = c7_ref[...]
    c4 = c4_ref[...]
    nb = x_ref.shape[0]
    for n in range(nb):            # static unroll; samples are independent
        xn = x_ref[n]              # (96, T)
        p22_ref[n] = jnp.dot(c22, xn, precision=_HI,
                             preferred_element_type=jnp.float32)
        p12_ref[n] = jnp.dot(c12, xn, precision=_HI,
                             preferred_element_type=jnp.float32)
        p7_ref[n] = jnp.dot(c7, xn, precision=_HI,
                            preferred_element_type=jnp.float32)
        p4_ref[n] = jnp.dot(c4, xn, precision=_HI,
                            preferred_element_type=jnp.float32)


# ------------------------------------------------------------------ wrapper
def proc_forward(x, preproc=True, block_batch=None):
    """x: (N, T, 96) float32.  Returns dict like the PyTorch module."""
    if not preproc:
        return x

    x = x.astype(jnp.float32)
    N, T, F = x.shape
    assert F == 96

    # p32 is a required (bit-exact) module output; materialize it once and let
    # the kernel consume it directly — no redundant HBM pass.
    x32 = jnp.transpose(x, (0, 2, 1))                  # (N, 96, T)

    if block_batch is None:
        # >= 2 grid steps when N > 1 so both TensorCores get work (megacore),
        # capped at 8 samples/step (plenty to amortize per-step overhead).
        block_batch = max(1, min(8, pl.cdiv(N, 2)))
    nb = int(block_batch)
    grid = (pl.cdiv(N, nb),)

    # Weights: constant index_map -> resident in VMEM across grid steps.
    def w_spec(shape):
        return pl.BlockSpec(shape, lambda i: (0, 0))

    def bt_spec(c):
        return pl.BlockSpec((nb, c, T), lambda i: (i, 0, 0))

    p22, p12, p7, p4 = pl.pallas_call(
        _proc_kernel,
        out_shape=(
            jax.ShapeDtypeStruct((N, 66, T), jnp.float32),
            jax.ShapeDtypeStruct((N, 36, T), jnp.float32),
            jax.ShapeDtypeStruct((N, 21, T), jnp.float32),
            jax.ShapeDtypeStruct((N, 12, T), jnp.float32),
        ),
        grid_spec=pltpu.PrefetchScalarGridSpec(
            num_scalar_prefetch=0,
            grid=grid,
            in_specs=[
                bt_spec(96),
                w_spec((66, 96)),
                w_spec((36, 96)),
                w_spec((21, 96)),
                w_spec((12, 96)),
            ],
            out_specs=[bt_spec(66), bt_spec(36), bt_spec(21), bt_spec(12)],
        ),
        compiler_params=pltpu.CompilerParams(
            dimension_semantics=("parallel",),
            vmem_limit_bytes=32 * 1024 * 1024,
        ),
    )(x32, C22, C12, C7, C4)

    return {"p32": x32, "p22": p22, "p12": p12, "p7": p7, "p4": p4}


# ------------------------------------------------------------------ reference
def _proc_reference_np(x):
    """float64 NumPy replica of the PyTorch module (select + chained means)."""
    x = np.asarray(x, dtype=np.float64)
    x32 = np.transpose(x, (0, 2, 1))
    p22 = x32[:, DIM_USED, :]

    def down(a, index):
        n, feats, t = a.shape
        a = a.reshape(n, -1, 3, t)
        out = np.zeros((n, len(index), 3, t), dtype=np.float64)
        for i, grp in enumerate(index):
            out[:, i] = a[:, grp].mean(axis=1)
        return out.reshape(n, -1, t)

    p12 = down(p22, INDEX_2212)
    p7 = down(p12, INDEX_127)
    p4 = down(p7, INDEX_74)
    return {"p32": x32, "p22": p22, "p12": p12, "p7": p7, "p4": p4}


if __name__ == "__main__":
    key = jax.random.PRNGKey(0)
    N, T = 2, 8
    x = jax.random.normal(key, (N, T, 96), dtype=jnp.float32)

    proc = jax.jit(lambda inp: proc_forward(inp, preproc=True))
    out = proc(x)
    out = jax.block_until_ready(out)

    ref = _proc_reference_np(np.asarray(x))
    for k in ("p32", "p22", "p12", "p7", "p4"):
        np.testing.assert_allclose(np.asarray(out[k]), ref[k],
                                   rtol=1e-5, atol=1e-5)

    print("KERNEL_OK")
</pallas_src>

<mosaic_0001>
module attributes {stable_mosaic.version = 11 : i64} {
  func.func @_proc_kernel(%arg0: i32, %arg1: memref<1x96x8xf32, #tpu.memory_space<vmem>>, %arg2: memref<66x96xf32, #tpu.memory_space<vmem>>, %arg3: memref<36x96xf32, #tpu.memory_space<vmem>>, %arg4: memref<21x96xf32, #tpu.memory_space<vmem>>, %arg5: memref<12x96xf32, #tpu.memory_space<vmem>>, %arg6: memref<1x66x8xf32, #tpu.memory_space<vmem>>, %arg7: memref<1x36x8xf32, #tpu.memory_space<vmem>>, %arg8: memref<1x21x8xf32, #tpu.memory_space<vmem>>, %arg9: memref<1x12x8xf32, #tpu.memory_space<vmem>>) attributes {dimension_semantics = [#tpu.dimension_semantics<parallel>], iteration_bounds = array<i64: 2>, scalar_prefetch = 0 : i64, scratch_operands = 0 : i64, tpu.core_type = #tpu.core_type<tc>, window_params = [{transform_indices = @transform_0, window_bounds = array<i64: 1, 96, 8>}, {pipeline_mode = #tpu.pipeline_mode<synchronous>, transform_indices = @transform_1, window_bounds = array<i64: 66, 96>}, {pipeline_mode = #tpu.pipeline_mode<synchronous>, transform_indices = @transform_2, window_bounds = array<i64: 36, 96>}, {pipeline_mode = #tpu.pipeline_mode<synchronous>, transform_indices = @transform_3, window_bounds = array<i64: 21, 96>}, {pipeline_mode = #tpu.pipeline_mode<synchronous>, transform_indices = @transform_4, window_bounds = array<i64: 12, 96>}, {transform_indices = @transform_5, window_bounds = array<i64: 1, 66, 8>}, {transform_indices = @transform_6, window_bounds = array<i64: 1, 36, 8>}, {transform_indices = @transform_7, window_bounds = array<i64: 1, 21, 8>}, {transform_indices = @transform_8, window_bounds = array<i64: 1, 12, 8>}]} {
    %c0 = arith.constant 0 : index
    %c0_0 = arith.constant 0 : index
    %0 = vector.load %arg2[%c0, %c0_0] : memref<66x96xf32, #tpu.memory_space<vmem>>, vector<66x96xf32>
    %c0_1 = arith.constant 0 : index
    %c0_2 = arith.constant 0 : index
    %1 = vector.load %arg3[%c0_1, %c0_2] : memref<36x96xf32, #tpu.memory_space<vmem>>, vector<36x96xf32>
    %c0_3 = arith.constant 0 : index
    %c0_4 = arith.constant 0 : index
    %2 = vector.load %arg4[%c0_3, %c0_4] : memref<21x96xf32, #tpu.memory_space<vmem>>, vector<21x96xf32>
    %c0_5 = arith.constant 0 : index
    %c0_6 = arith.constant 0 : index
    %3 = vector.load %arg5[%c0_5, %c0_6] : memref<12x96xf32, #tpu.memory_space<vmem>>, vector<12x96xf32>
    %c0_7 = arith.constant 0 : index
    %c0_8 = arith.constant 0 : index
    %c0_9 = arith.constant 0 : index
    %4 = vector.load %arg1[%c0_7, %c0_8, %c0_9] : memref<1x96x8xf32, #tpu.memory_space<vmem>>, vector<1x96x8xf32>
    %5 = vector.shape_cast %4 : vector<1x96x8xf32> to vector<96x8xf32>
    %cst = arith.constant dense<0.000000e+00> : vector<66x8xf32>
    %6 = tpu.matmul %0, %5, %cst {dimension_numbers = #tpu.dot_dimension_numbers<[1], [0], [0], [1], [0, 0, 1, 1], [], []>, precision = #tpu.contract_precision<fp32>} : vector<66x96xf32>, vector<96x8xf32>, vector<66x8xf32> -> vector<66x8xf32>
    %c0_10 = arith.constant 0 : index
    %c0_11 = arith.constant 0 : index
    %c0_12 = arith.constant 0 : index
    %7 = vector.load %arg6[%c0_10, %c0_11, %c0_12] : memref<1x66x8xf32, #tpu.memory_space<vmem>>, vector<1x66x8xf32>
    %8 = vector.shape_cast %7 : vector<1x66x8xf32> to vector<66x8xf32>
    %9 = vector.shape_cast %6 : vector<66x8xf32> to vector<1x66x8xf32>
    tpu.vector_store %arg6[%c0_10, %c0_11, %c0_12], %9 {strides = array<i32>} : memref<1x66x8xf32, #tpu.memory_space<vmem>>, vector<1x66x8xf32>,
    %cst_13 = arith.constant dense<0.000000e+00> : vector<36x8xf32>
    %10 = tpu.matmul %1, %5, %cst_13 {dimension_numbers = #tpu.dot_dimension_numbers<[1], [0], [0], [1], [0, 0, 1, 1], [], []>, precision = #tpu.contract_precision<fp32>} : vector<36x96xf32>, vector<96x8xf32>, vector<36x8xf32> -> vector<36x8xf32>
    %c0_14 = arith.constant 0 : index
    %c0_15 = arith.constant 0 : index
    %c0_16 = arith.constant 0 : index
    %11 = vector.load %arg7[%c0_14, %c0_15, %c0_16] : memref<1x36x8xf32, #tpu.memory_space<vmem>>, vector<1x36x8xf32>
    %12 = vector.shape_cast %11 : vector<1x36x8xf32> to vector<36x8xf32>
    %13 = vector.shape_cast %10 : vector<36x8xf32> to vector<1x36x8xf32>
    tpu.vector_store %arg7[%c0_14, %c0_15, %c0_16], %13 {strides = array<i32>} : memref<1x36x8xf32, #tpu.memory_space<vmem>>, vector<1x36x8xf32>,
    %cst_17 = arith.constant dense<0.000000e+00> : vector<21x8xf32>
    %14 = tpu.matmul %2, %5, %cst_17 {dimension_numbers = #tpu.dot_dimension_numbers<[1], [0], [0], [1], [0, 0, 1, 1], [], []>, precision = #tpu.contract_precision<fp32>} : vector<21x96xf32>, vector<96x8xf32>, vector<21x8xf32> -> vector<21x8xf32>
    %c0_18 = arith.constant 0 : index
    %c0_19 = arith.constant 0 : index
    %c0_20 = arith.constant 0 : index
    %15 = vector.load %arg8[%c0_18, %c0_19, %c0_20] : memref<1x21x8xf32, #tpu.memory_space<vmem>>, vector<1x21x8xf32>
    %16 = vector.shape_cast %15 : vector<1x21x8xf32> to vector<21x8xf32>
    %17 = vector.shape_cast %14 : vector<21x8xf32> to vector<1x21x8xf32>
    tpu.vector_store %arg8[%c0_18, %c0_19, %c0_20], %17 {strides = array<i32>} : memref<1x21x8xf32, #tpu.memory_space<vmem>>, vector<1x21x8xf32>,
    %cst_21 = arith.constant dense<0.000000e+00> : vector<12x8xf32>
    %18 = tpu.matmul %3, %5, %cst_21 {dimension_numbers = #tpu.dot_dimension_numbers<[1], [0], [0], [1], [0, 0, 1, 1], [], []>, precision = #tpu.contract_precision<fp32>} : vector<12x96xf32>, vector<96x8xf32>, vector<12x8xf32> -> vector<12x8xf32>
    %c0_22 = arith.constant 0 : index
    %c0_23 = arith.constant 0 : index
    %c0_24 = arith.constant 0 : index
    %19 = vector.load %arg9[%c0_22, %c0_23, %c0_24] : memref<1x12x8xf32, #tpu.memory_space<vmem>>, vector<1x12x8xf32>
    %20 = vector.shape_cast %19 : vector<1x12x8xf32> to vector<12x8xf32>
    %21 = vector.shape_cast %18 : vector<12x8xf32> to vector<1x12x8xf32>
    tpu.vector_store %arg9[%c0_22, %c0_23, %c0_24], %21 {strides = array<i32>} : memref<1x12x8xf32, #tpu.memory_space<vmem>>, vector<1x12x8xf32>,
    return
  }
  func.func @transform_0(%arg0: i32) -> (i32, i32, i32) {
    %c0_i32 = arith.constant 0 : i32
    %c0_i32_0 = arith.constant 0 : i32
    %c0_i32_1 = arith.constant 0 : i32
    return %arg0, %c0_i32, %c0_i32_0 : i32, i32, i32
  }
  func.func @transform_1(%arg0: i32) -> (i32, i32) {
    %c0_i32 = arith.constant 0 : i32
    %c0_i32_0 = arith.constant 0 : i32
    %c0_i32_1 = arith.constant 0 : i32
    return %c0_i32, %c0_i32_0 : i32, i32
  }
  func.func @transform_2(%arg0: i32) -> (i32, i32) {
    %c0_i32 = arith.constant 0 : i32
    %c0_i32_0 = arith.constant 0 : i32
    %c0_i32_1 = arith.constant 0 : i32
    return %c0_i32, %c0_i32_0 : i32, i32
  }
  func.func @transform_3(%arg0: i32) -> (i32, i32) {
    %c0_i32 = arith.constant 0 : i32
    %c0_i32_0 = arith.constant 0 : i32
    %c0_i32_1 = arith.constant 0 : i32
    return %c0_i32, %c0_i32_0 : i32, i32
  }
  func.func @transform_4(%arg0: i32) -> (i32, i32) {
    %c0_i32 = arith.constant 0 : i32
    %c0_i32_0 = arith.constant 0 : i32
    %c0_i32_1 = arith.constant 0 : i32
    return %c0_i32, %c0_i32_0 : i32, i32
  }
  func.func @transform_5(%arg0: i32) -> (i32, i32, i32) {
    %c0_i32 = arith.constant 0 : i32
    %c0_i32_0 = arith.constant 0 : i32
    %c0_i32_1 = arith.constant 0 : i32
    return %arg0, %c0_i32, %c0_i32_0 : i32, i32, i32
  }
  func.func @transform_6(%arg0: i32) -> (i32, i32, i32) {
    %c0_i32 = arith.constant 0 : i32
    %c0_i32_0 = arith.constant 0 : i32
    %c0_i32_1 = arith.constant 0 : i32
    return %arg0, %c0_i32, %c0_i32_0 : i32, i32, i32
  }
  func.func @transform_7(%arg0: i32) -> (i32, i32, i32) {
    %c0_i32 = arith.constant 0 : i32
    %c0_i32_0 = arith.constant 0 : i32
    %c0_i32_1 = arith.constant 0 : i32
    return %arg0, %c0_i32, %c0_i32_0 : i32, i32, i32
  }
  func.func @transform_8(%arg0: i32) -> (i32, i32, i32) {
    %c0_i32 = arith.constant 0 : i32
    %c0_i32_0 = arith.constant 0 : i32
    %c0_i32_1 = arith.constant 0 : i32
    return %arg0, %c0_i32, %c0_i32_0 : i32, i32, i32
  }
}

</mosaic_0001>

<llo_original>
// kernel: _lambda_.1
$region0: #{_lambda_.1}
  #allocation0 [shape = 'u32[]', space=smem, size = 0x4, offset = 0x4, fixed_abs, tag = 'smem constant byte address 0x4 - core index']
  #allocation1 [shape = 'u32[144,128]{1,0:T(1,128)}', space=vmem, size = 0x12000, scoped, tag = 'internal scratch']
  %s0 = inlined_call_operand.vmem [shape: f32[2,96,8], index: 0, kind: input, shape index: {}]
  %s1 = inlined_call_operand.vmem [shape: f32[66,96], index: 1, kind: input, shape index: {}]
  %s2 = inlined_call_operand.vmem [shape: f32[36,96], index: 2, kind: input, shape index: {}]
  %s3 = inlined_call_operand.vmem [shape: f32[21,96], index: 3, kind: input, shape index: {}]
  %s4 = inlined_call_operand.vmem [shape: f32[12,96], index: 4, kind: input, shape index: {}]
  %s5 = inlined_call_operand.vmem [shape: f32[2,66,8], index: 5, kind: output, shape index: {0}]
  %s6 = inlined_call_operand.vmem [shape: f32[2,36,8], index: 6, kind: output, shape index: {1}]
  %s7 = inlined_call_operand.vmem [shape: f32[2,21,8], index: 7, kind: output, shape index: {2}]
  %s8 = inlined_call_operand.vmem [shape: f32[2,12,8], index: 8, kind: output, shape index: {3}]
  %9 = xla_tuple %s5, %s6, %s7, %s8
  %s10 = sld [smem:[#allocation0]]
  $region77: #{_lambda_.1} parent=0
    _
  %s12 = ssub.s32 1, %s10
  %s13 = scalar_select 0, %s12, %s10
  loop: start=0, step=1, limit=4
  $region2: #{_lambda_.1} parent=0 // loop_pre_header
    _
  $region3: #{_lambda_.1} parent=0 // loop_header
    %s15 = sphi 0, %s19
    %p16 = scmp.ge.s32.totalorder %s15, 4
    %s25 = sphi 0, %s27
    %s28 = sphi 0, %s25
    %s29 = sphi 0, %s28
    %s45 = sphi 0, %s29
    %s49 = sphi 0, %s49
    %s51 = sphi 0, %s49
    %s52 = sphi 0, %s51
    %s66 = sphi 0, %s52
    %s70 = sphi 0, %s70
    %s72 = sphi 0, %s70
    %s73 = sphi 0, %s72
    %s87 = sphi 0, %s73
    %s91 = sphi 0, %s91
    %s93 = sphi 0, %s91
    %s94 = sphi 0, %s93
    %s108 = sphi 0, %s94
    %s112 = sphi 0, %s112
    %s114 = sphi 0, %s112
    %s115 = sphi 0, %s114
    %s129 = sphi 0, %s115
    %s135 = sphi 0, %s137
    %s138 = sphi 0, %s135
    %s139 = sphi 0, %s138
    %s155 = sphi 0, %s139
    %s161 = sphi 0, %s163
    %s164 = sphi 0, %s161
    %s165 = sphi 0, %s164
    %s181 = sphi 0, %s165
    %s187 = sphi 0, %s189
    %s190 = sphi 0, %s187
    %s191 = sphi 0, %s190
    %s207 = sphi 0, %s191
    %s213 = sphi 0, %s215
    %s216 = sphi 0, %s213
    %s217 = sphi 0, %s216
    %s233 = sphi 0, %s217
  $region4: #{_lambda_.1} parent=0 // loop_header_branch
    %18 = sbr.rel (%p16) target = $region8
  $region5: #{_lambda_.1} parent=0 // loop_body
    %s20 = ssub.s32 %s15, 1
    %s21 = ssub.s32 %s15, 2
    %s22 = sadd.s32 %s15, 1
    %s23 = ssub.s32 %s15, %s22
    %p24 = scmp.eq.s32.totalorder %s23, 0
    %s26 = sadd.s32 %s25, 1
    %s27 = scalar_select %p24, %s25, %s26
    %p30 = pneg %p24
    %p31 = scmp.eq.s32.totalorder %s15, 1
    %p32 = por %p30, %p31
    %p33 = scmp.ne.s32.totalorder %s25, %s28
    %p34 = scmp.eq.s32.totalorder %s15, 0
    %p35 = por %p33, %p34
    %p36 = scmp.ne.s32.totalorder %s25, %s28
    %p37 = scmp.eq.s32.totalorder %s20, 1
    %p38 = por %p36, %p37
    %p39 = scmp.ne.s32.totalorder %s28, %s29
    %p40 = scmp.eq.s32.totalorder %s20, 0
    %p41 = por %p39, %p40
    %p42 = scmp.ne.s32.totalorder %s28, %s29
    %p43 = scmp.eq.s32.totalorder %s21, 1
    %p44 = por %p42, %p43
    %p46 = scmp.ne.s32.totalorder %s29, %s45
    %p47 = scmp.eq.s32.totalorder %s21, 0
    %p48 = por %p46, %p47
    %s50 = sadd.s32 %s49, 1
    %p53 = scmp.eq.s32.totalorder %s15, 1
    %p54 = scmp.ne.s32.totalorder %s49, %s51
    %p55 = scmp.eq.s32.totalorder %s15, 0
    %p56 = por %p54, %p55
    %p57 = scmp.ne.s32.totalorder %s49, %s51
    %p58 = scmp.eq.s32.totalorder %s20, 1
    %p59 = por %p57, %p58
    %p60 = scmp.ne.s32.totalorder %s51, %s52
    %p61 = scmp.eq.s32.totalorder %s20, 0
    %p62 = por %p60, %p61
    %p63 = scmp.ne.s32.totalorder %s51, %s52
    %p64 = scmp.eq.s32.totalorder %s21, 1
    %p65 = por %p63, %p64
    %p67 = scmp.ne.s32.totalorder %s52, %s66
    %p68 = scmp.eq.s32.totalorder %s21, 0
    %p69 = por %p67, %p68
    %s71 = sadd.s32 %s70, 1
    %p74 = scmp.eq.s32.totalorder %s15, 1
    %p75 = scmp.ne.s32.totalorder %s70, %s72
    %p76 = scmp.eq.s32.totalorder %s15, 0
    %p77 = por %p75, %p76
    %p78 = scmp.ne.s32.totalorder %s70, %s72
    %p79 = scmp.eq.s32.totalorder %s20, 1
    %p80 = por %p78, %p79
    %p81 = scmp.ne.s32.totalorder %s72, %s73
    %p82 = scmp.eq.s32.totalorder %s20, 0
    %p83 = por %p81, %p82
    %p84 = scmp.ne.s32.totalorder %s72, %s73
    %p85 = scmp.eq.s32.totalorder %s21, 1
    %p86 = por %p84, %p85
    %p88 = scmp.ne.s32.totalorder %s73, %s87
    %p89 = scmp.eq.s32.totalorder %s21, 0
    %p90 = por %p88, %p89
    %s92 = sadd.s32 %s91, 1
    %p95 = scmp.eq.s32.totalorder %s15, 1
    %p96 = scmp.ne.s32.totalorder %s91, %s93
    %p97 = scmp.eq.s32.totalorder %s15, 0
    %p98 = por %p96, %p97
    %p99 = scmp.ne.s32.totalorder %s91, %s93
    %p100 = scmp.eq.s32.totalorder %s20, 1
    %p101 = por %p99, %p100
    %p102 = scmp.ne.s32.totalorder %s93, %s94
    %p103 = scmp.eq.s32.totalorder %s20, 0
    %p104 = por %p102, %p103
    %p105 = scmp.ne.s32.totalorder %s93, %s94
    %p106 = scmp.eq.s32.totalorder %s21, 1
    %p107 = por %p105, %p106
    %p109 = scmp.ne.s32.totalorder %s94, %s108
    %p110 = scmp.eq.s32.totalorder %s21, 0
    %p111 = por %p109, %p110
    %s113 = sadd.s32 %s112, 1
    %p116 = scmp.eq.s32.totalorder %s15, 1
    %p117 = scmp.ne.s32.totalorder %s112, %s114
    %p118 = scmp.eq.s32.totalorder %s15, 0
    %p119 = por %p117, %p118
    %p120 = scmp.ne.s32.totalorder %s112, %s114
    %p121 = scmp.eq.s32.totalorder %s20, 1
    %p122 = por %p120, %p121
    %p123 = scmp.ne.s32.totalorder %s114, %s115
    %p124 = scmp.eq.s32.totalorder %s20, 0
    %p125 = por %p123, %p124
    %p126 = scmp.ne.s32.totalorder %s114, %s115
    %p127 = scmp.eq.s32.totalorder %s21, 1
    %p128 = por %p126, %p127
    %p130 = scmp.ne.s32.totalorder %s115, %s129
    %p131 = scmp.eq.s32.totalorder %s21, 0
    %p132 = por %p130, %p131
    %s133 = ssub.s32 %s15, %s22
    %p134 = scmp.eq.s32.totalorder %s133, 0
    %s136 = sadd.s32 %s135, 1
    %s137 = scalar_select %p134, %s135, %s136
    %p140 = pneg %p134
    %p141 = scmp.eq.s32.totalorder %s15, 1
    %p142 = por %p140, %p141
    %p143 = scmp.ne.s32.totalorder %s135, %s138
    %p144 = scmp.eq.s32.totalorder %s15, 0
    %p145 = por %p143, %p144
    %p146 = scmp.ne.s32.totalorder %s135, %s138
    %p147 = scmp.eq.s32.totalorder %s20, 1
    %p148 = por %p146, %p147
    %p149 = scmp.ne.s32.totalorder %s138, %s139
    %p150 = scmp.eq.s32.totalorder %s20, 0
    %p151 = por %p149, %p150
    %p152 = scmp.ne.s32.totalorder %s138, %s139
    %p153 = scmp.eq.s32.totalorder %s21, 1
    %p154 = por %p152, %p153
    %p156 = scmp.ne.s32.totalorder %s139, %s155
    %p157 = scmp.eq.s32.totalorder %s21, 0
    %p158 = por %p156, %p157
    %s159 = ssub.s32 %s15, %s22
    %p160 = scmp.eq.s32.totalorder %s159, 0
    %s162 = sadd.s32 %s161, 1
    %s163 = scalar_select %p160, %s161, %s162
    %p166 = pneg %p160
    %p167 = scmp.eq.s32.totalorder %s15, 1
    %p168 = por %p166, %p167
    %p169 = scmp.ne.s32.totalorder %s161, %s164
    %p170 = scmp.eq.s32.totalorder %s15, 0
    %p171 = por %p169, %p170
    %p172 = scmp.ne.s32.totalorder %s161, %s164
    %p173 = scmp.eq.s32.totalorder %s20, 1
    %p174 = por %p172, %p173
    %p175 = scmp.ne.s32.totalorder %s164, %s165
    %p176 = scmp.eq.s32.totalorder %s20, 0
    %p177 = por %p175, %p176
    %p178 = scmp.ne.s32.totalorder %s164, %s165
    %p179 = scmp.eq.s32.totalorder %s21, 1
    %p180 = por %p178, %p179
    %p182 = scmp.ne.s32.totalorder %s165, %s181
    %p183 = scmp.eq.s32.totalorder %s21, 0
    %p184 = por %p182, %p183
    %s185 = ssub.s32 %s15, %s22
    %p186 = scmp.eq.s32.totalorder %s185, 0
    %s188 = sadd.s32 %s187, 1
    %s189 = scalar_select %p186, %s187, %s188
    %p192 = pneg %p186
    %p193 = scmp.eq.s32.totalorder %s15, 1
    %p194 = por %p192, %p193
    %p195 = scmp.ne.s32.totalorder %s187, %s190
    %p196 = scmp.eq.s32.totalorder %s15, 0
    %p197 = por %p195, %p196
    %p198 = scmp.ne.s32.totalorder %s187, %s190
    %p199 = scmp.eq.s32.totalorder %s20, 1
    %p200 = por %p198, %p199
    %p201 = scmp.ne.s32.totalorder %s190, %s191
    %p202 = scmp.eq.s32.totalorder %s20, 0
    %p203 = por %p201, %p202
    %p204 = scmp.ne.s32.totalorder %s190, %s191
    %p205 = scmp.eq.s32.totalorder %s21, 1
    %p206 = por %p204, %p205
    %p208 = scmp.ne.s32.totalorder %s191, %s207
    %p209 = scmp.eq.s32.totalorder %s21, 0
    %p210 = por %p208, %p209
    %s211 = ssub.s32 %s15, %s22
    %p212 = scmp.eq.s32.totalorder %s211, 0
    %s214 = sadd.s32 %s213, 1
    %s215 = scalar_select %p212, %s213, %s214
    %p218 = pneg %p212
    %p219 = scmp.eq.s32.totalorder %s15, 1
    %p220 = por %p218, %p219
    %p221 = scmp.ne.s32.totalorder %s213, %s216
    %p222 = scmp.eq.s32.totalorder %s15, 0
    %p223 = por %p221, %p222
    %p224 = scmp.ne.s32.totalorder %s213, %s216
    %p225 = scmp.eq.s32.totalorder %s20, 1
    %p226 = por %p224, %p225
    %p227 = scmp.ne.s32.totalorder %s216, %s217
    %p228 = scmp.eq.s32.totalorder %s20, 0
    %p229 = por %p227, %p228
    %p230 = scmp.ne.s32.totalorder %s216, %s217
    %p231 = scmp.eq.s32.totalorder %s21, 1
    %p232 = por %p230, %p231
    %p234 = scmp.ne.s32.totalorder %s217, %s233
    %p235 = scmp.eq.s32.totalorder %s21, 0
    %p236 = por %p234, %p235
    %p237 = scmp.le.s32.totalorder 1, %s15
    %p238 = scmp.lt.s32.totalorder %s15, 3
    %p239 = pnand %p237, %p238
    %p240 = pneg %p239
    // Predicated region
    $region9: #{_lambda_.1} parent=5 // pred_check
      _
    $region10: #{_lambda_.1} parent=5 // pred_check_branch
      %242 = sbr.rel (%p239) target = $region12
    $region11: #{_lambda_.1} parent=5 // pred_region
      %s243 = ssub.s32 %s15, 1
      // Predicated region
      $region13: #{_lambda_.1} parent=11 // pred_check
        %p244 = pneg %p62
      $region14: #{_lambda_.1} parent=11 // pred_check_branch
        %246 = sbr.rel (%p244) target = $region16
      $region15: #{_lambda_.1} parent=11 // pred_region
        _
      $region16: #{_lambda_.1} parent=11 // pred_fallthru
        _
      // Predicated region
      $region17: #{_lambda_.1} parent=11 // pred_check
        %p247 = pneg %p83
      $region18: #{_lambda_.1} parent=11 // pred_check_branch
        %249 = sbr.rel (%p247) target = $region20
      $region19: #{_lambda_.1} parent=11 // pred_region
        _
      $region20: #{_lambda_.1} parent=11 // pred_fallthru
        _
      // Predicated region
      $region21: #{_lambda_.1} parent=11 // pred_check
        %p250 = pneg %p104
      $region22: #{_lambda_.1} parent=11 // pred_check_branch
        %252 = sbr.rel (%p250) target = $region24
      $region23: #{_lambda_.1} parent=11 // pred_region
        _
      $region24: #{_lambda_.1} parent=11 // pred_fallthru
        _
      // Predicated region
      $region25: #{_lambda_.1} parent=11 // pred_check
        %p253 = pneg %p125
      $region26: #{_lambda_.1} parent=11 // pred_check_branch
        %255 = sbr.rel (%p253) target = $region28
      $region27: #{_lambda_.1} parent=11 // pred_region
        _
      $region28: #{_lambda_.1} parent=11 // pred_fallthru
        _
    $region12: #{_lambda_.1} parent=5 // pred_fallthru
      _
    %p256 = scmp.lt.s32.totalorder %s15, 2
    // Predicated region
    $region29: #{_lambda_.1} parent=5 // pred_check
      %p257 = pneg %p256
    $region30: #{_lambda_.1} parent=5 // pred_check_branch
      %259 = sbr.rel (%p257) target = $region32
    $region31: #{_lambda_.1} parent=5 // pred_region
      // Predicated region
      $region33: #{_lambda_.1} parent=31 // pred_check
        %p260 = pneg %p35
      $region34: #{_lambda_.1} parent=31 // pred_check_branch
        %262 = sbr.rel (%p260) target = $region36
      $region35: #{_lambda_.1} parent=31 // pred_region
        %p263 = scmp.lt.s32.totalorder %s15, 1
        %s264 = scalar_select %p263, %s15, 1
        %s265 = smul.addr %s264, 12
        %s266 = smul.addr %s265, 8
        %s267 = scalar_lea.vmem %s0, %s266
      $region36: #{_lambda_.1} parent=31 // pred_fallthru
        _
    $region32: #{_lambda_.1} parent=5 // pred_fallthru
      _
    %p268 = scmp.le.s32.totalorder 1, %s15
    %p269 = scmp.lt.s32.totalorder %s15, 3
    %p270 = pnand %p268, %p269
    %p271 = pneg %p270
    // Predicated region
    $region37: #{_lambda_.1} parent=5 // pred_check
      _
    $region38: #{_lambda_.1} parent=5 // pred_check_branch
      %273 = sbr.rel (%p270) target = $region40
    $region39: #{_lambda_.1} parent=5 // pred_region
      %s274 = ssub.s32 %s15, 1
      %p275 = scmp.lt.s32.totalorder %s20, 1
      %s276 = scalar_select %p275, %s20, 1
      %s277 = smul.addr %s276, 12
      %s278 = smul.addr %s277, 8
      %s279 = scalar_lea.vmem %s0, %s278
      %p280 = pneg %p41
      %p281 = pneg %p38
      %p282 = pneg %p62
      %p283 = pneg %p59
      %p284 = pneg %p83
      %p285 = pneg %p80
      %p286 = pneg %p104
      %p287 = pneg %p101
      %p288 = pneg %p125
      %p289 = pneg %p122
      %p290 = pneg %p151
      %p291 = pneg %p148
      %p292 = scmp.lt.s32.totalorder %s20, 1
      %s293 = scalar_select %p292, %s20, 1
      %s294 = smul.addr %s293, 9
      %s295 = smul.addr %s294, 8
      %s296 = scalar_lea.vmem %s5, %s295
      %p297 = pneg %p177
      %p298 = pneg %p174
      %p299 = scmp.lt.s32.totalorder %s20, 1
      %s300 = scalar_select %p299, %s20, 1
      %s301 = smul.addr %s300, 5
      %s302 = smul.addr %s301, 8
      %s303 = scalar_lea.vmem %s6, %s302
      %p304 = pneg %p203
      %p305 = pneg %p200
      %p306 = scmp.lt.s32.totalorder %s20, 1
      %s307 = scalar_select %p306, %s20, 1
      %s308 = smul.addr %s307, 3
      %s309 = smul.addr %s308, 8
      %s310 = scalar_lea.vmem %s7, %s309
      %p311 = pneg %p229
      %p312 = pneg %p226
      %p313 = scmp.lt.s32.totalorder %s20, 1
      %s314 = scalar_select %p313, %s20, 1
      %s315 = smul.addr %s314, 2
      %s316 = smul.addr %s315, 8
      %s317 = scalar_lea.vmem %s8, %s316
      %p318 = scmp.lt.s32.totalorder %s20, 1
      %s319 = scalar_select %p318, %s20, 1
      %s320 = smul.addr %s319, 12
      %s321 = smul.addr %s320, 8
      %s322 = scalar_lea.vmem %s0, %s321
      %p323 = scmp.lt.s32.totalorder %s20, 1
      %s324 = scalar_select %p323, %s20, 1
      %s325 = smul.addr %s324, 9
      %s326 = smul.addr %s325, 8
      %s327 = scalar_lea.vmem %s5, %s326
      %p328 = scmp.lt.s32.totalorder %s20, 1
      %s329 = scalar_select %p328, %s20, 1
      %s330 = smul.addr %s329, 5
      %s331 = smul.addr %s330, 8
      %s332 = scalar_lea.vmem %s6, %s331
      %p333 = scmp.lt.s32.totalorder %s20, 1
      %s334 = scalar_select %p333, %s20, 1
      %s335 = smul.addr %s334, 3
      %s336 = smul.addr %s335, 8
      %s337 = scalar_lea.vmem %s7, %s336
      %p338 = scmp.lt.s32.totalorder %s20, 1
      %s339 = scalar_select %p338, %s20, 1
      %s340 = smul.addr %s339, 2
      %s341 = smul.addr %s340, 8
      %s342 = scalar_lea.vmem %s8, %s341
      %v343 = vld [vmem:[%s1] sm:$0xff]
      %v344 = vld [vmem:[%s1 + $0x8] sm:$0xff]
      %v345 = vld [vmem:[%s1 + $0x10] sm:$0xff]
      %v346 = vld [vmem:[%s1 + $0x18] sm:$0xff]
      %v347 = vld [vmem:[%s1 + $0x20] sm:$0xff]
      %v348 = vld [vmem:[%s1 + $0x28] sm:$0xff]
      %v349 = vld [vmem:[%s1 + $0x30] sm:$0xff]
      %v350 = vld [vmem:[%s1 + $0x38] sm:$0xff]
      %v351 = vld [vmem:[%s1 + $0x40] sm:$0x3]
      %v352 = vld [vmem:[%s2] sm:$0xff]
      %v353 = vld [vmem:[%s2 + $0x8] sm:$0xff]
      %v354 = vld [vmem:[%s2 + $0x10] sm:$0xff]
      %v355 = vld [vmem:[%s2 + $0x18] sm:$0xff]
      %v356 = vld [vmem:[%s2 + $0x20] sm:$0xf]
      %v357 = vld [vmem:[%s3] sm:$0xff]
      %v358 = vld [vmem:[%s3 + $0x8] sm:$0xff]
      %v359 = vld [vmem:[%s3 + $0x10] sm:$0x1f]
      %v360 = vld [vmem:[%s4] sm:$0xff]
      %v361 = vld [vmem:[%s4 + $0x8] sm:$0xf]
      %v362 = vld [vmem:[%s322] sm:$0xff]
      %v363 = vld [vmem:[%s322 + $0x8] sm:$0xff]
      %v364 = vld [vmem:[%s322 + $0x10] sm:$0xff]
      %v365 = vld [vmem:[%s322 + $0x18] sm:$0xff]
      %v366 = vld [vmem:[%s322 + $0x20] sm:$0xff]
      %v367 = vld [vmem:[%s322 + $0x28] sm:$0xff]
      %v368 = vld [vmem:[%s322 + $0x30] sm:$0xff]
      %v369 = vld [vmem:[%s322 + $0x38] sm:$0xff]
      %v370 = vld [vmem:[%s322 + $0x40] sm:$0xff]
      %v371 = vld [vmem:[%s322 + $0x48] sm:$0xff]
      %v372 = vld [vmem:[%s322 + $0x50] sm:$0xff]
      %v373 = vld [vmem:[%s322 + $0x58] sm:$0xff]
      %vm374 = vcmask 785408
      %v376 = vsel %vm374, %v343, 0
      %v379 = vsel %vm374, %v344, 0
      %v382 = vsel %vm374, %v345, 0
      %v385 = vsel %vm374, %v346, 0
      %v388 = vsel %vm374, %v347, 0
      %v391 = vsel %vm374, %v348, 0
      %v394 = vsel %vm374, %v349, 0
      %v397 = vsel %vm374, %v350, 0
      %v400 = vsel %vm374, %v351, 0
      %402 = vmatprep.subr.mxu0 0.0
      %v403 = vand.u32 %v362, 4294901760
      %404 = vmatpush1.msra.mxu0 %v403
      %405 = vmatprep.subr.mxu0 0.0
      %v406 = vand.u32 %v363, 4294901760
      %407 = vmatpush1.msra.mxu0 %v406
      %408 = vmatprep.subr.mxu0 0.0
      %v409 = vand.u32 %v364, 4294901760
      %410 = vmatpush1.msra.mxu0 %v409
      %411 = vmatprep.subr.mxu0 0.0
      %v412 = vand.u32 %v365, 4294901760
      %413 = vmatpush1.msra.mxu0 %v412
      %414 = vmatprep.subr.mxu0 0.0
      %v415 = vand.u32 %v366, 4294901760
      %416 = vmatpush1.msra.mxu0 %v415
      %417 = vmatprep.subr.mxu0 0.0
      %v418 = vand.u32 %v367, 4294901760
      %419 = vmatpush1.msra.mxu0 %v418
      %420 = vmatprep.subr.mxu0 0.0
      %v421 = vand.u32 %v368, 4294901760
      %422 = vmatpush1.msra.mxu0 %v421
      %423 = vmatprep.subr.mxu0 0.0
      %v424 = vand.u32 %v369, 4294901760
      %425 = vmatpush1.msra.mxu0 %v424
      %426 = vmatprep.subr.mxu0 0.0
      %v427 = vand.u32 %v370, 4294901760
      %428 = vmatpush1.msra.mxu0 %v427
      %429 = vmatprep.subr.mxu0 0.0
      %v430 = vand.u32 %v371, 4294901760
      %431 = vmatpush1.msra.mxu0 %v430
      %432 = vmatprep.subr.mxu0 0.0
      %v433 = vand.u32 %v372, 4294901760
      %434 = vmatpush1.msra.mxu0 %v433
      %435 = vmatprep.subr.mxu0 0.0
      %v436 = vand.u32 %v373, 4294901760
      %437 = vmatpush1.msra.mxu0 %v436
      %438 = vmatprep.subr.mxu0 0.0
      %439 = vmatpush1.msra.mxu0 0.0
      %440 = vmatprep.subr.mxu0 0.0
      %441 = vmatpush1.msra.mxu0 0.0
      %442 = vmatprep.subr.mxu0 0.0
      %443 = vmatpush1.msra.mxu0 0.0
      %444 = vmatprep.subr.mxu0 0.0
      %445 = vmatpush1.msra.mxu0 0.0
      %446 = vmatprep.subr.mxu0 0.0
      %447 = vmatpush1.msra.mxu0 0.0
      %448 = vmatprep.subr.mxu0 0.0
      %449 = vmatpush1.msra.mxu0 0.0
      %450 = vmatprep.subr.mxu0 0.0
      %451 = vmatpush1.msra.mxu0 0.0
      %452 = vmatprep.subr.mxu0 0.0
      %453 = vmatpush1.msra.mxu0 0.0
      %454 = vmatprep.subr.mxu0 0.0
      %455 = vmatpush1.msra.mxu0 0.0
      %456 = vmatprep.subr.mxu0 0.0
      %457 = vmatpush1.msra.mxu0 0.0
      %458 = vmatprep.subr.mxu0 0.0
      %459 = vmatpush1.msra.mxu0 0.0
      %460 = vmatprep.subr.mxu0 0.0
      %461 = vmatpush1.msra.mxu0 0.0
      %462 = vmatprep.subr.mxu0 0.0
      %463 = vmatpush1.msra.mxu0 0.0
      %464 = vmatprep.subr.mxu0 0.0
      %465 = vmatpush1.msra.mxu0 0.0
      %466 = vmatprep.subr.mxu0 0.0
      %467 = vmatpush1.msra.mxu0 0.0
      %468 = vmatprep.subr.mxu0 0.0
      %469 = vmatpush1.msra.mxu0 0.0
      %470 = vmatprep.subr.mxu0 0.0
      %471 = vmatpush1.msra.mxu0 0.0
      %472 = vmatprep.subr.mxu0 0.0
      %473 = vmatpush1.msra.mxu0 0.0
      %474 = vmatprep.subr.mxu0 0.0
      %475 = vmatpush1.msra.mxu0 0.0
      %476 = vmatprep.subr.mxu0 0.0
      %477 = vmatpush1.msra.mxu0 0.0
      %478 = vmatprep.mubr.f32.mxu0 0.0
      %v479 = vand.u32 %v376, 4294901760
      %v480 = vsub.f32 %v376, %v479
      %v481 = vand.u32 %v480, 4294901760
      %v482 = vsub.f32 %v480, %v481
      %v483 = vand.u32 %v482, 4294901760
      %484 = vmatmul.mubr.f32.gmra.mrb[0].mxu0 %v483
      %v485 = vpop.f32.mrb[0].mxu0
      %v486 = vadd.f32 0.0, %v485
      %v487 = vpop.f32.mrb[0].mxu0
      %488 = vmatprep.mubr.f32.mxu0 0.0
      %v489 = vand.u32 %v379, 4294901760
      %v490 = vsub.f32 %v379, %v489
      %v491 = vand.u32 %v490, 4294901760
      %v492 = vsub.f32 %v490, %v491
      %v493 = vand.u32 %v492, 4294901760
      %494 = vmatmul.mubr.f32.gmra.mrb[0].mxu0 %v493
      %v495 = vpop.f32.mrb[0].mxu0
      %v496 = vadd.f32 0.0, %v495
      %v497 = vpop.f32.mrb[0].mxu0
      %498 = vmatprep.mubr.f32.mxu0 0.0
      %v499 = vand.u32 %v382, 4294901760
      %v500 = vsub.f32 %v382, %v499
      %v501 = vand.u32 %v500, 4294901760
      %v502 = vsub.f32 %v500, %v501
      %v503 = vand.u32 %v502, 4294901760
      %504 = vmatmul.mubr.f32.gmra.mrb[0].mxu0 %v503
      %v505 = vpop.f32.mrb[0].mxu0
      %v506 = vadd.f32 0.0, %v505
      %v507 = vpop.f32.mrb[0].mxu0
      %508 = vmatprep.mubr.f32.mxu0 0.0
      %v509 = vand.u32 %v385, 4294901760
      %v510 = vsub.f32 %v385, %v509
      %v511 = vand.u32 %v510, 4294901760
      %v512 = vsub.f32 %v510, %v511
      %v513 = vand.u32 %v512, 4294901760
      %514 = vmatmul.mubr.f32.gmra.mrb[0].mxu0 %v513
      %v515 = vpop.f32.mrb[0].mxu0
      %v516 = vadd.f32 0.0, %v515
      %v517 = vpop.f32.mrb[0].mxu0
      %518 = vmatprep.mubr.f32.mxu0 0.0
      %v519 = vand.u32 %v388, 4294901760
      %v520 = vsub.f32 %v388, %v519
      %v521 = vand.u32 %v520, 4294901760
      %v522 = vsub.f32 %v520, %v521
      %v523 = vand.u32 %v522, 4294901760
      %524 = vmatmul.mubr.f32.gmra.mrb[0].mxu0 %v523
      %v525 = vpop.f32.mrb[0].mxu0
      %v526 = vadd.f32 0.0, %v525
      %v527 = vpop.f32.mrb[0].mxu0
      %528 = vmatprep.mubr.f32.mxu0 0.0
      %v529 = vand.u32 %v391, 4294901760
      %v530 = vsub.f32 %v391, %v529
      %v531 = vand.u32 %v530, 4294901760
      %v532 = vsub.f32 %v530, %v531
      %v533 = vand.u32 %v532, 4294901760
      %534 = vmatmul.mubr.f32.gmra.mrb[0].mxu0 %v533
      %v535 = vpop.f32.mrb[0].mxu0
      %v536 = vadd.f32 0.0, %v535
      %v537 = vpop.f32.mrb[0].mxu0
      %538 = vmatprep.mubr.f32.mxu0 0.0
      %v539 = vand.u32 %v394, 4294901760
      %v540 = vsub.f32 %v394, %v539
      %v541 = vand.u32 %v540, 4294901760
      %v542 = vsub.f32 %v540, %v541
      %v543 = vand.u32 %v542, 4294901760
      %544 = vmatmul.mubr.f32.gmra.mrb[0].mxu0 %v543
      %v545 = vpop.f32.mrb[0].mxu0
      %v546 = vadd.f32 0.0, %v545
      %v547 = vpop.f32.mrb[0].mxu0
      %548 = vmatprep.mubr.f32.mxu0 0.0
      %v549 = vand.u32 %v397, 4294901760
      %v550 = vsub.f32 %v397, %v549
      %v551 = vand.u32 %v550, 4294901760
      %v552 = vsub.f32 %v550, %v551
      %v553 = vand.u32 %v552, 4294901760
      %554 = vmatmul.mubr.f32.gmra.mrb[0].mxu0 %v553
      %v555 = vpop.f32.mrb[0].mxu0
      %v556 = vadd.f32 0.0, %v555
      %v557 = vpop.f32.mrb[0].mxu0
      %558 = vmatprep.mubr.f32.mxu0 0.0
      %v559 = vand.u32 %v400, 4294901760
      %v560 = vsub.f32 %v400, %v559
      %v561 = vand.u32 %v560, 4294901760
      %v562 = vsub.f32 %v560, %v561
      %v563 = vand.u32 %v562, 4294901760
      %564 = vmatmul.mubr.f32.gmra.mrb[0].mxu0 %v563
      %v565 = vpop.f32.mrb[0].mxu0
      %v566 = vadd.f32 0.0, %v565
      %v567 = vpop.f32.mrb[0].mxu0
      %568 = vdwg.mxu0
      %569 = vmatprep.subr.mxu0 0.0
      %v570 = vand.u32 %v362, 4294901760
      %v571 = vsub.f32 %v362, %v570
      %v572 = vand.u32 %v571, 4294901760
      %v573 = vsub.f32 %v571, %v572
      %v574 = vand.u32 %v573, 4294901760
      %575 = vmatpush1.msra.mxu0 %v574
      %576 = vmatprep.subr.mxu0 0.0
      %v577 = vand.u32 %v363, 4294901760
      %v578 = vsub.f32 %v363, %v577
      %v579 = vand.u32 %v578, 4294901760
      %v580 = vsub.f32 %v578, %v579
      %v581 = vand.u32 %v580, 4294901760
      %582 = vmatpush1.msra.mxu0 %v581
      %583 = vmatprep.subr.mxu0 0.0
      %v584 = vand.u32 %v364, 4294901760
      %v585 = vsub.f32 %v364, %v584
      %v586 = vand.u32 %v585, 4294901760
      %v587 = vsub.f32 %v585, %v586
      %v588 = vand.u32 %v587, 4294901760
      %589 = vmatpush1.msra.mxu0 %v588
      %590 = vmatprep.subr.mxu0 0.0
      %v591 = vand.u32 %v365, 4294901760
      %v592 = vsub.f32 %v365, %v591
      %v593 = vand.u32 %v592, 4294901760
      %v594 = vsub.f32 %v592, %v593
      %v595 = vand.u32 %v594, 4294901760
      %596 = vmatpush1.msra.mxu0 %v595
      %597 = vmatprep.subr.mxu0 0.0
      %v598 = vand.u32 %v366, 4294901760
      %v599 = vsub.f32 %v366, %v598
      %v600 = vand.u32 %v599, 4294901760
      %v601 = vsub.f32 %v599, %v600
      %v602 = vand.u32 %v601, 4294901760
      %603 = vmatpush1.msra.mxu0 %v602
      %604 = vmatprep.subr.mxu0 0.0
      %v605 = vand.u32 %v367, 4294901760
      %v606 = vsub.f32 %v367, %v605
      %v607 = vand.u32 %v606, 4294901760
      %v608 = vsub.f32 %v606, %v607
      %v609 = vand.u32 %v608, 4294901760
      %610 = vmatpush1.msra.mxu0 %v609
      %611 = vmatprep.subr.mxu0 0.0
      %v612 = vand.u32 %v368, 4294901760
      %v613 = vsub.f32 %v368, %v612
      %v614 = vand.u32 %v613, 4294901760
      %v615 = vsub.f32 %v613, %v614
      %v616 = vand.u32 %v615, 4294901760
      %617 = vmatpush1.msra.mxu0 %v616
      %618 = vmatprep.subr.mxu0 0.0
      %v619 = vand.u32 %v369, 4294901760
      %v620 = vsub.f32 %v369, %v619
      %v621 = vand.u32 %v620, 4294901760
      %v622 = vsub.f32 %v620, %v621
      %v623 = vand.u32 %v622, 4294901760
      %624 = vmatpush1.msra.mxu0 %v623
      %625 = vmatprep.subr.mxu0 0.0
      %v626 = vand.u32 %v370, 4294901760
      %v627 = vsub.f32 %v370, %v626
      %v628 = vand.u32 %v627, 4294901760
      %v629 = vsub.f32 %v627, %v628
      %v630 = vand.u32 %v629, 4294901760
      %631 = vmatpush1.msra.mxu0 %v630
      %632 = vmatprep.subr.mxu0 0.0
      %v633 = vand.u32 %v371, 4294901760
      %v634 = vsub.f32 %v371, %v633
      %v635 = vand.u32 %v634, 4294901760
      %v636 = vsub.f32 %v634, %v635
      %v637 = vand.u32 %v636, 4294901760
      %638 = vmatpush1.msra.mxu0 %v637
      %639 = vmatprep.subr.mxu0 0.0
      %v640 = vand.u32 %v372, 4294901760
      %v641 = vsub.f32 %v372, %v640
      %v642 = vand.u32 %v641, 4294901760
      %v643 = vsub.f32 %v641, %v642
      %v644 = vand.u32 %v643, 4294901760
      %645 = vmatpush1.msra.mxu0 %v644
      %646 = vmatprep.subr.mxu0 0.0
      %v647 = vand.u32 %v373, 4294901760
      %v648 = vsub.f32 %v373, %v647
      %v649 = vand.u32 %v648, 4294901760
      %v650 = vsub.f32 %v648, %v649
      %v651 = vand.u32 %v650, 4294901760
      %652 = vmatpush1.msra.mxu0 %v651
      %653 = vmatprep.subr.mxu0 0.0
      %654 = vmatpush1.msra.mxu0 0.0
      %655 = vmatprep.subr.mxu0 0.0
      %656 = vmatpush1.msra.mxu0 0.0
      %657 = vmatprep.subr.mxu0 0.0
      %658 = vmatpush1.msra.mxu0 0.0
      %659 = vmatprep.subr.mxu0 0.0
      %660 = vmatpush1.msra.mxu0 0.0
      %661 = vmatprep.subr.mxu0 0.0
      %662 = vmatpush1.msra.mxu0 0.0
      %663 = vmatprep.subr.mxu0 0.0
      %664 = vmatpush1.msra.mxu0 0.0
      %665 = vmatprep.subr.mxu0 0.0
      %666 = vmatpush1.msra.mxu0 0.0
      %667 = vmatprep.subr.mxu0 0.0
      %668 = vmatpush1.msra.mxu0 0.0
      %669 = vmatprep.subr.mxu0 0.0
      %670 = vmatpush1.msra.mxu0 0.0
      %671 = vmatprep.subr.mxu0 0.0
      %672 = vmatpush1.msra.mxu0 0.0
      %673 = vmatprep.subr.mxu0 0.0
      %674 = vmatpush1.msra.mxu0 0.0
      %675 = vmatprep.subr.mxu0 0.0
      %676 = vmatpush1.msra.mxu0 0.0
      %677 = vmatprep.subr.mxu0 0.0
      %678 = vmatpush1.msra.mxu0 0.0
      %679 = vmatprep.subr.mxu0 0.0
      %680 = vmatpush1.msra.mxu0 0.0
      %681 = vmatprep.subr.mxu0 0.0
      %682 = vmatpush1.msra.mxu0 0.0
      %683 = vmatprep.subr.mxu0 0.0
      %684 = vmatpush1.msra.mxu0 0.0
      %685 = vmatprep.subr.mxu0 0.0
      %686 = vmatpush1.msra.mxu0 0.0
      %687 = vmatprep.subr.mxu0 0.0
      %688 = vmatpush1.msra.mxu0 0.0
      %689 = vmatprep.subr.mxu0 0.0
      %690 = vmatpush1.msra.mxu0 0.0
      %691 = vmatprep.subr.mxu0 0.0
      %692 = vmatpush1.msra.mxu0 0.0
      %693 = vmatprep.mubr.f32.mxu0 0.0
      %v694 = vand.u32 %v376, 4294901760
      %695 = vmatmul.mubr.f32.gmra.mrb[0].mxu0 %v694
      %v696 = vpop.f32.mrb[0].mxu0
      %v697 = vadd.f32 %v486, %v696
      %v698 = vpop.f32.mrb[0].mxu0
      %699 = vmatprep.mubr.f32.mxu0 0.0
      %v700 = vand.u32 %v379, 4294901760
      %701 = vmatmul.mubr.f32.gmra.mrb[0].mxu0 %v700
      %v702 = vpop.f32.mrb[0].mxu0
      %v703 = vadd.f32 %v496, %v702
      %v704 = vpop.f32.mrb[0].mxu0
      %705 = vmatprep.mubr.f32.mxu0 0.0
      %v706 = vand.u32 %v382, 4294901760
      %707 = vmatmul.mubr.f32.gmra.mrb[0].mxu0 %v706
      %v708 = vpop.f32.mrb[0].mxu0
      %v709 = vadd.f32 %v506, %v708
      %v710 = vpop.f32.mrb[0].mxu0
      %711 = vmatprep.mubr.f32.mxu0 0.0
      %v712 = vand.u32 %v385, 4294901760
      %713 = vmatmul.mubr.f32.gmra.mrb[0].mxu0 %v712
      %v714 = vpop.f32.mrb[0].mxu0
      %v715 = vadd.f32 %v516, %v714
      %v716 = vpop.f32.mrb[0].mxu0
      %717 = vmatprep.mubr.f32.mxu0 0.0
      %v718 = vand.u32 %v388, 4294901760
      %719 = vmatmul.mubr.f32.gmra.mrb[0].mxu0 %v718
      %v720 = vpop.f32.mrb[0].mxu0
      %v721 = vadd.f32 %v526, %v720
      %v722 = vpop.f32.mrb[0].mxu0
      %723 = vmatprep.mubr.f32.mxu0 0.0
      %v724 = vand.u32 %v391, 4294901760
      %725 = vmatmul.mubr.f32.gmra.mrb[0].mxu0 %v724
      %v726 = vpop.f32.mrb[0].mxu0
      %v727 = vadd.f32 %v536, %v726
      %v728 = vpop.f32.mrb[0].mxu0
      %729 = vmatprep.mubr.f32.mxu0 0.0
      %v730 = vand.u32 %v394, 4294901760
      %731 = vmatmul.mubr.f32.gmra.mrb[0].mxu0 %v730
      %v732 = vpop.f32.mrb[0].mxu0
      %v733 = vadd.f32 %v546, %v732
      %v734 = vpop.f32.mrb[0].mxu0
      %735 = vmatprep.mubr.f32.mxu0 0.0
      %v736 = vand.u32 %v397, 4294901760
      %737 = vmatmul.mubr.f32.gmra.mrb[0].mxu0 %v736
      %v738 = vpop.f32.mrb[0].mxu0
      %v739 = vadd.f32 %v556, %v738
      %v740 = vpop.f32.mrb[0].mxu0
      %741 = vmatprep.mubr.f32.mxu0 0.0
      %v742 = vand.u32 %v400, 4294901760
      %743 = vmatmul.mubr.f32.gmra.mrb[0].mxu0 %v742
      %v744 = vpop.f32.mrb[0].mxu0
      %v745 = vadd.f32 %v566, %v744
      %v746 = vpop.f32.mrb[0].mxu0
      %747 = vdwg.mxu0
      %748 = vmatprep.subr.mxu0 0.0
      %v749 = vand.u32 %v362, 4294901760
      %v750 = vsub.f32 %v362, %v749
      %751 = vmatpush1.msra.mxu0 %v750
      %752 = vmatprep.subr.mxu0 0.0
      %v753 = vand.u32 %v363, 4294901760
      %v754 = vsub.f32 %v363, %v753
      %755 = vmatpush1.msra.mxu0 %v754
      %756 = vmatprep.subr.mxu0 0.0
      %v757 = vand.u32 %v364, 4294901760
      %v758 = vsub.f32 %v364, %v757
      %759 = vmatpush1.msra.mxu0 %v758
      %760 = vmatprep.subr.mxu0 0.0
      %v761 = vand.u32 %v365, 4294901760
      %v762 = vsub.f32 %v365, %v761
      %763 = vmatpush1.msra.mxu0 %v762
      %764 = vmatprep.subr.mxu0 0.0
      %v765 = vand.u32 %v366, 4294901760
      %v766 = vsub.f32 %v366, %v765
      %767 = vmatpush1.msra.mxu0 %v766
      %768 = vmatprep.subr.mxu0 0.0
      %v769 = vand.u32 %v367, 4294901760
      %v770 = vsub.f32 %v367, %v769
      %771 = vmatpush1.msra.mxu0 %v770
      %772 = vmatprep.subr.mxu0 0.0
      %v773 = vand.u32 %v368, 4294901760
      %v774 = vsub.f32 %v368, %v773
      %775 = vmatpush1.msra.mxu0 %v774
      %776 = vmatprep.subr.mxu0 0.0
      %v777 = vand.u32 %v369, 4294901760
      %v778 = vsub.f32 %v369, %v777
      %779 = vmatpush1.msra.mxu0 %v778
      %780 = vmatprep.subr.mxu0 0.0
      %v781 = vand.u32 %v370, 4294901760
      %v782 = vsub.f32 %v370, %v781
      %783 = vmatpush1.msra.mxu0 %v782
      %784 = vmatprep.subr.mxu0 0.0
      %v785 = vand.u32 %v371, 4294901760
      %v786 = vsub.f32 %v371, %v785
      %787 = vmatpush1.msra.mxu0 %v786
      %788 = vmatprep.subr.mxu0 0.0
      %v789 = vand.u32 %v372, 4294901760
      %v790 = vsub.f32 %v372, %v789
      %791 = vmatpush1.msra.mxu0 %v790
      %792 = vmatprep.subr.mxu0 0.0
      %v793 = vand.u32 %v373, 4294901760
      %v794 = vsub.f32 %v373, %v793
      %795 = vmatpush1.msra.mxu0 %v794
      %796 = vmatprep.subr.mxu0 0.0
      %797 = vmatpush1.msra.mxu0 0.0
      %798 = vmatprep.subr.mxu0 0.0
      %799 = vmatpush1.msra.mxu0 0.0
      %800 = vmatprep.subr.mxu0 0.0
      %801 = vmatpush1.msra.mxu0 0.0
      %802 = vmatprep.subr.mxu0 0.0
      %803 = vmatpush1.msra.mxu0 0.0
      %804 = vmatprep.subr.mxu0 0.0
      %805 = vmatpush1.msra.mxu0 0.0
      %806 = vmatprep.subr.mxu0 0.0
      %807 = vmatpush1.msra.mxu0 0.0
      %808 = vmatprep.subr.mxu0 0.0
      %809 = vmatpush1.msra.mxu0 0.0
      %810 = vmatprep.subr.mxu0 0.0
      %811 = vmatpush1.msra.mxu0 0.0
      %812 = vmatprep.subr.mxu0 0.0
      %813 = vmatpush1.msra.mxu0 0.0
      %814 = vmatprep.subr.mxu0 0.0
      %815 = vmatpush1.msra.mxu0 0.0
      %816 = vmatprep.subr.mxu0 0.0
      %817 = vmatpush1.msra.mxu0 0.0
      %818 = vmatprep.subr.mxu0 0.0
      %819 = vmatpush1.msra.mxu0 0.0
      %820 = vmatprep.subr.mxu0 0.0
      %821 = vmatpush1.msra.mxu0 0.0
      %822 = vmatprep.subr.mxu0 0.0
      %823 = vmatpush1.msra.mxu0 0.0
      %824 = vmatprep.subr.mxu0 0.0
      %825 = vmatpush1.msra.mxu0 0.0
      %826 = vmatprep.subr.mxu0 0.0
      %827 = vmatpush1.msra.mxu0 0.0
      %828 = vmatprep.subr.mxu0 0.0
      %829 = vmatpush1.msra.mxu0 0.0
      %830 = vmatprep.subr.mxu0 0.0
      %831 = vmatpush1.msra.mxu0 0.0
      %832 = vmatprep.subr.mxu0 0.0
      %833 = vmatpush1.msra.mxu0 0.0
      %834 = vmatprep.subr.mxu0 0.0
      %835 = vmatpush1.msra.mxu0 0.0
      %836 = vmatprep.mubr.f32.mxu0 0.0
      %v837 = vand.u32 %v376, 4294901760
      %v838 = vsub.f32 %v376, %v837
      %839 = vmatmul.mubr.f32.gmra.mrb[0].mxu0 %v838
      %v840 = vpop.f32.mrb[0].mxu0
      %v841 = vadd.f32 %v697, %v840
      %v842 = vpop.f32.mrb[0].mxu0
      %843 = vmatprep.mubr.f32.mxu0 0.0
      %v844 = vand.u32 %v379, 4294901760
      %v845 = vsub.f32 %v379, %v844
      %846 = vmatmul.mubr.f32.gmra.mrb[0].mxu0 %v845
      %v847 = vpop.f32.mrb[0].mxu0
      %v848 = vadd.f32 %v703, %v847
      %v849 = vpop.f32.mrb[0].mxu0
      %850 = vmatprep.mubr.f32.mxu0 0.0
      %v851 = vand.u32 %v382, 4294901760
      %v852 = vsub.f32 %v382, %v851
      %853 = vmatmul.mubr.f32.gmra.mrb[0].mxu0 %v852
      %v854 = vpop.f32.mrb[0].mxu0
      %v855 = vadd.f32 %v709, %v854
      %v856 = vpop.f32.mrb[0].mxu0
      %857 = vmatprep.mubr.f32.mxu0 0.0
      %v858 = vand.u32 %v385, 4294901760
      %v859 = vsub.f32 %v385, %v858
      %860 = vmatmul.mubr.f32.gmra.mrb[0].mxu0 %v859
      %v861 = vpop.f32.mrb[0].mxu0
      %v862 = vadd.f32 %v715, %v861
      %v863 = vpop.f32.mrb[0].mxu0
      %864 = vmatprep.mubr.f32.mxu0 0.0
      %v865 = vand.u32 %v388, 4294901760
      %v866 = vsub.f32 %v388, %v865
      %867 = vmatmul.mubr.f32.gmra.mrb[0].mxu0 %v866
      %v868 = vpop.f32.mrb[0].mxu0
      %v869 = vadd.f32 %v721, %v868
      %v870 = vpop.f32.mrb[0].mxu0
      %871 = vmatprep.mubr.f32.mxu0 0.0
      %v872 = vand.u32 %v391, 4294901760
      %v873 = vsub.f32 %v391, %v872
      %874 = vmatmul.mubr.f32.gmra.mrb[0].mxu0 %v873
      %v875 = vpop.f32.mrb[0].mxu0
      %v876 = vadd.f32 %v727, %v875
      %v877 = vpop.f32.mrb[0].mxu0
      %878 = vmatprep.mubr.f32.mxu0 0.0
      %v879 = vand.u32 %v394, 4294901760
      %v880 = vsub.f32 %v394, %v879
      %881 = vmatmul.mubr.f32.gmra.mrb[0].mxu0 %v880
      %v882 = vpop.f32.mrb[0].mxu0
      %v883 = vadd.f32 %v733, %v882
      %v884 = vpop.f32.mrb[0].mxu0
      %885 = vmatprep.mubr.f32.mxu0 0.0
      %v886 = vand.u32 %v397, 4294901760
      %v887 = vsub.f32 %v397, %v886
      %888 = vmatmul.mubr.f32.gmra.mrb[0].mxu0 %v887
      %v889 = vpop.f32.mrb[0].mxu0
      %v890 = vadd.f32 %v739, %v889
      %v891 = vpop.f32.mrb[0].mxu0
      %892 = vmatprep.mubr.f32.mxu0 0.0
      %v893 = vand.u32 %v400, 4294901760
      %v894 = vsub.f32 %v400, %v893
      %895 = vmatmul.mubr.f32.gmra.mrb[0].mxu0 %v894
      %v896 = vpop.f32.mrb[0].mxu0
      %v897 = vadd.f32 %v745, %v896
      %v898 = vpop.f32.mrb[0].mxu0
      %899 = vdwg.mxu0
      %900 = vmatprep.subr.mxu0 0.0
      %v901 = vand.u32 %v362, 4294901760
      %902 = vmatpush1.msra.mxu0 %v901
      %903 = vmatprep.subr.mxu0 0.0
      %v904 = vand.u32 %v363, 4294901760
      %905 = vmatpush1.msra.mxu0 %v904
      %906 = vmatprep.subr.mxu0 0.0
      %v907 = vand.u32 %v364, 4294901760
      %908 = vmatpush1.msra.mxu0 %v907
      %909 = vmatprep.subr.mxu0 0.0
      %v910 = vand.u32 %v365, 4294901760
      %911 = vmatpush1.msra.mxu0 %v910
      %912 = vmatprep.subr.mxu0 0.0
      %v913 = vand.u32 %v366, 4294901760
      %914 = vmatpush1.msra.mxu0 %v913
      %915 = vmatprep.subr.mxu0 0.0
      %v916 = vand.u32 %v367, 4294901760
      %917 = vmatpush1.msra.mxu0 %v916
      %918 = vmatprep.subr.mxu0 0.0
      %v919 = vand.u32 %v368, 4294901760
      %920 = vmatpush1.msra.mxu0 %v919
      %921 = vmatprep.subr.mxu0 0.0
      %v922 = vand.u32 %v369, 4294901760
      %923 = vmatpush1.msra.mxu0 %v922
      %924 = vmatprep.subr.mxu0 0.0
      %v925 = vand.u32 %v370, 4294901760
      %926 = vmatpush1.msra.mxu0 %v925
      %927 = vmatprep.subr.mxu0 0.0
      %v928 = vand.u32 %v371, 4294901760
      %929 = vmatpush1.msra.mxu0 %v928
      %930 = vmatprep.subr.mxu0 0.0
      %v931 = vand.u32 %v372, 4294901760
      %932 = vmatpush1.msra.mxu0 %v931
      %933 = vmatprep.subr.mxu0 0.0
      %v934 = vand.u32 %v373, 4294901760
      %935 = vmatpush1.msra.mxu0 %v934
      %936 = vmatprep.subr.mxu0 0.0
      %937 = vmatpush1.msra.mxu0 0.0
      %938 = vmatprep.subr.mxu0 0.0
      %939 = vmatpush1.msra.mxu0 0.0
      %940 = vmatprep.subr.mxu0 0.0
      %941 = vmatpush1.msra.mxu0 0.0
      %942 = vmatprep.subr.mxu0 0.0
      %943 = vmatpush1.msra.mxu0 0.0
      %944 = vmatprep.subr.mxu0 0.0
      %945 = vmatpush1.msra.mxu0 0.0
      %946 = vmatprep.subr.mxu0 0.0
      %947 = vmatpush1.msra.mxu0 0.0
      %948 = vmatprep.subr.mxu0 0.0
      %949 = vmatpush1.msra.mxu0 0.0
      %950 = vmatprep.subr.mxu0 0.0
      %951 = vmatpush1.msra.mxu0 0.0
      %952 = vmatprep.subr.mxu0 0.0
      %953 = vmatpush1.msra.mxu0 0.0
      %954 = vmatprep.subr.mxu0 0.0
      %955 = vmatpush1.msra.mxu0 0.0
      %956 = vmatprep.subr.mxu0 0.0
      %957 = vmatpush1.msra.mxu0 0.0
      %958 = vmatprep.subr.mxu0 0.0
      %959 = vmatpush1.msra.mxu0 0.0
      %960 = vmatprep.subr.mxu0 0.0
      %961 = vmatpush1.msra.mxu0 0.0
      %962 = vmatprep.subr.mxu0 0.0
      %963 = vmatpush1.msra.mxu0 0.0
      %964 = vmatprep.subr.mxu0 0.0
      %965 = vmatpush1.msra.mxu0 0.0
      %966 = vmatprep.subr.mxu0 0.0
      %967 = vmatpush1.msra.mxu0 0.0
      %968 = vmatprep.subr.mxu0 0.0
      %969 = vmatpush1.msra.mxu0 0.0
      %970 = vmatprep.subr.mxu0 0.0
      %971 = vmatpush1.msra.mxu0 0.0
      %972 = vmatprep.subr.mxu0 0.0
      %973 = vmatpush1.msra.mxu0 0.0
      %974 = vmatprep.subr.mxu0 0.0
      %975 = vmatpush1.msra.mxu0 0.0
      %976 = vmatprep.mubr.f32.mxu0 0.0
      %v977 = vand.u32 %v376, 4294901760
      %v978 = vsub.f32 %v376, %v977
      %v979 = vand.u32 %v978, 4294901760
      %980 = vmatmul.mubr.f32.gmra.mrb[0].mxu0 %v979
      %v981 = vpop.f32.mrb[0].mxu0
      %v982 = vadd.f32 %v841, %v981
      %v983 = vpop.f32.mrb[0].mxu0
      %984 = vmatprep.mubr.f32.mxu0 0.0
      %v985 = vand.u32 %v379, 4294901760
      %v986 = vsub.f32 %v379, %v985
      %v987 = vand.u32 %v986, 4294901760
      %988 = vmatmul.mubr.f32.gmra.mrb[0].mxu0 %v987
      %v989 = vpop.f32.mrb[0].mxu0
      %v990 = vadd.f32 %v848, %v989
      %v991 = vpop.f32.mrb[0].mxu0
      %992 = vmatprep.mubr.f32.mxu0 0.0
      %v993 = vand.u32 %v382, 4294901760
      %v994 = vsub.f32 %v382, %v993
      %v995 = vand.u32 %v994, 4294901760
      %996 = vmatmul.mubr.f32.gmra.mrb[0].mxu0 %v995
      %v997 = vpop.f32.mrb[0].mxu0
      %v998 = vadd.f32 %v855, %v997
      %v999 = vpop.f32.mrb[0].mxu0
      %1000 = vmatprep.mubr.f32.mxu0 0.0
      %v1001 = vand.u32 %v385, 4294901760
      %v1002 = vsub.f32 %v385, %v1001
      %v1003 = vand.u32 %v1002, 4294901760
      %1004 = vmatmul.mubr.f32.gmra.mrb[0].mxu0 %v1003
      %v1005 = vpop.f32.mrb[0].mxu0
      %v1006 = vadd.f32 %v862, %v1005
      %v1007 = vpop.f32.mrb[0].mxu0
      %1008 = vmatprep.mubr.f32.mxu0 0.0
      %v1009 = vand.u32 %v388, 4294901760
      %v1010 = vsub.f32 %v388, %v1009
      %v1011 = vand.u32 %v1010, 4294901760
      %1012 = vmatmul.mubr.f32.gmra.mrb[0].mxu0 %v1011
      %v1013 = vpop.f32.mrb[0].mxu0
      %v1014 = vadd.f32 %v869, %v1013
      %v1015 = vpop.f32.mrb[0].mxu0
      %1016 = vmatprep.mubr.f32.mxu0 0.0
      %v1017 = vand.u32 %v391, 4294901760
      %v1018 = vsub.f32 %v391, %v1017
      %v1019 = vand.u32 %v1018, 4294901760
      %1020 = vmatmul.mubr.f32.gmra.mrb[0].mxu0 %v1019
      %v1021 = vpop.f32.mrb[0].mxu0
      %v1022 = vadd.f32 %v876, %v1021
      %v1023 = vpop.f32.mrb[0].mxu0
      %1024 = vmatprep.mubr.f32.mxu0 0.0
      %v1025 = vand.u32 %v394, 4294901760
      %v1026 = vsub.f32 %v394, %v1025
      %v1027 = vand.u32 %v1026, 4294901760
      %1028 = vmatmul.mubr.f32.gmra.mrb[0].mxu0 %v1027
      %v1029 = vpop.f32.mrb[0].mxu0
      %v1030 = vadd.f32 %v883, %v1029
      %v1031 = vpop.f32.mrb[0].mxu0
      %1032 = vmatprep.mubr.f32.mxu0 0.0
      %v1033 = vand.u32 %v397, 4294901760
      %v1034 = vsub.f32 %v397, %v1033
      %v1035 = vand.u32 %v1034, 4294901760
      %1036 = vmatmul.mubr.f32.gmra.mrb[0].mxu0 %v1035
      %v1037 = vpop.f32.mrb[0].mxu0
      %v1038 = vadd.f32 %v890, %v1037
      %v1039 = vpop.f32.mrb[0].mxu0
      %1040 = vmatprep.mubr.f32.mxu0 0.0
      %v1041 = vand.u32 %v400, 4294901760
      %v1042 = vsub.f32 %v400, %v1041
      %v1043 = vand.u32 %v1042, 4294901760
      %1044 = vmatmul.mubr.f32.gmra.mrb[0].mxu0 %v1043
      %v1045 = vpop.f32.mrb[0].mxu0
      %v1046 = vadd.f32 %v897, %v1045
      %v1047 = vpop.f32.mrb[0].mxu0
      %1048 = vdwg.mxu0
      %1049 = vmatprep.subr.mxu0 0.0
      %v1050 = vand.u32 %v362, 4294901760
      %v1051 = vsub.f32 %v362, %v1050
      %v1052 = vand.u32 %v1051, 4294901760
      %1053 = vmatpush1.msra.mxu0 %v1052
      %1054 = vmatprep.subr.mxu0 0.0
      %v1055 = vand.u32 %v363, 4294901760
      %v1056 = vsub.f32 %v363, %v1055
      %v1057 = vand.u32 %v1056, 4294901760
      %1058 = vmatpush1.msra.mxu0 %v1057
      %1059 = vmatprep.subr.mxu0 0.0
      %v1060 = vand.u32 %v364, 4294901760
      %v1061 = vsub.f32 %v364, %v1060
      %v1062 = vand.u32 %v1061, 4294901760
      %1063 = vmatpush1.msra.mxu0 %v1062
      %1064 = vmatprep.subr.mxu0 0.0
      %v1065 = vand.u32 %v365, 4294901760
      %v1066 = vsub.f32 %v365, %v1065
      %v1067 = vand.u32 %v1066, 4294901760
      %1068 = vmatpush1.msra.mxu0 %v1067
      %1069 = vmatprep.subr.mxu0 0.0
      %v1070 = vand.u32 %v366, 4294901760
      %v1071 = vsub.f32 %v366, %v1070
      %v1072 = vand.u32 %v1071, 4294901760
      %1073 = vmatpush1.msra.mxu0 %v1072
      %1074 = vmatprep.subr.mxu0 0.0
      %v1075 = vand.u32 %v367, 4294901760
      %v1076 = vsub.f32 %v367, %v1075
      %v1077 = vand.u32 %v1076, 4294901760
      %1078 = vmatpush1.msra.mxu0 %v1077
      %1079 = vmatprep.subr.mxu0 0.0
      %v1080 = vand.u32 %v368, 4294901760
      %v1081 = vsub.f32 %v368, %v1080
      %v1082 = vand.u32 %v1081, 4294901760
      %1083 = vmatpush1.msra.mxu0 %v1082
      %1084 = vmatprep.subr.mxu0 0.0
      %v1085 = vand.u32 %v369, 4294901760
      %v1086 = vsub.f32 %v369, %v1085
      %v1087 = vand.u32 %v1086, 4294901760
      %1088 = vmatpush1.msra.mxu0 %v1087
      %1089 = vmatprep.subr.mxu0 0.0
      %v1090 = vand.u32 %v370, 4294901760
      %v1091 = vsub.f32 %v370, %v1090
      %v1092 = vand.u32 %v1091, 4294901760
      %1093 = vmatpush1.msra.mxu0 %v1092
      %1094 = vmatprep.subr.mxu0 0.0
      %v1095 = vand.u32 %v371, 4294901760
      %v1096 = vsub.f32 %v371, %v1095
      %v1097 = vand.u32 %v1096, 4294901760
      %1098 = vmatpush1.msra.mxu0 %v1097
      %1099 = vmatprep.subr.mxu0 0.0
      %v1100 = vand.u32 %v372, 4294901760
      %v1101 = vsub.f32 %v372, %v1100
      %v1102 = vand.u32 %v1101, 4294901760
      %1103 = vmatpush1.msra.mxu0 %v1102
      %1104 = vmatprep.subr.mxu0 0.0
      %v1105 = vand.u32 %v373, 4294901760
      %v1106 = vsub.f32 %v373, %v1105
      %v1107 = vand.u32 %v1106, 4294901760
      %1108 = vmatpush1.msra.mxu0 %v1107
      %1109 = vmatprep.subr.mxu0 0.0
      %1110 = vmatpush1.msra.mxu0 0.0
      %1111 = vmatprep.subr.mxu0 0.0
      %1112 = vmatpush1.msra.mxu0 0.0
      %1113 = vmatprep.subr.mxu0 0.0
      %1114 = vmatpush1.msra.mxu0 0.0
      %1115 = vmatprep.subr.mxu0 0.0
      %1116 = vmatpush1.msra.mxu0 0.0
      %1117 = vmatprep.subr.mxu0 0.0
      %1118 = vmatpush1.msra.mxu0 0.0
      %1119 = vmatprep.subr.mxu0 0.0
      %1120 = vmatpush1.msra.mxu0 0.0
      %1121 = vmatprep.subr.mxu0 0.0
      %1122 = vmatpush1.msra.mxu0 0.0
      %1123 = vmatprep.subr.mxu0 0.0
      %1124 = vmatpush1.msra.mxu0 0.0
      %1125 = vmatprep.subr.mxu0 0.0
      %1126 = vmatpush1.msra.mxu0 0.0
      %1127 = vmatprep.subr.mxu0 0.0
      %1128 = vmatpush1.msra.mxu0 0.0
      %1129 = vmatprep.subr.mxu0 0.0
      %1130 = vmatpush1.msra.mxu0 0.0
      %1131 = vmatprep.subr.mxu0 0.0
      %1132 = vmatpush1.msra.mxu0 0.0
      %1133 = vmatprep.subr.mxu0 0.0
      %1134 = vmatpush1.msra.mxu0 0.0
      %1135 = vmatprep.subr.mxu0 0.0
      %1136 = vmatpush1.msra.mxu0 0.0
      %1137 = vmatprep.subr.mxu0 0.0
      %1138 = vmatpush1.msra.mxu0 0.0
      %1139 = vmatprep.subr.mxu0 0.0
      %1140 = vmatpush1.msra.mxu0 0.0
      %1141 = vmatprep.subr.mxu0 0.0
      %1142 = vmatpush1.msra.mxu0 0.0
      %1143 = vmatprep.subr.mxu0 0.0
      %1144 = vmatpush1.msra.mxu0 0.0
      %1145 = vmatprep.subr.mxu0 0.0
      %1146 = vmatpush1.msra.mxu0 0.0
      %1147 = vmatprep.subr.mxu0 0.0
      %1148 = vmatpush1.msra.mxu0 0.0
      %1149 = vmatprep.mubr.f32.mxu0 0.0
      %v1150 = vand.u32 %v376, 4294901760
      %1151 = vmatmul.mubr.f32.gmra.mrb[0].mxu0 %v1150
      %v1152 = vpop.f32.mrb[0].mxu0
      %v1153 = vadd.f32 %v982, %v1152
      %v1154 = vpop.f32.mrb[0].mxu0
      %1155 = vmatprep.mubr.f32.mxu0 0.0
      %v1156 = vand.u32 %v379, 4294901760
      %1157 = vmatmul.mubr.f32.gmra.mrb[0].mxu0 %v1156
      %v1158 = vpop.f32.mrb[0].mxu0
      %v1159 = vadd.f32 %v990, %v1158
      %v1160 = vpop.f32.mrb[0].mxu0
      %1161 = vmatprep.mubr.f32.mxu0 0.0
      %v1162 = vand.u32 %v382, 4294901760
      %1163 = vmatmul.mubr.f32.gmra.mrb[0].mxu0 %v1162
      %v1164 = vpop.f32.mrb[0].mxu0
      %v1165 = vadd.f32 %v998, %v1164
      %v1166 = vpop.f32.mrb[0].mxu0
      %1167 = vmatprep.mubr.f32.mxu0 0.0
      %v1168 = vand.u32 %v385, 4294901760
      %1169 = vmatmul.mubr.f32.gmra.mrb[0].mxu0 %v1168
      %v1170 = vpop.f32.mrb[0].mxu0
      %v1171 = vadd.f32 %v1006, %v1170
      %v1172 = vpop.f32.mrb[0].mxu0
      %1173 = vmatprep.mubr.f32.mxu0 0.0
      %v1174 = vand.u32 %v388, 4294901760
      %1175 = vmatmul.mubr.f32.gmra.mrb[0].mxu0 %v1174
      %v1176 = vpop.f32.mrb[0].mxu0
      %v1177 = vadd.f32 %v1014, %v1176
      %v1178 = vpop.f32.mrb[0].mxu0
      %1179 = vmatprep.mubr.f32.mxu0 0.0
      %v1180 = vand.u32 %v391, 4294901760
      %1181 = vmatmul.mubr.f32.gmra.mrb[0].mxu0 %v1180
      %v1182 = vpop.f32.mrb[0].mxu0
      %v1183 = vadd.f32 %v1022, %v1182
      %v1184 = vpop.f32.mrb[0].mxu0
      %1185 = vmatprep.mubr.f32.mxu0 0.0
      %v1186 = vand.u32 %v394, 4294901760
      %1187 = vmatmul.mubr.f32.gmra.mrb[0].mxu0 %v1186
      %v1188 = vpop.f32.mrb[0].mxu0
      %v1189 = vadd.f32 %v1030, %v1188
      %v1190 = vpop.f32.mrb[0].mxu0
      %1191 = vmatprep.mubr.f32.mxu0 0.0
      %v1192 = vand.u32 %v397, 4294901760
      %1193 = vmatmul.mubr.f32.gmra.mrb[0].mxu0 %v1192
      %v1194 = vpop.f32.mrb[0].mxu0
      %v1195 = vadd.f32 %v1038, %v1194
      %v1196 = vpop.f32.mrb[0].mxu0
      %1197 = vmatprep.mubr.f32.mxu0 0.0
      %v1198 = vand.u32 %v400, 4294901760
      %1199 = vmatmul.mubr.f32.gmra.mrb[0].mxu0 %v1198
      %v1200 = vpop.f32.mrb[0].mxu0
      %v1201 = vadd.f32 %v1046, %v1200
      %v1202 = vpop.f32.mrb[0].mxu0
      %1203 = vdwg.mxu0
      %1204 = vmatprep.subr.mxu0 0.0
      %v1205 = vand.u32 %v362, 4294901760
      %1206 = vmatpush1.msra.mxu0 %v1205
      %1207 = vmatprep.subr.mxu0 0.0
      %v1208 = vand.u32 %v363, 4294901760
      %1209 = vmatpush1.msra.mxu0 %v1208
      %1210 = vmatprep.subr.mxu0 0.0
      %v1211 = vand.u32 %v364, 4294901760
      %1212 = vmatpush1.msra.mxu0 %v1211
      %1213 = vmatprep.subr.mxu0 0.0
      %v1214 = vand.u32 %v365, 4294901760
      %1215 = vmatpush1.msra.mxu0 %v1214
      %1216 = vmatprep.subr.mxu0 0.0
      %v1217 = vand.u32 %v366, 4294901760
      %1218 = vmatpush1.msra.mxu0 %v1217
      %1219 = vmatprep.subr.mxu0 0.0
      %v1220 = vand.u32 %v367, 4294901760
      %1221 = vmatpush1.msra.mxu0 %v1220
      %1222 = vmatprep.subr.mxu0 0.0
      %v1223 = vand.u32 %v368, 4294901760
      %1224 = vmatpush1.msra.mxu0 %v1223
      %1225 = vmatprep.subr.mxu0 0.0
      %v1226 = vand.u32 %v369, 4294901760
      %1227 = vmatpush1.msra.mxu0 %v1226
      %1228 = vmatprep.subr.mxu0 0.0
      %v1229 = vand.u32 %v370, 4294901760
      %1230 = vmatpush1.msra.mxu0 %v1229
      %1231 = vmatprep.subr.mxu0 0.0
      %v1232 = vand.u32 %v371, 4294901760
      %1233 = vmatpush1.msra.mxu0 %v1232
      %1234 = vmatprep.subr.mxu0 0.0
      %v1235 = vand.u32 %v372, 4294901760
      %1236 = vmatpush1.msra.mxu0 %v1235
      %1237 = vmatprep.subr.mxu0 0.0
      %v1238 = vand.u32 %v373, 4294901760
      %1239 = vmatpush1.msra.mxu0 %v1238
      %1240 = vmatprep.subr.mxu0 0.0
      %1241 = vmatpush1.msra.mxu0 0.0
      %1242 = vmatprep.subr.mxu0 0.0
      %1243 = vmatpush1.msra.mxu0 0.0
      %1244 = vmatprep.subr.mxu0 0.0
      %1245 = vmatpush1.msra.mxu0 0.0
      %1246 = vmatprep.subr.mxu0 0.0
      %1247 = vmatpush1.msra.mxu0 0.0
      %1248 = vmatprep.subr.mxu0 0.0
      %1249 = vmatpush1.msra.mxu0 0.0
      %1250 = vmatprep.subr.mxu0 0.0
      %1251 = vmatpush1.msra.mxu0 0.0
      %1252 = vmatprep.subr.mxu0 0.0
      %1253 = vmatpush1.msra.mxu0 0.0
      %1254 = vmatprep.subr.mxu0 0.0
      %1255 = vmatpush1.msra.mxu0 0.0
      %1256 = vmatprep.subr.mxu0 0.0
      %1257 = vmatpush1.msra.mxu0 0.0
      %1258 = vmatprep.subr.mxu0 0.0
      %1259 = vmatpush1.msra.mxu0 0.0
      %1260 = vmatprep.subr.mxu0 0.0
      %1261 = vmatpush1.msra.mxu0 0.0
      %1262 = vmatprep.subr.mxu0 0.0
      %1263 = vmatpush1.msra.mxu0 0.0
      %1264 = vmatprep.subr.mxu0 0.0
      %1265 = vmatpush1.msra.mxu0 0.0
      %1266 = vmatprep.subr.mxu0 0.0
      %1267 = vmatpush1.msra.mxu0 0.0
      %1268 = vmatprep.subr.mxu0 0.0
      %1269 = vmatpush1.msra.mxu0 0.0
      %1270 = vmatprep.subr.mxu0 0.0
      %1271 = vmatpush1.msra.mxu0 0.0
      %1272 = vmatprep.subr.mxu0 0.0
      %1273 = vmatpush1.msra.mxu0 0.0
      %1274 = vmatprep.subr.mxu0 0.0
      %1275 = vmatpush1.msra.mxu0 0.0
      %1276 = vmatprep.subr.mxu0 0.0
      %1277 = vmatpush1.msra.mxu0 0.0
      %1278 = vmatprep.subr.mxu0 0.0
      %1279 = vmatpush1.msra.mxu0 0.0
      %1280 = vmatprep.mubr.f32.mxu0 0.0
      %v1281 = vand.u32 %v376, 4294901760
      %1282 = vmatmul.mubr.f32.gmra.mrb[0].mxu0 %v1281
      %v1283 = vpop.f32.mrb[0].mxu0
      %v1284 = vadd.f32 %v1153, %v1283
      %v1285 = vpop.f32.mrb[0].mxu0
      %1286 = vmatprep.mubr.f32.mxu0 0.0
      %v1287 = vand.u32 %v379, 4294901760
      %1288 = vmatmul.mubr.f32.gmra.mrb[0].mxu0 %v1287
      %v1289 = vpop.f32.mrb[0].mxu0
      %v1290 = vadd.f32 %v1159, %v1289
      %v1291 = vpop.f32.mrb[0].mxu0
      %1292 = vmatprep.mubr.f32.mxu0 0.0
      %v1293 = vand.u32 %v382, 4294901760
      %1294 = vmatmul.mubr.f32.gmra.mrb[0].mxu0 %v1293
      %v1295 = vpop.f32.mrb[0].mxu0
      %v1296 = vadd.f32 %v1165, %v1295
      %v1297 = vpop.f32.mrb[0].mxu0
      %1298 = vmatprep.mubr.f32.mxu0 0.0
      %v1299 = vand.u32 %v385, 4294901760
      %1300 = vmatmul.mubr.f32.gmra.mrb[0].mxu0 %v1299
      %v1301 = vpop.f32.mrb[0].mxu0
      %v1302 = vadd.f32 %v1171, %v1301
      %v1303 = vpop.f32.mrb[0].mxu0
      %1304 = vmatprep.mubr.f32.mxu0 0.0
      %v1305 = vand.u32 %v388, 4294901760
      %1306 = vmatmul.mubr.f32.gmra.mrb[0].mxu0 %v1305
      %v1307 = vpop.f32.mrb[0].mxu0
      %v1308 = vadd.f32 %v1177, %v1307
      %v1309 = vpop.f32.mrb[0].mxu0
      %1310 = vmatprep.mubr.f32.mxu0 0.0
      %v1311 = vand.u32 %v391, 4294901760
      %1312 = vmatmul.mubr.f32.gmra.mrb[0].mxu0 %v1311
      %v1313 = vpop.f32.mrb[0].mxu0
      %v1314 = vadd.f32 %v1183, %v1313
      %v1315 = vpop.f32.mrb[0].mxu0
      %1316 = vmatprep.mubr.f32.mxu0 0.0
      %v1317 = vand.u32 %v394, 4294901760
      %1318 = vmatmul.mubr.f32.gmra.mrb[0].mxu0 %v1317
      %v1319 = vpop.f32.mrb[0].mxu0
      %v1320 = vadd.f32 %v1189, %v1319
      %v1321 = vpop.f32.mrb[0].mxu0
      %1322 = vmatprep.mubr.f32.mxu0 0.0
      %v1323 = vand.u32 %v397, 4294901760
      %1324 = vmatmul.mubr.f32.gmra.mrb[0].mxu0 %v1323
      %v1325 = vpop.f32.mrb[0].mxu0
      %v1326 = vadd.f32 %v1195, %v1325
      %v1327 = vpop.f32.mrb[0].mxu0
      %1328 = vmatprep.mubr.f32.mxu0 0.0
      %v1329 = vand.u32 %v400, 4294901760
      %1330 = vmatmul.mubr.f32.gmra.mrb[0].mxu0 %v1329
      %v1331 = vpop.f32.mrb[0].mxu0
      %v1332 = vadd.f32 %v1201, %v1331
      %v1333 = vpop.f32.mrb[0].mxu0
      %1334 = vdwg.mxu0
      %vm1335 = vcmask 64512
      %1336 = vst.msk [vmem:[%s327] sm:$0xff] %vm1335, %v1284
      %1337 = vst.msk [vmem:[%s327 + $0x8] sm:$0xff] %vm1335, %v1290
      %1338 = vst.msk [vmem:[%s327 + $0x10] sm:$0xff] %vm1335, %v1296
      %1339 = vst.msk [vmem:[%s327 + $0x18] sm:$0xff] %vm1335, %v1302
      %1340 = vst.msk [vmem:[%s327 + $0x20] sm:$0xff] %vm1335, %v1308
      %1341 = vst.msk [vmem:[%s327 + $0x28] sm:$0xff] %vm1335, %v1314
      %1342 = vst.msk [vmem:[%s327 + $0x30] sm:$0xff] %vm1335, %v1320
      %1343 = vst.msk [vmem:[%s327 + $0x38] sm:$0xff] %vm1335, %v1326
      %vm1344 = vcmask 58368
      %1345 = vst.msk [vmem:[%s327 + $0x40] sm:$0x3] %vm1344, %v1332
      %v1347 = vsel %vm374, %v352, 0
      %v1350 = vsel %vm374, %v353, 0
      %v1353 = vsel %vm374, %v354, 0
      %v1356 = vsel %vm374, %v355, 0
      %v1359 = vsel %vm374, %v356, 0
      %1361 = vmatprep.subr.mxu0 0.0
      %v1362 = vand.u32 %v362, 4294901760
      %1363 = vmatpush1.msra.mxu0 %v1362
      %1364 = vmatprep.subr.mxu0 0.0
      %v1365 = vand.u32 %v363, 4294901760
      %1366 = vmatpush1.msra.mxu0 %v1365
      %1367 = vmatprep.subr.mxu0 0.0
      %v1368 = vand.u32 %v364, 4294901760
      %1369 = vmatpush1.msra.mxu0 %v1368
      %1370 = vmatprep.subr.mxu0 0.0
      %v1371 = vand.u32 %v365, 4294901760
      %1372 = vmatpush1.msra.mxu0 %v1371
      %1373 = vmatprep.subr.mxu0 0.0
      %v1374 = vand.u32 %v366, 4294901760
      %1375 = vmatpush1.msra.mxu0 %v1374
      %1376 = vmatprep.subr.mxu0 0.0
      %v1377 = vand.u32 %v367, 4294901760
      %1378 = vmatpush1.msra.mxu0 %v1377
      %1379 = vmatprep.subr.mxu0 0.0
      %v1380 = vand.u32 %v368, 4294901760
      %1381 = vmatpush1.msra.mxu0 %v1380
      %1382 = vmatprep.subr.mxu0 0.0
      %v1383 = vand.u32 %v369, 4294901760
      %1384 = vmatpush1.msra.mxu0 %v1383
      %1385 = vmatprep.subr.mxu0 0.0
      %v1386 = vand.u32 %v370, 4294901760
      %1387 = vmatpush1.msra.mxu0 %v1386
      %1388 = vmatprep.subr.mxu0 0.0
      %v1389 = vand.u32 %v371, 4294901760
      %1390 = vmatpush1.msra.mxu0 %v1389
      %1391 = vmatprep.subr.mxu0 0.0
      %v1392 = vand.u32 %v372, 4294901760
      %1393 = vmatpush1.msra.mxu0 %v1392
      %1394 = vmatprep.subr.mxu0 0.0
      %v1395 = vand.u32 %v373, 4294901760
      %1396 = vmatpush1.msra.mxu0 %v1395
      %1397 = vmatprep.subr.mxu0 0.0
      %1398 = vmatpush1.msra.mxu0 0.0
      %1399 = vmatprep.subr.mxu0 0.0
      %1400 = vmatpush1.msra.mxu0 0.0
      %1401 = vmatprep.subr.mxu0 0.0
      %1402 = vmatpush1.msra.mxu0 0.0
      %1403 = vmatprep.subr.mxu0 0.0
      %1404 = vmatpush1.msra.mxu0 0.0
      %1405 = vmatprep.subr.mxu0 0.0
      %1406 = vmatpush1.msra.mxu0 0.0
      %1407 = vmatprep.subr.mxu0 0.0
      %1408 = vmatpush1.msra.mxu0 0.0
      %1409 = vmatprep.subr.mxu0 0.0
      %1410 = vmatpush1.msra.mxu0 0.0
      %1411 = vmatprep.subr.mxu0 0.0
      %1412 = vmatpush1.msra.mxu0 0.0
      %1413 = vmatprep.subr.mxu0 0.0
      %1414 = vmatpush1.msra.mxu0 0.0
      %1415 = vmatprep.subr.mxu0 0.0
      %1416 = vmatpush1.msra.mxu0 0.0
      %1417 = vmatprep.subr.mxu0 0.0
      %1418 = vmatpush1.msra.mxu0 0.0
      %1419 = vmatprep.subr.mxu0 0.0
      %1420 = vmatpush1.msra.mxu0 0.0
      %1421 = vmatprep.subr.mxu0 0.0
      %1422 = vmatpush1.msra.mxu0 0.0
      %1423 = vmatprep.subr.mxu0 0.0
      %1424 = vmatpush1.msra.mxu0 0.0
      %1425 = vmatprep.subr.mxu0 0.0
      %1426 = vmatpush1.msra.mxu0 0.0
      %1427 = vmatprep.subr.mxu0 0.0
      %1428 = vmatpush1.msra.mxu0 0.0
      %1429 = vmatprep.subr.mxu0 0.0
      %1430 = vmatpush1.msra.mxu0 0.0
      %1431 = vmatprep.subr.mxu0 0.0
      %1432 = vmatpush1.msra.mxu0 0.0
      %1433 = vmatprep.subr.mxu0 0.0
      %1434 = vmatpush1.msra.mxu0 0.0
      %1435 = vmatprep.subr.mxu0 0.0
      %1436 = vmatpush1.msra.mxu0 0.0
      %1437 = vmatprep.mubr.f32.mxu0 0.0
      %v1438 = vand.u32 %v1347, 4294901760
      %v1439 = vsub.f32 %v1347, %v1438
      %v1440 = vand.u32 %v1439, 4294901760
      %v1441 = vsub.f32 %v1439, %v1440
      %v1442 = vand.u32 %v1441, 4294901760
      %1443 = vmatmul.mubr.f32.gmra.mrb[0].mxu0 %v1442
      %v1444 = vpop.f32.mrb[0].mxu0
      %v1445 = vadd.f32 0.0, %v1444
      %v1446 = vpop.f32.mrb[0].mxu0
      %1447 = vmatprep.mubr.f32.mxu0 0.0
      %v1448 = vand.u32 %v1350, 4294901760
      %v1449 = vsub.f32 %v1350, %v1448
      %v1450 = vand.u32 %v1449, 4294901760
      %v1451 = vsub.f32 %v1449, %v1450
      %v1452 = vand.u32 %v1451, 4294901760
      %1453 = vmatmul.mubr.f32.gmra.mrb[0].mxu0 %v1452
      %v1454 = vpop.f32.mrb[0].mxu0
      %v1455 = vadd.f32 0.0, %v1454
      %v1456 = vpop.f32.mrb[0].mxu0
      %1457 = vmatprep.mubr.f32.mxu0 0.0
      %v1458 = vand.u32 %v1353, 4294901760
      %v1459 = vsub.f32 %v1353, %v1458
      %v1460 = vand.u32 %v1459, 4294901760
      %v1461 = vsub.f32 %v1459, %v1460
      %v1462 = vand.u32 %v1461, 4294901760
      %1463 = vmatmul.mubr.f32.gmra.mrb[0].mxu0 %v1462
      %v1464 = vpop.f32.mrb[0].mxu0
      %v1465 = vadd.f32 0.0, %v1464
      %v1466 = vpop.f32.mrb[0].mxu0
      %1467 = vmatprep.mubr.f32.mxu0 0.0
      %v1468 = vand.u32 %v1356, 4294901760
      %v1469 = vsub.f32 %v1356, %v1468
      %v1470 = vand.u32 %v1469, 4294901760
      %v1471 = vsub.f32 %v1469, %v1470
      %v1472 = vand.u32 %v1471, 4294901760
      %1473 = vmatmul.mubr.f32.gmra.mrb[0].mxu0 %v1472
      %v1474 = vpop.f32.mrb[0].mxu0
      %v1475 = vadd.f32 0.0, %v1474
      %v1476 = vpop.f32.mrb[0].mxu0
      %1477 = vmatprep.mubr.f32.mxu0 0.0
      %v1478 = vand.u32 %v1359, 4294901760
      %v1479 = vsub.f32 %v1359, %v1478
      %v1480 = vand.u32 %v1479, 4294901760
      %v1481 = vsub.f32 %v1479, %v1480
      %v1482 = vand.u32 %v1481, 4294901760
      %1483 = vmatmul.mubr.f32.gmra.mrb[0].mxu0 %v1482
      %v1484 = vpop.f32.mrb[0].mxu0
      %v1485 = vadd.f32 0.0, %v1484
      %v1486 = vpop.f32.mrb[0].mxu0
      %1487 = vdwg.mxu0
      %1488 = vmatprep.subr.mxu0 0.0
      %v1489 = vand.u32 %v362, 4294901760
      %v1490 = vsub.f32 %v362, %v1489
      %v1491 = vand.u32 %v1490, 4294901760
      %v1492 = vsub.f32 %v1490, %v1491
      %v1493 = vand.u32 %v1492, 4294901760
      %1494 = vmatpush1.msra.mxu0 %v1493
      %1495 = vmatprep.subr.mxu0 0.0
      %v1496 = vand.u32 %v363, 4294901760
      %v1497 = vsub.f32 %v363, %v1496
      %v1498 = vand.u32 %v1497, 4294901760
      %v1499 = vsub.f32 %v1497, %v1498
      %v1500 = vand.u32 %v1499, 4294901760
      %1501 = vmatpush1.msra.mxu0 %v1500
      %1502 = vmatprep.subr.mxu0 0.0
      %v1503 = vand.u32 %v364, 4294901760
      %v1504 = vsub.f32 %v364, %v1503
      %v1505 = vand.u32 %v1504, 4294901760
      %v1506 = vsub.f32 %v1504, %v1505
      %v1507 = vand.u32 %v1506, 4294901760
      %1508 = vmatpush1.msra.mxu0 %v1507
      %1509 = vmatprep.subr.mxu0 0.0
      %v1510 = vand.u32 %v365, 4294901760
      %v1511 = vsub.f32 %v365, %v1510
      %v1512 = vand.u32 %v1511, 4294901760
      %v1513 = vsub.f32 %v1511, %v1512
      %v1514 = vand.u32 %v1513, 4294901760
      %1515 = vmatpush1.msra.mxu0 %v1514
      %1516 = vmatprep.subr.mxu0 0.0
      %v1517 = vand.u32 %v366, 4294901760
      %v1518 = vsub.f32 %v366, %v1517
      %v1519 = vand.u32 %v1518, 4294901760
      %v1520 = vsub.f32 %v1518, %v1519
      %v1521 = vand.u32 %v1520, 4294901760
      %1522 = vmatpush1.msra.mxu0 %v1521
      %1523 = vmatprep.subr.mxu0 0.0
      %v1524 = vand.u32 %v367, 4294901760
      %v1525 = vsub.f32 %v367, %v1524
      %v1526 = vand.u32 %v1525, 4294901760
      %v1527 = vsub.f32 %v1525, %v1526
      %v1528 = vand.u32 %v1527, 4294901760
      %1529 = vmatpush1.msra.mxu0 %v1528
      %1530 = vmatprep.subr.mxu0 0.0
      %v1531 = vand.u32 %v368, 4294901760
      %v1532 = vsub.f32 %v368, %v1531
      %v1533 = vand.u32 %v1532, 4294901760
      %v1534 = vsub.f32 %v1532, %v1533
      %v1535 = vand.u32 %v1534, 4294901760
      %1536 = vmatpush1.msra.mxu0 %v1535
      %1537 = vmatprep.subr.mxu0 0.0
      %v1538 = vand.u32 %v369, 4294901760
      %v1539 = vsub.f32 %v369, %v1538
      %v1540 = vand.u32 %v1539, 4294901760
      %v1541 = vsub.f32 %v1539, %v1540
      %v1542 = vand.u32 %v1541, 4294901760
      %1543 = vmatpush1.msra.mxu0 %v1542
      %1544 = vmatprep.subr.mxu0 0.0
      %v1545 = vand.u32 %v370, 4294901760
      %v1546 = vsub.f32 %v370, %v1545
      %v1547 = vand.u32 %v1546, 4294901760
      %v1548 = vsub.f32 %v1546, %v1547
      %v1549 = vand.u32 %v1548, 4294901760
      %1550 = vmatpush1.msra.mxu0 %v1549
      %1551 = vmatprep.subr.mxu0 0.0
      %v1552 = vand.u32 %v371, 4294901760
      %v1553 = vsub.f32 %v371, %v1552
      %v1554 = vand.u32 %v1553, 4294901760
      %v1555 = vsub.f32 %v1553, %v1554
      %v1556 = vand.u32 %v1555, 4294901760
      %1557 = vmatpush1.msra.mxu0 %v1556
      %1558 = vmatprep.subr.mxu0 0.0
      %v1559 = vand.u32 %v372, 4294901760
      %v1560 = vsub.f32 %v372, %v1559
      %v1561 = vand.u32 %v1560, 4294901760
      %v1562 = vsub.f32 %v1560, %v1561
      %v1563 = vand.u32 %v1562, 4294901760
      %1564 = vmatpush1.msra.mxu0 %v1563
      %1565 = vmatprep.subr.mxu0 0.0
      %v1566 = vand.u32 %v373, 4294901760
      %v1567 = vsub.f32 %v373, %v1566
      %v1568 = vand.u32 %v1567, 4294901760
      %v1569 = vsub.f32 %v1567, %v1568
      %v1570 = vand.u32 %v1569, 4294901760
      %1571 = vmatpush1.msra.mxu0 %v1570
      %1572 = vmatprep.subr.mxu0 0.0
      %1573 = vmatpush1.msra.mxu0 0.0
      %1574 = vmatprep.subr.mxu0 0.0
      %1575 = vmatpush1.msra.mxu0 0.0
      %1576 = vmatprep.subr.mxu0 0.0
      %1577 = vmatpush1.msra.mxu0 0.0
      %1578 = vmatprep.subr.mxu0 0.0
      %1579 = vmatpush1.msra.mxu0 0.0
      %1580 = vmatprep.subr.mxu0 0.0
      %1581 = vmatpush1.msra.mxu0 0.0
      %1582 = vmatprep.subr.mxu0 0.0
      %1583 = vmatpush1.msra.mxu0 0.0
      %1584 = vmatprep.subr.mxu0 0.0
      %1585 = vmatpush1.msra.mxu0 0.0
      %1586 = vmatprep.subr.mxu0 0.0
      %1587 = vmatpush1.msra.mxu0 0.0
      %1588 = vmatprep.subr.mxu0 0.0
      %1589 = vmatpush1.msra.mxu0 0.0
      %1590 = vmatprep.subr.mxu0 0.0
      %1591 = vmatpush1.msra.mxu0 0.0
      %1592 = vmatprep.subr.mxu0 0.0
      %1593 = vmatpush1.msra.mxu0 0.0
      %1594 = vmatprep.subr.mxu0 0.0
      %1595 = vmatpush1.msra.mxu0 0.0
      %1596 = vmatprep.subr.mxu0 0.0
      %1597 = vmatpush1.msra.mxu0 0.0
      %1598 = vmatprep.subr.mxu0 0.0
      %1599 = vmatpush1.msra.mxu0 0.0
      %1600 = vmatprep.subr.mxu0 0.0
      %1601 = vmatpush1.msra.mxu0 0.0
      %1602 = vmatprep.subr.mxu0 0.0
      %1603 = vmatpush1.msra.mxu0 0.0
      %1604 = vmatprep.subr.mxu0 0.0
      %1605 = vmatpush1.msra.mxu0 0.0
      %1606 = vmatprep.subr.mxu0 0.0
      %1607 = vmatpush1.msra.mxu0 0.0
      %1608 = vmatprep.subr.mxu0 0.0
      %1609 = vmatpush1.msra.mxu0 0.0
      %1610 = vmatprep.subr.mxu0 0.0
      %1611 = vmatpush1.msra.mxu0 0.0
      %1612 = vmatprep.mubr.f32.mxu0 0.0
      %v1613 = vand.u32 %v1347, 4294901760
      %1614 = vmatmul.mubr.f32.gmra.mrb[0].mxu0 %v1613
      %v1615 = vpop.f32.mrb[0].mxu0
      %v1616 = vadd.f32 %v1445, %v1615
      %v1617 = vpop.f32.mrb[0].mxu0
      %1618 = vmatprep.mubr.f32.mxu0 0.0
      %v1619 = vand.u32 %v1350, 4294901760
      %1620 = vmatmul.mubr.f32.gmra.mrb[0].mxu0 %v1619
      %v1621 = vpop.f32.mrb[0].mxu0
      %v1622 = vadd.f32 %v1455, %v1621
      %v1623 = vpop.f32.mrb[0].mxu0
      %1624 = vmatprep.mubr.f32.mxu0 0.0
      %v1625 = vand.u32 %v1353, 4294901760
      %1626 = vmatmul.mubr.f32.gmra.mrb[0].mxu0 %v1625
      %v1627 = vpop.f32.mrb[0].mxu0
      %v1628 = vadd.f32 %v1465, %v1627
      %v1629 = vpop.f32.mrb[0].mxu0
      %1630 = vmatprep.mubr.f32.mxu0 0.0
      %v1631 = vand.u32 %v1356, 4294901760
      %1632 = vmatmul.mubr.f32.gmra.mrb[0].mxu0 %v1631
      %v1633 = vpop.f32.mrb[0].mxu0
      %v1634 = vadd.f32 %v1475, %v1633
      %v1635 = vpop.f32.mrb[0].mxu0
      %1636 = vmatprep.mubr.f32.mxu0 0.0
      %v1637 = vand.u32 %v1359, 4294901760
      %1638 = vmatmul.mubr.f32.gmra.mrb[0].mxu0 %v1637
      %v1639 = vpop.f32.mrb[0].mxu0
      %v1640 = vadd.f32 %v1485, %v1639
      %v1641 = vpop.f32.mrb[0].mxu0
      %1642 = vdwg.mxu0
      %1643 = vmatprep.subr.mxu0 0.0
      %v1644 = vand.u32 %v362, 4294901760
      %v1645 = vsub.f32 %v362, %v1644
      %1646 = vmatpush1.msra.mxu0 %v1645
      %1647 = vmatprep.subr.mxu0 0.0
      %v1648 = vand.u32 %v363, 4294901760
      %v1649 = vsub.f32 %v363, %v1648
      %1650 = vmatpush1.msra.mxu0 %v1649
      %1651 = vmatprep.subr.mxu0 0.0
      %v1652 = vand.u32 %v364, 4294901760
      %v1653 = vsub.f32 %v364, %v1652
      %1654 = vmatpush1.msra.mxu0 %v1653
      %1655 = vmatprep.subr.mxu0 0.0
      %v1656 = vand.u32 %v365, 4294901760
      %v1657 = vsub.f32 %v365, %v1656
      %1658 = vmatpush1.msra.mxu0 %v1657
      %1659 = vmatprep.subr.mxu0 0.0
      %v1660 = vand.u32 %v366, 4294901760
      %v1661 = vsub.f32 %v366, %v1660
      %1662 = vmatpush1.msra.mxu0 %v1661
      %1663 = vmatprep.subr.mxu0 0.0
      %v1664 = vand.u32 %v367, 4294901760
      %v1665 = vsub.f32 %v367, %v1664
      %1666 = vmatpush1.msra.mxu0 %v1665
      %1667 = vmatprep.subr.mxu0 0.0
      %v1668 = vand.u32 %v368, 4294901760
      %v1669 = vsub.f32 %v368, %v1668
      %1670 = vmatpush1.msra.mxu0 %v1669
      %1671 = vmatprep.subr.mxu0 0.0
      %v1672 = vand.u32 %v369, 4294901760
      %v1673 = vsub.f32 %v369, %v1672
      %1674 = vmatpush1.msra.mxu0 %v1673
      %1675 = vmatprep.subr.mxu0 0.0
      %v1676 = vand.u32 %v370, 4294901760
      %v1677 = vsub.f32 %v370, %v1676
      %1678 = vmatpush1.msra.mxu0 %v1677
      %1679 = vmatprep.subr.mxu0 0.0
      %v1680 = vand.u32 %v371, 4294901760
      %v1681 = vsub.f32 %v371, %v1680
      %1682 = vmatpush1.msra.mxu0 %v1681
      %1683 = vmatprep.subr.mxu0 0.0
      %v1684 = vand.u32 %v372, 4294901760
      %v1685 = vsub.f32 %v372, %v1684
      %1686 = vmatpush1.msra.mxu0 %v1685
      %1687 = vmatprep.subr.mxu0 0.0
      %v1688 = vand.u32 %v373, 4294901760
      %v1689 = vsub.f32 %v373, %v1688
      %1690 = vmatpush1.msra.mxu0 %v1689
      %1691 = vmatprep.subr.mxu0 0.0
      %1692 = vmatpush1.msra.mxu0 0.0
      %1693 = vmatprep.subr.mxu0 0.0
      %1694 = vmatpush1.msra.mxu0 0.0
      %1695 = vmatprep.subr.mxu0 0.0
      %1696 = vmatpush1.msra.mxu0 0.0
      %1697 = vmatprep.subr.mxu0 0.0
      %1698 = vmatpush1.msra.mxu0 0.0
      %1699 = vmatprep.subr.mxu0 0.0
      %1700 = vmatpush1.msra.mxu0 0.0
      %1701 = vmatprep.subr.mxu0 0.0
      %1702 = vmatpush1.msra.mxu0 0.0
      %1703 = vmatprep.subr.mxu0 0.0
      %1704 = vmatpush1.msra.mxu0 0.0
      %1705 = vmatprep.subr.mxu0 0.0
      %1706 = vmatpush1.msra.mxu0 0.0
      %1707 = vmatprep.subr.mxu0 0.0
      %1708 = vmatpush1.msra.mxu0 0.0
      %1709 = vmatprep.subr.mxu0 0.0
      %1710 = vmatpush1.msra.mxu0 0.0
      %1711 = vmatprep.subr.mxu0 0.0
      %1712 = vmatpush1.msra.mxu0 0.0
      %1713 = vmatprep.subr.mxu0 0.0
      %1714 = vmatpush1.msra.mxu0 0.0
      %1715 = vmatprep.subr.mxu0 0.0
      %1716 = vmatpush1.msra.mxu0 0.0
      %1717 = vmatprep.subr.mxu0 0.0
      %1718 = vmatpush1.msra.mxu0 0.0
      %1719 = vmatprep.subr.mxu0 0.0
      %1720 = vmatpush1.msra.mxu0 0.0
      %1721 = vmatprep.subr.mxu0 0.0
      %1722 = vmatpush1.msra.mxu0 0.0
      %1723 = vmatprep.subr.mxu0 0.0
      %1724 = vmatpush1.msra.mxu0 0.0
      %1725 = vmatprep.subr.mxu0 0.0
      %1726 = vmatpush1.msra.mxu0 0.0
      %1727 = vmatprep.subr.mxu0 0.0
      %1728 = vmatpush1.msra.mxu0 0.0
      %1729 = vmatprep.subr.mxu0 0.0
      %1730 = vmatpush1.msra.mxu0 0.0
      %1731 = vmatprep.mubr.f32.mxu0 0.0
      %v1732 = vand.u32 %v1347, 4294901760
      %v1733 = vsub.f32 %v1347, %v1732
      %1734 = vmatmul.mubr.f32.gmra.mrb[0].mxu0 %v1733
      %v1735 = vpop.f32.mrb[0].mxu0
      %v1736 = vadd.f32 %v1616, %v1735
      %v1737 = vpop.f32.mrb[0].mxu0
      %1738 = vmatprep.mubr.f32.mxu0 0.0
      %v1739 = vand.u32 %v1350, 4294901760
      %v1740 = vsub.f32 %v1350, %v1739
      %1741 = vmatmul.mubr.f32.gmra.mrb[0].mxu0 %v1740
      %v1742 = vpop.f32.mrb[0].mxu0
      %v1743 = vadd.f32 %v1622, %v1742
      %v1744 = vpop.f32.mrb[0].mxu0
      %1745 = vmatprep.mubr.f32.mxu0 0.0
      %v1746 = vand.u32 %v1353, 4294901760
      %v1747 = vsub.f32 %v1353, %v1746
      %1748 = vmatmul.mubr.f32.gmra.mrb[0].mxu0 %v1747
      %v1749 = vpop.f32.mrb[0].mxu0
      %v1750 = vadd.f32 %v1628, %v1749
      %v1751 = vpop.f32.mrb[0].mxu0
      %1752 = vmatprep.mubr.f32.mxu0 0.0
      %v1753 = vand.u32 %v1356, 4294901760
      %v1754 = vsub.f32 %v1356, %v1753
      %1755 = vmatmul.mubr.f32.gmra.mrb[0].mxu0 %v1754
      %v1756 = vpop.f32.mrb[0].mxu0
      %v1757 = vadd.f32 %v1634, %v1756
      %v1758 = vpop.f32.mrb[0].mxu0
      %1759 = vmatprep.mubr.f32.mxu0 0.0
      %v1760 = vand.u32 %v1359, 4294901760
      %v1761 = vsub.f32 %v1359, %v1760
      %1762 = vmatmul.mubr.f32.gmra.mrb[0].mxu0 %v1761
      %v1763 = vpop.f32.mrb[0].mxu0
      %v1764 = vadd.f32 %v1640, %v1763
      %v1765 = vpop.f32.mrb[0].mxu0
      %1766 = vdwg.mxu0
      %1767 = vmatprep.subr.mxu0 0.0
      %v1768 = vand.u32 %v362, 4294901760
      %1769 = vmatpush1.msra.mxu0 %v1768
      %1770 = vmatprep.subr.mxu0 0.0
      %v1771 = vand.u32 %v363, 4294901760
      %1772 = vmatpush1.msra.mxu0 %v1771
      %1773 = vmatprep.subr.mxu0 0.0
      %v1774 = vand.u32 %v364, 4294901760
      %1775 = vmatpush1.msra.mxu0 %v1774
      %1776 = vmatprep.subr.mxu0 0.0
      %v1777 = vand.u32 %v365, 4294901760
      %1778 = vmatpush1.msra.mxu0 %v1777
      %1779 = vmatprep.subr.mxu0 0.0
      %v1780 = vand.u32 %v366, 4294901760
      %1781 = vmatpush1.msra.mxu0 %v1780
      %1782 = vmatprep.subr.mxu0 0.0
      %v1783 = vand.u32 %v367, 4294901760
      %1784 = vmatpush1.msra.mxu0 %v1783
      %1785 = vmatprep.subr.mxu0 0.0
      %v1786 = vand.u32 %v368, 4294901760
      %1787 = vmatpush1.msra.mxu0 %v1786
      %1788 = vmatprep.subr.mxu0 0.0
      %v1789 = vand.u32 %v369, 4294901760
      %1790 = vmatpush1.msra.mxu0 %v1789
      %1791 = vmatprep.subr.mxu0 0.0
      %v1792 = vand.u32 %v370, 4294901760
      %1793 = vmatpush1.msra.mxu0 %v1792
      %1794 = vmatprep.subr.mxu0 0.0
      %v1795 = vand.u32 %v371, 4294901760
      %1796 = vmatpush1.msra.mxu0 %v1795
      %1797 = vmatprep.subr.mxu0 0.0
      %v1798 = vand.u32 %v372, 4294901760
      %1799 = vmatpush1.msra.mxu0 %v1798
      %1800 = vmatprep.subr.mxu0 0.0
      %v1801 = vand.u32 %v373, 4294901760
      %1802 = vmatpush1.msra.mxu0 %v1801
      %1803 = vmatprep.subr.mxu0 0.0
      %1804 = vmatpush1.msra.mxu0 0.0
      %1805 = vmatprep.subr.mxu0 0.0
      %1806 = vmatpush1.msra.mxu0 0.0
      %1807 = vmatprep.subr.mxu0 0.0
      %1808 = vmatpush1.msra.mxu0 0.0
      %1809 = vmatprep.subr.mxu0 0.0
      %1810 = vmatpush1.msra.mxu0 0.0
      %1811 = vmatprep.subr.mxu0 0.0
      %1812 = vmatpush1.msra.mxu0 0.0
      %1813 = vmatprep.subr.mxu0 0.0
      %1814 = vmatpush1.msra.mxu0 0.0
      %1815 = vmatprep.subr.mxu0 0.0
      %1816 = vmatpush1.msra.mxu0 0.0
      %1817 = vmatprep.subr.mxu0 0.0
      %1818 = vmatpush1.msra.mxu0 0.0
      %1819 = vmatprep.subr.mxu0 0.0
      %1820 = vmatpush1.msra.mxu0 0.0
      %1821 = vmatprep.subr.mxu0 0.0
      %1822 = vmatpush1.msra.mxu0 0.0
      %1823 = vmatprep.subr.mxu0 0.0
      %1824 = vmatpush1.msra.mxu0 0.0
      %1825 = vmatprep.subr.mxu0 0.0
      %1826 = vmatpush1.msra.mxu0 0.0
      %1827 = vmatprep.subr.mxu0 0.0
      %1828 = vmatpush1.msra.mxu0 0.0
      %1829 = vmatprep.subr.mxu0 0.0
      %1830 = vmatpush1.msra.mxu0 0.0
      %1831 = vmatprep.subr.mxu0 0.0
      %1832 = vmatpush1.msra.mxu0 0.0
      %1833 = vmatprep.subr.mxu0 0.0
      %1834 = vmatpush1.msra.mxu0 0.0
      %1835 = vmatprep.subr.mxu0 0.0
      %1836 = vmatpush1.msra.mxu0 0.0
      %1837 = vmatprep.subr.mxu0 0.0
      %1838 = vmatpush1.msra.mxu0 0.0
      %1839 = vmatprep.subr.mxu0 0.0
      %1840 = vmatpush1.msra.mxu0 0.0
      %1841 = vmatprep.subr.mxu0 0.0
      %1842 = vmatpush1.msra.mxu0 0.0
      %1843 = vmatprep.mubr.f32.mxu0 0.0
      %v1844 = vand.u32 %v1347, 4294901760
      %v1845 = vsub.f32 %v1347, %v1844
      %v1846 = vand.u32 %v1845, 4294901760
      %1847 = vmatmul.mubr.f32.gmra.mrb[0].mxu0 %v1846
      %v1848 = vpop.f32.mrb[0].mxu0
      %v1849 = vadd.f32 %v1736, %v1848
      %v1850 = vpop.f32.mrb[0].mxu0
      %1851 = vmatprep.mubr.f32.mxu0 0.0
      %v1852 = vand.u32 %v1350, 4294901760
      %v1853 = vsub.f32 %v1350, %v1852
      %v1854 = vand.u32 %v1853, 4294901760
      %1855 = vmatmul.mubr.f32.gmra.mrb[0].mxu0 %v1854
      %v1856 = vpop.f32.mrb[0].mxu0
      %v1857 = vadd.f32 %v1743, %v1856
      %v1858 = vpop.f32.mrb[0].mxu0
      %1859 = vmatprep.mubr.f32.mxu0 0.0
      %v1860 = vand.u32 %v1353, 4294901760
      %v1861 = vsub.f32 %v1353, %v1860
      %v1862 = vand.u32 %v1861, 4294901760
      %1863 = vmatmul.mubr.f32.gmra.mrb[0].mxu0 %v1862
      %v1864 = vpop.f32.mrb[0].mxu0
      %v1865 = vadd.f32 %v1750, %v1864
      %v1866 = vpop.f32.mrb[0].mxu0
      %1867 = vmatprep.mubr.f32.mxu0 0.0
      %v1868 = vand.u32 %v1356, 4294901760
      %v1869 = vsub.f32 %v1356, %v1868
      %v1870 = vand.u32 %v1869, 4294901760
      %1871 = vmatmul.mubr.f32.gmra.mrb[0].mxu0 %v1870
      %v1872 = vpop.f32.mrb[0].mxu0
      %v1873 = vadd.f32 %v1757, %v1872
      %v1874 = vpop.f32.mrb[0].mxu0
      %1875 = vmatprep.mubr.f32.mxu0 0.0
      %v1876 = vand.u32 %v1359, 4294901760
      %v1877 = vsub.f32 %v1359, %v1876
      %v1878 = vand.u32 %v1877, 4294901760
      %1879 = vmatmul.mubr.f32.gmra.mrb[0].mxu0 %v1878
      %v1880 = vpop.f32.mrb[0].mxu0
      %v1881 = vadd.f32 %v1764, %v1880
      %v1882 = vpop.f32.mrb[0].mxu0
      %1883 = vdwg.mxu0
      %1884 = vmatprep.subr.mxu0 0.0
      %v1885 = vand.u32 %v362, 4294901760
      %v1886 = vsub.f32 %v362, %v1885
      %v1887 = vand.u32 %v1886, 4294901760
      %1888 = vmatpush1.msra.mxu0 %v1887
      %1889 = vmatprep.subr.mxu0 0.0
      %v1890 = vand.u32 %v363, 4294901760
      %v1891 = vsub.f32 %v363, %v1890
      %v1892 = vand.u32 %v1891, 4294901760
      %1893 = vmatpush1.msra.mxu0 %v1892
      %1894 = vmatprep.subr.mxu0 0.0
      %v1895 = vand.u32 %v364, 4294901760
      %v1896 = vsub.f32 %v364, %v1895
      %v1897 = vand.u32 %v1896, 4294901760
      %1898 = vmatpush1.msra.mxu0 %v1897
      %1899 = vmatprep.subr.mxu0 0.0
      %v1900 = vand.u32 %v365, 4294901760
      %v1901 = vsub.f32 %v365, %v1900
      %v1902 = vand.u32 %v1901, 4294901760
      %1903 = vmatpush1.msra.mxu0 %v1902
      %1904 = vmatprep.subr.mxu0 0.0
      %v1905 = vand.u32 %v366, 4294901760
      %v1906 = vsub.f32 %v366, %v1905
      %v1907 = vand.u32 %v1906, 4294901760
      %1908 = vmatpush1.msra.mxu0 %v1907
      %1909 = vmatprep.subr.mxu0 0.0
      %v1910 = vand.u32 %v367, 4294901760
      %v1911 = vsub.f32 %v367, %v1910
      %v1912 = vand.u32 %v1911, 4294901760
      %1913 = vmatpush1.msra.mxu0 %v1912
      %1914 = vmatprep.subr.mxu0 0.0
      %v1915 = vand.u32 %v368, 4294901760
      %v1916 = vsub.f32 %v368, %v1915
      %v1917 = vand.u32 %v1916, 4294901760
      %1918 = vmatpush1.msra.mxu0 %v1917
      %1919 = vmatprep.subr.mxu0 0.0
      %v1920 = vand.u32 %v369, 4294901760
      %v1921 = vsub.f32 %v369, %v1920
      %v1922 = vand.u32 %v1921, 4294901760
      %1923 = vmatpush1.msra.mxu0 %v1922
      %1924 = vmatprep.subr.mxu0 0.0
      %v1925 = vand.u32 %v370, 4294901760
      %v1926 = vsub.f32 %v370, %v1925
      %v1927 = vand.u32 %v1926, 4294901760
      %1928 = vmatpush1.msra.mxu0 %v1927
      %1929 = vmatprep.subr.mxu0 0.0
      %v1930 = vand.u32 %v371, 4294901760
      %v1931 = vsub.f32 %v371, %v1930
      %v1932 = vand.u32 %v1931, 4294901760
      %1933 = vmatpush1.msra.mxu0 %v1932
      %1934 = vmatprep.subr.mxu0 0.0
      %v1935 = vand.u32 %v372, 4294901760
      %v1936 = vsub.f32 %v372, %v1935
      %v1937 = vand.u32 %v1936, 4294901760
      %1938 = vmatpush1.msra.mxu0 %v1937
      %1939 = vmatprep.subr.mxu0 0.0
      %v1940 = vand.u32 %v373, 4294901760
      %v1941 = vsub.f32 %v373, %v1940
      %v1942 = vand.u32 %v1941, 4294901760
      %1943 = vmatpush1.msra.mxu0 %v1942
      %1944 = vmatprep.subr.mxu0 0.0
      %1945 = vmatpush1.msra.mxu0 0.0
      %1946 = vmatprep.subr.mxu0 0.0
      %1947 = vmatpush1.msra.mxu0 0.0
      %1948 = vmatprep.subr.mxu0 0.0
      %1949 = vmatpush1.msra.mxu0 0.0
      %1950 = vmatprep.subr.mxu0 0.0
      %1951 = vmatpush1.msra.mxu0 0.0
      %1952 = vmatprep.subr.mxu0 0.0
      %1953 = vmatpush1.msra.mxu0 0.0
      %1954 = vmatprep.subr.mxu0 0.0
      %1955 = vmatpush1.msra.mxu0 0.0
      %1956 = vmatprep.subr.mxu0 0.0
      %1957 = vmatpush1.msra.mxu0 0.0
      %1958 = vmatprep.subr.mxu0 0.0
      %1959 = vmatpush1.msra.mxu0 0.0
      %1960 = vmatprep.subr.mxu0 0.0
      %1961 = vmatpush1.msra.mxu0 0.0
      %1962 = vmatprep.subr.mxu0 0.0
      %1963 = vmatpush1.msra.mxu0 0.0
      %1964 = vmatprep.subr.mxu0 0.0
      %1965 = vmatpush1.msra.mxu0 0.0
      %1966 = vmatprep.subr.mxu0 0.0
      %1967 = vmatpush1.msra.mxu0 0.0
      %1968 = vmatprep.subr.mxu0 0.0
      %1969 = vmatpush1.msra.mxu0 0.0
      %1970 = vmatprep.subr.mxu0 0.0
      %1971 = vmatpush1.msra.mxu0 0.0
      %1972 = vmatprep.subr.mxu0 0.0
      %1973 = vmatpush1.msra.mxu0 0.0
      %1974 = vmatprep.subr.mxu0 0.0
      %1975 = vmatpush1.msra.mxu0 0.0
      %1976 = vmatprep.subr.mxu0 0.0
      %1977 = vmatpush1.msra.mxu0 0.0
      %1978 = vmatprep.subr.mxu0 0.0
      %1979 = vmatpush1.msra.mxu0 0.0
      %1980 = vmatprep.subr.mxu0 0.0
      %1981 = vmatpush1.msra.mxu0 0.0
      %1982 = vmatprep.subr.mxu0 0.0
      %1983 = vmatpush1.msra.mxu0 0.0
      %1984 = vmatprep.mubr.f32.mxu0 0.0
      %v1985 = vand.u32 %v1347, 4294901760
      %1986 = vmatmul.mubr.f32.gmra.mrb[0].mxu0 %v1985
      %v1987 = vpop.f32.mrb[0].mxu0
      %v1988 = vadd.f32 %v1849, %v1987
      %v1989 = vpop.f32.mrb[0].mxu0
      %1990 = vmatprep.mubr.f32.mxu0 0.0
      %v1991 = vand.u32 %v1350, 4294901760
      %1992 = vmatmul.mubr.f32.gmra.mrb[0].mxu0 %v1991
      %v1993 = vpop.f32.mrb[0].mxu0
      %v1994 = vadd.f32 %v1857, %v1993
      %v1995 = vpop.f32.mrb[0].mxu0
      %1996 = vmatprep.mubr.f32.mxu0 0.0
      %v1997 = vand.u32 %v1353, 4294901760
      %1998 = vmatmul.mubr.f32.gmra.mrb[0].mxu0 %v1997
      %v1999 = vpop.f32.mrb[0].mxu0
      %v2000 = vadd.f32 %v1865, %v1999
      %v2001 = vpop.f32.mrb[0].mxu0
      %2002 = vmatprep.mubr.f32.mxu0 0.0
      %v2003 = vand.u32 %v1356, 4294901760
      %2004 = vmatmul.mubr.f32.gmra.mrb[0].mxu0 %v2003
      %v2005 = vpop.f32.mrb[0].mxu0
      %v2006 = vadd.f32 %v1873, %v2005
      %v2007 = vpop.f32.mrb[0].mxu0
      %2008 = vmatprep.mubr.f32.mxu0 0.0
      %v2009 = vand.u32 %v1359, 4294901760
      %2010 = vmatmul.mubr.f32.gmra.mrb[0].mxu0 %v2009
      %v2011 = vpop.f32.mrb[0].mxu0
      %v2012 = vadd.f32 %v1881, %v2011
      %v2013 = vpop.f32.mrb[0].mxu0
      %2014 = vdwg.mxu0
      %2015 = vmatprep.subr.mxu0 0.0
      %v2016 = vand.u32 %v362, 4294901760
      %2017 = vmatpush1.msra.mxu0 %v2016
      %2018 = vmatprep.subr.mxu0 0.0
      %v2019 = vand.u32 %v363, 4294901760
      %2020 = vmatpush1.msra.mxu0 %v2019
      %2021 = vmatprep.subr.mxu0 0.0
      %v2022 = vand.u32 %v364, 4294901760
      %2023 = vmatpush1.msra.mxu0 %v2022
      %2024 = vmatprep.subr.mxu0 0.0
      %v2025 = vand.u32 %v365, 4294901760
      %2026 = vmatpush1.msra.mxu0 %v2025
      %2027 = vmatprep.subr.mxu0 0.0
      %v2028 = vand.u32 %v366, 4294901760
      %2029 = vmatpush1.msra.mxu0 %v2028
      %2030 = vmatprep.subr.mxu0 0.0
      %v2031 = vand.u32 %v367, 4294901760
      %2032 = vmatpush1.msra.mxu0 %v2031
      %2033 = vmatprep.subr.mxu0 0.0
      %v2034 = vand.u32 %v368, 4294901760
      %2035 = vmatpush1.msra.mxu0 %v2034
      %2036 = vmatprep.subr.mxu0 0.0
      %v2037 = vand.u32 %v369, 4294901760
      %2038 = vmatpush1.msra.mxu0 %v2037
      %2039 = vmatprep.subr.mxu0 0.0
      %v2040 = vand.u32 %v370, 4294901760
      %2041 = vmatpush1.msra.mxu0 %v2040
      %2042 = vmatprep.subr.mxu0 0.0
      %v2043 = vand.u32 %v371, 4294901760
      %2044 = vmatpush1.msra.mxu0 %v2043
      %2045 = vmatprep.subr.mxu0 0.0
      %v2046 = vand.u32 %v372, 4294901760
      %2047 = vmatpush1.msra.mxu0 %v2046
      %2048 = vmatprep.subr.mxu0 0.0
      %v2049 = vand.u32 %v373, 4294901760
      %2050 = vmatpush1.msra.mxu0 %v2049
      %2051 = vmatprep.subr.mxu0 0.0
      %2052 = vmatpush1.msra.mxu0 0.0
      %2053 = vmatprep.subr.mxu0 0.0
      %2054 = vmatpush1.msra.mxu0 0.0
      %2055 = vmatprep.subr.mxu0 0.0
      %2056 = vmatpush1.msra.mxu0 0.0
      %2057 = vmatprep.subr.mxu0 0.0
      %2058 = vmatpush1.msra.mxu0 0.0
      %2059 = vmatprep.subr.mxu0 0.0
      %2060 = vmatpush1.msra.mxu0 0.0
      %2061 = vmatprep.subr.mxu0 0.0
      %2062 = vmatpush1.msra.mxu0 0.0
      %2063 = vmatprep.subr.mxu0 0.0
      %2064 = vmatpush1.msra.mxu0 0.0
      %2065 = vmatprep.subr.mxu0 0.0
      %2066 = vmatpush1.msra.mxu0 0.0
      %2067 = vmatprep.subr.mxu0 0.0
      %2068 = vmatpush1.msra.mxu0 0.0
      %2069 = vmatprep.subr.mxu0 0.0
      %2070 = vmatpush1.msra.mxu0 0.0
      %2071 = vmatprep.subr.mxu0 0.0
      %2072 = vmatpush1.msra.mxu0 0.0
      %2073 = vmatprep.subr.mxu0 0.0
      %2074 = vmatpush1.msra.mxu0 0.0
      %2075 = vmatprep.subr.mxu0 0.0
      %2076 = vmatpush1.msra.mxu0 0.0
      %2077 = vmatprep.subr.mxu0 0.0
      %2078 = vmatpush1.msra.mxu0 0.0
      %2079 = vmatprep.subr.mxu0 0.0
      %2080 = vmatpush1.msra.mxu0 0.0
      %2081 = vmatprep.subr.mxu0 0.0
      %2082 = vmatpush1.msra.mxu0 0.0
      %2083 = vmatprep.subr.mxu0 0.0
      %2084 = vmatpush1.msra.mxu0 0.0
      %2085 = vmatprep.subr.mxu0 0.0
      %2086 = vmatpush1.msra.mxu0 0.0
      %2087 = vmatprep.subr.mxu0 0.0
      %2088 = vmatpush1.msra.mxu0 0.0
      %2089 = vmatprep.subr.mxu0 0.0
      %2090 = vmatpush1.msra.mxu0 0.0
      %2091 = vmatprep.mubr.f32.mxu0 0.0
      %v2092 = vand.u32 %v1347, 4294901760
      %2093 = vmatmul.mubr.f32.gmra.mrb[0].mxu0 %v2092
      %v2094 = vpop.f32.mrb[0].mxu0
      %v2095 = vadd.f32 %v1988, %v2094
      %v2096 = vpop.f32.mrb[0].mxu0
      %2097 = vmatprep.mubr.f32.mxu0 0.0
      %v2098 = vand.u32 %v1350, 4294901760
      %2099 = vmatmul.mubr.f32.gmra.mrb[0].mxu0 %v2098
      %v2100 = vpop.f32.mrb[0].mxu0
      %v2101 = vadd.f32 %v1994, %v2100
      %v2102 = vpop.f32.mrb[0].mxu0
      %2103 = vmatprep.mubr.f32.mxu0 0.0
      %v2104 = vand.u32 %v1353, 4294901760
      %2105 = vmatmul.mubr.f32.gmra.mrb[0].mxu0 %v2104
      %v2106 = vpop.f32.mrb[0].mxu0
      %v2107 = vadd.f32 %v2000, %v2106
      %v2108 = vpop.f32.mrb[0].mxu0
      %2109 = vmatprep.mubr.f32.mxu0 0.0
      %v2110 = vand.u32 %v1356, 4294901760
      %2111 = vmatmul.mubr.f32.gmra.mrb[0].mxu0 %v2110
      %v2112 = vpop.f32.mrb[0].mxu0
      %v2113 = vadd.f32 %v2006, %v2112
      %v2114 = vpop.f32.mrb[0].mxu0
      %2115 = vmatprep.mubr.f32.mxu0 0.0
      %v2116 = vand.u32 %v1359, 4294901760
      %2117 = vmatmul.mubr.f32.gmra.mrb[0].mxu0 %v2116
      %v2118 = vpop.f32.mrb[0].mxu0
      %v2119 = vadd.f32 %v2012, %v2118
      %v2120 = vpop.f32.mrb[0].mxu0
      %2121 = vdwg.mxu0
      %2122 = vst.msk [vmem:[%s332] sm:$0xff] %vm1335, %v2095
      %2123 = vst.msk [vmem:[%s332 + $0x8] sm:$0xff] %vm1335, %v2101
      %2124 = vst.msk [vmem:[%s332 + $0x10] sm:$0xff] %vm1335, %v2107
      %2125 = vst.msk [vmem:[%s332 + $0x18] sm:$0xff] %vm1335, %v2113
      %vm2126 = vcmask 60416
      %2127 = vst.msk [vmem:[%s332 + $0x20] sm:$0xf] %vm2126, %v2119
      %v2129 = vsel %vm374, %v357, 0
      %v2132 = vsel %vm374, %v358, 0
      %v2135 = vsel %vm374, %v359, 0
      %2137 = vmatprep.subr.mxu0 0.0
      %v2138 = vand.u32 %v362, 4294901760
      %2139 = vmatpush1.msra.mxu0 %v2138
      %2140 = vmatprep.subr.mxu0 0.0
      %v2141 = vand.u32 %v363, 4294901760
      %2142 = vmatpush1.msra.mxu0 %v2141
      %2143 = vmatprep.subr.mxu0 0.0
      %v2144 = vand.u32 %v364, 4294901760
      %2145 = vmatpush1.msra.mxu0 %v2144
      %2146 = vmatprep.subr.mxu0 0.0
      %v2147 = vand.u32 %v365, 4294901760
      %2148 = vmatpush1.msra.mxu0 %v2147
      %2149 = vmatprep.subr.mxu0 0.0
      %v2150 = vand.u32 %v366, 4294901760
      %2151 = vmatpush1.msra.mxu0 %v2150
      %2152 = vmatprep.subr.mxu0 0.0
      %v2153 = vand.u32 %v367, 4294901760
      %2154 = vmatpush1.msra.mxu0 %v2153
      %2155 = vmatprep.subr.mxu0 0.0
      %v2156 = vand.u32 %v368, 4294901760
      %2157 = vmatpush1.msra.mxu0 %v2156
      %2158 = vmatprep.subr.mxu0 0.0
      %v2159 = vand.u32 %v369, 4294901760
      %2160 = vmatpush1.msra.mxu0 %v2159
      %2161 = vmatprep.subr.mxu0 0.0
      %v2162 = vand.u32 %v370, 4294901760
      %2163 = vmatpush1.msra.mxu0 %v2162
      %2164 = vmatprep.subr.mxu0 0.0
      %v2165 = vand.u32 %v371, 4294901760
      %2166 = vmatpush1.msra.mxu0 %v2165
      %2167 = vmatprep.subr.mxu0 0.0
      %v2168 = vand.u32 %v372, 4294901760
      %2169 = vmatpush1.msra.mxu0 %v2168
      %2170 = vmatprep.subr.mxu0 0.0
      %v2171 = vand.u32 %v373, 4294901760
      %2172 = vmatpush1.msra.mxu0 %v2171
      %2173 = vmatprep.subr.mxu0 0.0
      %2174 = vmatpush1.msra.mxu0 0.0
      %2175 = vmatprep.subr.mxu0 0.0
      %2176 = vmatpush1.msra.mxu0 0.0
      %2177 = vmatprep.subr.mxu0 0.0
      %2178 = vmatpush1.msra.mxu0 0.0
      %2179 = vmatprep.subr.mxu0 0.0
      %2180 = vmatpush1.msra.mxu0 0.0
      %2181 = vmatprep.subr.mxu0 0.0
      %2182 = vmatpush1.msra.mxu0 0.0
      %2183 = vmatprep.subr.mxu0 0.0
      %2184 = vmatpush1.msra.mxu0 0.0
      %2185 = vmatprep.subr.mxu0 0.0
      %2186 = vmatpush1.msra.mxu0 0.0
      %2187 = vmatprep.subr.mxu0 0.0
      %2188 = vmatpush1.msra.mxu0 0.0
      %2189 = vmatprep.subr.mxu0 0.0
      %2190 = vmatpush1.msra.mxu0 0.0
      %2191 = vmatprep.subr.mxu0 0.0
      %2192 = vmatpush1.msra.mxu0 0.0
      %2193 = vmatprep.subr.mxu0 0.0
      %2194 = vmatpush1.msra.mxu0 0.0
      %2195 = vmatprep.subr.mxu0 0.0
      %2196 = vmatpush1.msra.mxu0 0.0
      %2197 = vmatprep.subr.mxu0 0.0
      %2198 = vmatpush1.msra.mxu0 0.0
      %2199 = vmatprep.subr.mxu0 0.0
      %2200 = vmatpush1.msra.mxu0 0.0
      %2201 = vmatprep.subr.mxu0 0.0
      %2202 = vmatpush1.msra.mxu0 0.0
      %2203 = vmatprep.subr.mxu0 0.0
      %2204 = vmatpush1.msra.mxu0 0.0
      %2205 = vmatprep.subr.mxu0 0.0
      %2206 = vmatpush1.msra.mxu0 0.0
      %2207 = vmatprep.subr.mxu0 0.0
      %2208 = vmatpush1.msra.mxu0 0.0
      %2209 = vmatprep.subr.mxu0 0.0
      %2210 = vmatpush1.msra.mxu0 0.0
      %2211 = vmatprep.subr.mxu0 0.0
      %2212 = vmatpush1.msra.mxu0 0.0
      %2213 = vmatprep.mubr.f32.mxu0 0.0
      %v2214 = vand.u32 %v2129, 4294901760
      %v2215 = vsub.f32 %v2129, %v2214
      %v2216 = vand.u32 %v2215, 4294901760
      %v2217 = vsub.f32 %v2215, %v2216
      %v2218 = vand.u32 %v2217, 4294901760
      %2219 = vmatmul.mubr.f32.gmra.mrb[0].mxu0 %v2218
      %v2220 = vpop.f32.mrb[0].mxu0
      %v2221 = vadd.f32 0.0, %v2220
      %v2222 = vpop.f32.mrb[0].mxu0
      %2223 = vmatprep.mubr.f32.mxu0 0.0
      %v2224 = vand.u32 %v2132, 4294901760
      %v2225 = vsub.f32 %v2132, %v2224
      %v2226 = vand.u32 %v2225, 4294901760
      %v2227 = vsub.f32 %v2225, %v2226
      %v2228 = vand.u32 %v2227, 4294901760
      %2229 = vmatmul.mubr.f32.gmra.mrb[0].mxu0 %v2228
      %v2230 = vpop.f32.mrb[0].mxu0
      %v2231 = vadd.f32 0.0, %v2230
      %v2232 = vpop.f32.mrb[0].mxu0
      %2233 = vmatprep.mubr.f32.mxu0 0.0
      %v2234 = vand.u32 %v2135, 4294901760
      %v2235 = vsub.f32 %v2135, %v2234
      %v2236 = vand.u32 %v2235, 4294901760
      %v2237 = vsub.f32 %v2235, %v2236
      %v2238 = vand.u32 %v2237, 4294901760
      %2239 = vmatmul.mubr.f32.gmra.mrb[0].mxu0 %v2238
      %v2240 = vpop.f32.mrb[0].mxu0
      %v2241 = vadd.f32 0.0, %v2240
      %v2242 = vpop.f32.mrb[0].mxu0
      %2243 = vdwg.mxu0
      %2244 = vmatprep.subr.mxu0 0.0
      %v2245 = vand.u32 %v362, 4294901760
      %v2246 = vsub.f32 %v362, %v2245
      %v2247 = vand.u32 %v2246, 4294901760
      %v2248 = vsub.f32 %v2246, %v2247
      %v2249 = vand.u32 %v2248, 4294901760
      %2250 = vmatpush1.msra.mxu0 %v2249
      %2251 = vmatprep.subr.mxu0 0.0
      %v2252 = vand.u32 %v363, 4294901760
      %v2253 = vsub.f32 %v363, %v2252
      %v2254 = vand.u32 %v2253, 4294901760
      %v2255 = vsub.f32 %v2253, %v2254
      %v2256 = vand.u32 %v2255, 4294901760
      %2257 = vmatpush1.msra.mxu0 %v2256
      %2258 = vmatprep.subr.mxu0 0.0
      %v2259 = vand.u32 %v364, 4294901760
      %v2260 = vsub.f32 %v364, %v2259
      %v2261 = vand.u32 %v2260, 4294901760
      %v2262 = vsub.f32 %v2260, %v2261
      %v2263 = vand.u32 %v2262, 4294901760
      %2264 = vmatpush1.msra.mxu0 %v2263
      %2265 = vmatprep.subr.mxu0 0.0
      %v2266 = vand.u32 %v365, 4294901760
      %v2267 = vsub.f32 %v365, %v2266
      %v2268 = vand.u32 %v2267, 4294901760
      %v2269 = vsub.f32 %v2267, %v2268
      %v2270 = vand.u32 %v2269, 4294901760
      %2271 = vmatpush1.msra.mxu0 %v2270
      %2272 = vmatprep.subr.mxu0 0.0
      %v2273 = vand.u32 %v366, 4294901760
      %v2274 = vsub.f32 %v366, %v2273
      %v2275 = vand.u32 %v2274, 4294901760
      %v2276 = vsub.f32 %v2274, %v2275
      %v2277 = vand.u32 %v2276, 4294901760
      %2278 = vmatpush1.msra.mxu0 %v2277
      %2279 = vmatprep.subr.mxu0 0.0
      %v2280 = vand.u32 %v367, 4294901760
      %v2281 = vsub.f32 %v367, %v2280
      %v2282 = vand.u32 %v2281, 4294901760
      %v2283 = vsub.f32 %v2281, %v2282
      %v2284 = vand.u32 %v2283, 4294901760
      %2285 = vmatpush1.msra.mxu0 %v2284
      %2286 = vmatprep.subr.mxu0 0.0
      %v2287 = vand.u32 %v368, 4294901760
      %v2288 = vsub.f32 %v368, %v2287
      %v2289 = vand.u32 %v2288, 4294901760
      %v2290 = vsub.f32 %v2288, %v2289
      %v2291 = vand.u32 %v2290, 4294901760
      %2292 = vmatpush1.msra.mxu0 %v2291
      %2293 = vmatprep.subr.mxu0 0.0
      %v2294 = vand.u32 %v369, 4294901760
      %v2295 = vsub.f32 %v369, %v2294
      %v2296 = vand.u32 %v2295, 4294901760
      %v2297 = vsub.f32 %v2295, %v2296
      %v2298 = vand.u32 %v2297, 4294901760
      %2299 = vmatpush1.msra.mxu0 %v2298
      %2300 = vmatprep.subr.mxu0 0.0
      %v2301 = vand.u32 %v370, 4294901760
      %v2302 = vsub.f32 %v370, %v2301
      %v2303 = vand.u32 %v2302, 4294901760
      %v2304 = vsub.f32 %v2302, %v2303
      %v2305 = vand.u32 %v2304, 4294901760
      %2306 = vmatpush1.msra.mxu0 %v2305
      %2307 = vmatprep.subr.mxu0 0.0
      %v2308 = vand.u32 %v371, 4294901760
      %v2309 = vsub.f32 %v371, %v2308
      %v2310 = vand.u32 %v2309, 4294901760
      %v2311 = vsub.f32 %v2309, %v2310
      %v2312 = vand.u32 %v2311, 4294901760
      %2313 = vmatpush1.msra.mxu0 %v2312
      %2314 = vmatprep.subr.mxu0 0.0
      %v2315 = vand.u32 %v372, 4294901760
      %v2316 = vsub.f32 %v372, %v2315
      %v2317 = vand.u32 %v2316, 4294901760
      %v2318 = vsub.f32 %v2316, %v2317
      %v2319 = vand.u32 %v2318, 4294901760
      %2320 = vmatpush1.msra.mxu0 %v2319
      %2321 = vmatprep.subr.mxu0 0.0
      %v2322 = vand.u32 %v373, 4294901760
      %v2323 = vsub.f32 %v373, %v2322
      %v2324 = vand.u32 %v2323, 4294901760
      %v2325 = vsub.f32 %v2323, %v2324
      %v2326 = vand.u32 %v2325, 4294901760
      %2327 = vmatpush1.msra.mxu0 %v2326
      %2328 = vmatprep.subr.mxu0 0.0
      %2329 = vmatpush1.msra.mxu0 0.0
      %2330 = vmatprep.subr.mxu0 0.0
      %2331 = vmatpush1.msra.mxu0 0.0
      %2332 = vmatprep.subr.mxu0 0.0
      %2333 = vmatpush1.msra.mxu0 0.0
      %2334 = vmatprep.subr.mxu0 0.0
      %2335 = vmatpush1.msra.mxu0 0.0
      %2336 = vmatprep.subr.mxu0 0.0
      %2337 = vmatpush1.msra.mxu0 0.0
      %2338 = vmatprep.subr.mxu0 0.0
      %2339 = vmatpush1.msra.mxu0 0.0
      %2340 = vmatprep.subr.mxu0 0.0
      %2341 = vmatpush1.msra.mxu0 0.0
      %2342 = vmatprep.subr.mxu0 0.0
      %2343 = vmatpush1.msra.mxu0 0.0
      %2344 = vmatprep.subr.mxu0 0.0
      %2345 = vmatpush1.msra.mxu0 0.0
      %2346 = vmatprep.subr.mxu0 0.0
      %2347 = vmatpush1.msra.mxu0 0.0
      %2348 = vmatprep.subr.mxu0 0.0
      %2349 = vmatpush1.msra.mxu0 0.0
      %2350 = vmatprep.subr.mxu0 0.0
      %2351 = vmatpush1.msra.mxu0 0.0
      %2352 = vmatprep.subr.mxu0 0.0
      %2353 = vmatpush1.msra.mxu0 0.0
      %2354 = vmatprep.subr.mxu0 0.0
      %2355 = vmatpush1.msra.mxu0 0.0
      %2356 = vmatprep.subr.mxu0 0.0
      %2357 = vmatpush1.msra.mxu0 0.0
      %2358 = vmatprep.subr.mxu0 0.0
      %2359 = vmatpush1.msra.mxu0 0.0
      %2360 = vmatprep.subr.mxu0 0.0
      %2361 = vmatpush1.msra.mxu0 0.0
      %2362 = vmatprep.subr.mxu0 0.0
      %2363 = vmatpush1.msra.mxu0 0.0
      %2364 = vmatprep.subr.mxu0 0.0
      %2365 = vmatpush1.msra.mxu0 0.0
      %2366 = vmatprep.subr.mxu0 0.0
      %2367 = vmatpush1.msra.mxu0 0.0
      %2368 = vmatprep.mubr.f32.mxu0 0.0
      %v2369 = vand.u32 %v2129, 4294901760
      %2370 = vmatmul.mubr.f32.gmra.mrb[0].mxu0 %v2369
      %v2371 = vpop.f32.mrb[0].mxu0
      %v2372 = vadd.f32 %v2221, %v2371
      %v2373 = vpop.f32.mrb[0].mxu0
      %2374 = vmatprep.mubr.f32.mxu0 0.0
      %v2375 = vand.u32 %v2132, 4294901760
      %2376 = vmatmul.mubr.f32.gmra.mrb[0].mxu0 %v2375
      %v2377 = vpop.f32.mrb[0].mxu0
      %v2378 = vadd.f32 %v2231, %v2377
      %v2379 = vpop.f32.mrb[0].mxu0
      %2380 = vmatprep.mubr.f32.mxu0 0.0
      %v2381 = vand.u32 %v2135, 4294901760
      %2382 = vmatmul.mubr.f32.gmra.mrb[0].mxu0 %v2381
      %v2383 = vpop.f32.mrb[0].mxu0
      %v2384 = vadd.f32 %v2241, %v2383
      %v2385 = vpop.f32.mrb[0].mxu0
      %2386 = vdwg.mxu0
      %2387 = vmatprep.subr.mxu0 0.0
      %v2388 = vand.u32 %v362, 4294901760
      %v2389 = vsub.f32 %v362, %v2388
      %2390 = vmatpush1.msra.mxu0 %v2389
      %2391 = vmatprep.subr.mxu0 0.0
      %v2392 = vand.u32 %v363, 4294901760
      %v2393 = vsub.f32 %v363, %v2392
      %2394 = vmatpush1.msra.mxu0 %v2393
      %2395 = vmatprep.subr.mxu0 0.0
      %v2396 = vand.u32 %v364, 4294901760
      %v2397 = vsub.f32 %v364, %v2396
      %2398 = vmatpush1.msra.mxu0 %v2397
      %2399 = vmatprep.subr.mxu0 0.0
      %v2400 = vand.u32 %v365, 4294901760
      %v2401 = vsub.f32 %v365, %v2400
      %2402 = vmatpush1.msra.mxu0 %v2401
      %2403 = vmatprep.subr.mxu0 0.0
      %v2404 = vand.u32 %v366, 4294901760
      %v2405 = vsub.f32 %v366, %v2404
      %2406 = vmatpush1.msra.mxu0 %v2405
      %2407 = vmatprep.subr.mxu0 0.0
      %v2408 = vand.u32 %v367, 4294901760
      %v2409 = vsub.f32 %v367, %v2408
      %2410 = vmatpush1.msra.mxu0 %v2409
      %2411 = vmatprep.subr.mxu0 0.0
      %v2412 = vand.u32 %v368, 4294901760
      %v2413 = vsub.f32 %v368, %v2412
      %2414 = vmatpush1.msra.mxu0 %v2413
      %2415 = vmatprep.subr.mxu0 0.0
      %v2416 = vand.u32 %v369, 4294901760
      %v2417 = vsub.f32 %v369, %v2416
      %2418 = vmatpush1.msra.mxu0 %v2417
      %2419 = vmatprep.subr.mxu0 0.0
      %v2420 = vand.u32 %v370, 4294901760
      %v2421 = vsub.f32 %v370, %v2420
      %2422 = vmatpush1.msra.mxu0 %v2421
      %2423 = vmatprep.subr.mxu0 0.0
      %v2424 = vand.u32 %v371, 4294901760
      %v2425 = vsub.f32 %v371, %v2424
      %2426 = vmatpush1.msra.mxu0 %v2425
      %2427 = vmatprep.subr.mxu0 0.0
      %v2428 = vand.u32 %v372, 4294901760
      %v2429 = vsub.f32 %v372, %v2428
      %2430 = vmatpush1.msra.mxu0 %v2429
      %2431 = vmatprep.subr.mxu0 0.0
      %v2432 = vand.u32 %v373, 4294901760
      %v2433 = vsub.f32 %v373, %v2432
      %2434 = vmatpush1.msra.mxu0 %v2433
      %2435 = vmatprep.subr.mxu0 0.0
      %2436 = vmatpush1.msra.mxu0 0.0
      %2437 = vmatprep.subr.mxu0 0.0
      %2438 = vmatpush1.msra.mxu0 0.0
      %2439 = vmatprep.subr.mxu0 0.0
      %2440 = vmatpush1.msra.mxu0 0.0
      %2441 = vmatprep.subr.mxu0 0.0
      %2442 = vmatpush1.msra.mxu0 0.0
      %2443 = vmatprep.subr.mxu0 0.0
      %2444 = vmatpush1.msra.mxu0 0.0
      %2445 = vmatprep.subr.mxu0 0.0
      %2446 = vmatpush1.msra.mxu0 0.0
      %2447 = vmatprep.subr.mxu0 0.0
      %2448 = vmatpush1.msra.mxu0 0.0
      %2449 = vmatprep.subr.mxu0 0.0
      %2450 = vmatpush1.msra.mxu0 0.0
      %2451 = vmatprep.subr.mxu0 0.0
      %2452 = vmatpush1.msra.mxu0 0.0
      %2453 = vmatprep.subr.mxu0 0.0
      %2454 = vmatpush1.msra.mxu0 0.0
      %2455 = vmatprep.subr.mxu0 0.0
      %2456 = vmatpush1.msra.mxu0 0.0
      %2457 = vmatprep.subr.mxu0 0.0
      %2458 = vmatpush1.msra.mxu0 0.0
      %2459 = vmatprep.subr.mxu0 0.0
      %2460 = vmatpush1.msra.mxu0 0.0
      %2461 = vmatprep.subr.mxu0 0.0
      %2462 = vmatpush1.msra.mxu0 0.0
      %2463 = vmatprep.subr.mxu0 0.0
      %2464 = vmatpush1.msra.mxu0 0.0
      %2465 = vmatprep.subr.mxu0 0.0
      %2466 = vmatpush1.msra.mxu0 0.0
      %2467 = vmatprep.subr.mxu0 0.0
      %2468 = vmatpush1.msra.mxu0 0.0
      %2469 = vmatprep.subr.mxu0 0.0
      %2470 = vmatpush1.msra.mxu0 0.0
      %2471 = vmatprep.subr.mxu0 0.0
      %2472 = vmatpush1.msra.mxu0 0.0
      %2473 = vmatprep.subr.mxu0 0.0
      %2474 = vmatpush1.msra.mxu0 0.0
      %2475 = vmatprep.mubr.f32.mxu0 0.0
      %v2476 = vand.u32 %v2129, 4294901760
      %v2477 = vsub.f32 %v2129, %v2476
      %2478 = vmatmul.mubr.f32.gmra.mrb[0].mxu0 %v2477
      %v2479 = vpop.f32.mrb[0].mxu0
      %v2480 = vadd.f32 %v2372, %v2479
      %v2481 = vpop.f32.mrb[0].mxu0
      %2482 = vmatprep.mubr.f32.mxu0 0.0
      %v2483 = vand.u32 %v2132, 4294901760
      %v2484 = vsub.f32 %v2132, %v2483
      %2485 = vmatmul.mubr.f32.gmra.mrb[0].mxu0 %v2484
      %v2486 = vpop.f32.mrb[0].mxu0
      %v2487 = vadd.f32 %v2378, %v2486
      %v2488 = vpop.f32.mrb[0].mxu0
      %2489 = vmatprep.mubr.f32.mxu0 0.0
      %v2490 = vand.u32 %v2135, 4294901760
      %v2491 = vsub.f32 %v2135, %v2490
      %2492 = vmatmul.mubr.f32.gmra.mrb[0].mxu0 %v2491
      %v2493 = vpop.f32.mrb[0].mxu0
      %v2494 = vadd.f32 %v2384, %v2493
      %v2495 = vpop.f32.mrb[0].mxu0
      %2496 = vdwg.mxu0
      %2497 = vmatprep.subr.mxu0 0.0
      %v2498 = vand.u32 %v362, 4294901760
      %2499 = vmatpush1.msra.mxu0 %v2498
      %2500 = vmatprep.subr.mxu0 0.0
      %v2501 = vand.u32 %v363, 4294901760
      %2502 = vmatpush1.msra.mxu0 %v2501
      %2503 = vmatprep.subr.mxu0 0.0
      %v2504 = vand.u32 %v364, 4294901760
      %2505 = vmatpush1.msra.mxu0 %v2504
      %2506 = vmatprep.subr.mxu0 0.0
      %v2507 = vand.u32 %v365, 4294901760
      %2508 = vmatpush1.msra.mxu0 %v2507
      %2509 = vmatprep.subr.mxu0 0.0
      %v2510 = vand.u32 %v366, 4294901760
      %2511 = vmatpush1.msra.mxu0 %v2510
      %2512 = vmatprep.subr.mxu0 0.0
      %v2513 = vand.u32 %v367, 4294901760
      %2514 = vmatpush1.msra.mxu0 %v2513
      %2515 = vmatprep.subr.mxu0 0.0
      %v2516 = vand.u32 %v368, 4294901760
      %2517 = vmatpush1.msra.mxu0 %v2516
      %2518 = vmatprep.subr.mxu0 0.0
      %v2519 = vand.u32 %v369, 4294901760
      %2520 = vmatpush1.msra.mxu0 %v2519
      %2521 = vmatprep.subr.mxu0 0.0
      %v2522 = vand.u32 %v370, 4294901760
      %2523 = vmatpush1.msra.mxu0 %v2522
      %2524 = vmatprep.subr.mxu0 0.0
      %v2525 = vand.u32 %v371, 4294901760
      %2526 = vmatpush1.msra.mxu0 %v2525
      %2527 = vmatprep.subr.mxu0 0.0
      %v2528 = vand.u32 %v372, 4294901760
      %2529 = vmatpush1.msra.mxu0 %v2528
      %2530 = vmatprep.subr.mxu0 0.0
      %v2531 = vand.u32 %v373, 4294901760
      %2532 = vmatpush1.msra.mxu0 %v2531
      %2533 = vmatprep.subr.mxu0 0.0
      %2534 = vmatpush1.msra.mxu0 0.0
      %2535 = vmatprep.subr.mxu0 0.0
      %2536 = vmatpush1.msra.mxu0 0.0
      %2537 = vmatprep.subr.mxu0 0.0
      %2538 = vmatpush1.msra.mxu0 0.0
      %2539 = vmatprep.subr.mxu0 0.0
      %2540 = vmatpush1.msra.mxu0 0.0
      %2541 = vmatprep.subr.mxu0 0.0
      %2542 = vmatpush1.msra.mxu0 0.0
      %2543 = vmatprep.subr.mxu0 0.0
      %2544 = vmatpush1.msra.mxu0 0.0
      %2545 = vmatprep.subr.mxu0 0.0
      %2546 = vmatpush1.msra.mxu0 0.0
      %2547 = vmatprep.subr.mxu0 0.0
      %2548 = vmatpush1.msra.mxu0 0.0
      %2549 = vmatprep.subr.mxu0 0.0
      %2550 = vmatpush1.msra.mxu0 0.0
      %2551 = vmatprep.subr.mxu0 0.0
      %2552 = vmatpush1.msra.mxu0 0.0
      %2553 = vmatprep.subr.mxu0 0.0
      %2554 = vmatpush1.msra.mxu0 0.0
      %2555 = vmatprep.subr.mxu0 0.0
      %2556 = vmatpush1.msra.mxu0 0.0
      %2557 = vmatprep.subr.mxu0 0.0
      %2558 = vmatpush1.msra.mxu0 0.0
      %2559 = vmatprep.subr.mxu0 0.0
      %2560 = vmatpush1.msra.mxu0 0.0
      %2561 = vmatprep.subr.mxu0 0.0
      %2562 = vmatpush1.msra.mxu0 0.0
      %2563 = vmatprep.subr.mxu0 0.0
      %2564 = vmatpush1.msra.mxu0 0.0
      %2565 = vmatprep.subr.mxu0 0.0
      %2566 = vmatpush1.msra.mxu0 0.0
      %2567 = vmatprep.subr.mxu0 0.0
      %2568 = vmatpush1.msra.mxu0 0.0
      %2569 = vmatprep.subr.mxu0 0.0
      %2570 = vmatpush1.msra.mxu0 0.0
      %2571 = vmatprep.subr.mxu0 0.0
      %2572 = vmatpush1.msra.mxu0 0.0
      %2573 = vmatprep.mubr.f32.mxu0 0.0
      %v2574 = vand.u32 %v2129, 4294901760
      %v2575 = vsub.f32 %v2129, %v2574
      %v2576 = vand.u32 %v2575, 4294901760
      %2577 = vmatmul.mubr.f32.gmra.mrb[0].mxu0 %v2576
      %v2578 = vpop.f32.mrb[0].mxu0
      %v2579 = vadd.f32 %v2480, %v2578
      %v2580 = vpop.f32.mrb[0].mxu0
      %2581 = vmatprep.mubr.f32.mxu0 0.0
      %v2582 = vand.u32 %v2132, 4294901760
      %v2583 = vsub.f32 %v2132, %v2582
      %v2584 = vand.u32 %v2583, 4294901760
      %2585 = vmatmul.mubr.f32.gmra.mrb[0].mxu0 %v2584
      %v2586 = vpop.f32.mrb[0].mxu0
      %v2587 = vadd.f32 %v2487, %v2586
      %v2588 = vpop.f32.mrb[0].mxu0
      %2589 = vmatprep.mubr.f32.mxu0 0.0
      %v2590 = vand.u32 %v2135, 4294901760
      %v2591 = vsub.f32 %v2135, %v2590
      %v2592 = vand.u32 %v2591, 4294901760
      %2593 = vmatmul.mubr.f32.gmra.mrb[0].mxu0 %v2592
      %v2594 = vpop.f32.mrb[0].mxu0
      %v2595 = vadd.f32 %v2494, %v2594
      %v2596 = vpop.f32.mrb[0].mxu0
      %2597 = vdwg.mxu0
      %2598 = vmatprep.subr.mxu0 0.0
      %v2599 = vand.u32 %v362, 4294901760
      %v2600 = vsub.f32 %v362, %v2599
      %v2601 = vand.u32 %v2600, 4294901760
      %2602 = vmatpush1.msra.mxu0 %v2601
      %2603 = vmatprep.subr.mxu0 0.0
      %v2604 = vand.u32 %v363, 4294901760
      %v2605 = vsub.f32 %v363, %v2604
      %v2606 = vand.u32 %v2605, 4294901760
      %2607 = vmatpush1.msra.mxu0 %v2606
      %2608 = vmatprep.subr.mxu0 0.0
      %v2609 = vand.u32 %v364, 4294901760
      %v2610 = vsub.f32 %v364, %v2609
      %v2611 = vand.u32 %v2610, 4294901760
      %2612 = vmatpush1.msra.mxu0 %v2611
      %2613 = vmatprep.subr.mxu0 0.0
      %v2614 = vand.u32 %v365, 4294901760
      %v2615 = vsub.f32 %v365, %v2614
      %v2616 = vand.u32 %v2615, 4294901760
      %2617 = vmatpush1.msra.mxu0 %v2616
      %2618 = vmatprep.subr.mxu0 0.0
      %v2619 = vand.u32 %v366, 4294901760
      %v2620 = vsub.f32 %v366, %v2619
      %v2621 = vand.u32 %v2620, 4294901760
      %2622 = vmatpush1.msra.mxu0 %v2621
      %2623 = vmatprep.subr.mxu0 0.0
      %v2624 = vand.u32 %v367, 4294901760
      %v2625 = vsub.f32 %v367, %v2624
      %v2626 = vand.u32 %v2625, 4294901760
      %2627 = vmatpush1.msra.mxu0 %v2626
      %2628 = vmatprep.subr.mxu0 0.0
      %v2629 = vand.u32 %v368, 4294901760
      %v2630 = vsub.f32 %v368, %v2629
      %v2631 = vand.u32 %v2630, 4294901760
      %2632 = vmatpush1.msra.mxu0 %v2631
      %2633 = vmatprep.subr.mxu0 0.0
      %v2634 = vand.u32 %v369, 4294901760
      %v2635 = vsub.f32 %v369, %v2634
      %v2636 = vand.u32 %v2635, 4294901760
      %2637 = vmatpush1.msra.mxu0 %v2636
      %2638 = vmatprep.subr.mxu0 0.0
      %v2639 = vand.u32 %v370, 4294901760
      %v2640 = vsub.f32 %v370, %v2639
      %v2641 = vand.u32 %v2640, 4294901760
      %2642 = vmatpush1.msra.mxu0 %v2641
      %2643 = vmatprep.subr.mxu0 0.0
      %v2644 = vand.u32 %v371, 4294901760
      %v2645 = vsub.f32 %v371, %v2644
      %v2646 = vand.u32 %v2645, 4294901760
      %2647 = vmatpush1.msra.mxu0 %v2646
      %2648 = vmatprep.subr.mxu0 0.0
      %v2649 = vand.u32 %v372, 4294901760
      %v2650 = vsub.f32 %v372, %v2649
      %v2651 = vand.u32 %v2650, 4294901760
      %2652 = vmatpush1.msra.mxu0 %v2651
      %2653 = vmatprep.subr.mxu0 0.0
      %v2654 = vand.u32 %v373, 4294901760
      %v2655 = vsub.f32 %v373, %v2654
      %v2656 = vand.u32 %v2655, 4294901760
      %2657 = vmatpush1.msra.mxu0 %v2656
      %2658 = vmatprep.subr.mxu0 0.0
      %2659 = vmatpush1.msra.mxu0 0.0
      %2660 = vmatprep.subr.mxu0 0.0
      %2661 = vmatpush1.msra.mxu0 0.0
      %2662 = vmatprep.subr.mxu0 0.0
      %2663 = vmatpush1.msra.mxu0 0.0
      %2664 = vmatprep.subr.mxu0 0.0
      %2665 = vmatpush1.msra.mxu0 0.0
      %2666 = vmatprep.subr.mxu0 0.0
      %2667 = vmatpush1.msra.mxu0 0.0
      %2668 = vmatprep.subr.mxu0 0.0
      %2669 = vmatpush1.msra.mxu0 0.0
      %2670 = vmatprep.subr.mxu0 0.0
      %2671 = vmatpush1.msra.mxu0 0.0
      %2672 = vmatprep.subr.mxu0 0.0
      %2673 = vmatpush1.msra.mxu0 0.0
      %2674 = vmatprep.subr.mxu0 0.0
      %2675 = vmatpush1.msra.mxu0 0.0
      %2676 = vmatprep.subr.mxu0 0.0
      %2677 = vmatpush1.msra.mxu0 0.0
      %2678 = vmatprep.subr.mxu0 0.0
      %2679 = vmatpush1.msra.mxu0 0.0
      %2680 = vmatprep.subr.mxu0 0.0
      %2681 = vmatpush1.msra.mxu0 0.0
      %2682 = vmatprep.subr.mxu0 0.0
      %2683 = vmatpush1.msra.mxu0 0.0
      %2684 = vmatprep.subr.mxu0 0.0
      %2685 = vmatpush1.msra.mxu0 0.0
      %2686 = vmatprep.subr.mxu0 0.0
      %2687 = vmatpush1.msra.mxu0 0.0
      %2688 = vmatprep.subr.mxu0 0.0
      %2689 = vmatpush1.msra.mxu0 0.0
      %2690 = vmatprep.subr.mxu0 0.0
      %2691 = vmatpush1.msra.mxu0 0.0
      %2692 = vmatprep.subr.mxu0 0.0
      %2693 = vmatpush1.msra.mxu0 0.0
      %2694 = vmatprep.subr.mxu0 0.0
      %2695 = vmatpush1.msra.mxu0 0.0
      %2696 = vmatprep.subr.mxu0 0.0
      %2697 = vmatpush1.msra.mxu0 0.0
      %2698 = vmatprep.mubr.f32.mxu0 0.0
      %v2699 = vand.u32 %v2129, 4294901760
      %2700 = vmatmul.mubr.f32.gmra.mrb[0].mxu0 %v2699
      %v2701 = vpop.f32.mrb[0].mxu0
      %v2702 = vadd.f32 %v2579, %v2701
      %v2703 = vpop.f32.mrb[0].mxu0
      %2704 = vmatprep.mubr.f32.mxu0 0.0
      %v2705 = vand.u32 %v2132, 4294901760
      %2706 = vmatmul.mubr.f32.gmra.mrb[0].mxu0 %v2705
      %v2707 = vpop.f32.mrb[0].mxu0
      %v2708 = vadd.f32 %v2587, %v2707
      %v2709 = vpop.f32.mrb[0].mxu0
      %2710 = vmatprep.mubr.f32.mxu0 0.0
      %v2711 = vand.u32 %v2135, 4294901760
      %2712 = vmatmul.mubr.f32.gmra.mrb[0].mxu0 %v2711
      %v2713 = vpop.f32.mrb[0].mxu0
      %v2714 = vadd.f32 %v2595, %v2713
      %v2715 = vpop.f32.mrb[0].mxu0
      %2716 = vdwg.mxu0
      %2717 = vmatprep.subr.mxu0 0.0
      %v2718 = vand.u32 %v362, 4294901760
      %2719 = vmatpush1.msra.mxu0 %v2718
      %2720 = vmatprep.subr.mxu0 0.0
      %v2721 = vand.u32 %v363, 4294901760
      %2722 = vmatpush1.msra.mxu0 %v2721
      %2723 = vmatprep.subr.mxu0 0.0
      %v2724 = vand.u32 %v364, 4294901760
      %2725 = vmatpush1.msra.mxu0 %v2724
      %2726 = vmatprep.subr.mxu0 0.0
      %v2727 = vand.u32 %v365, 4294901760
      %2728 = vmatpush1.msra.mxu0 %v2727
      %2729 = vmatprep.subr.mxu0 0.0
      %v2730 = vand.u32 %v366, 4294901760
      %2731 = vmatpush1.msra.mxu0 %v2730
      %2732 = vmatprep.subr.mxu0 0.0
      %v2733 = vand.u32 %v367, 4294901760
      %2734 = vmatpush1.msra.mxu0 %v2733
      %2735 = vmatprep.subr.mxu0 0.0
      %v2736 = vand.u32 %v368, 4294901760
      %2737 = vmatpush1.msra.mxu0 %v2736
      %2738 = vmatprep.subr.mxu0 0.0
      %v2739 = vand.u32 %v369, 4294901760
      %2740 = vmatpush1.msra.mxu0 %v2739
      %2741 = vmatprep.subr.mxu0 0.0
      %v2742 = vand.u32 %v370, 4294901760
      %2743 = vmatpush1.msra.mxu0 %v2742
      %2744 = vmatprep.subr.mxu0 0.0
      %v2745 = vand.u32 %v371, 4294901760
      %2746 = vmatpush1.msra.mxu0 %v2745
      %2747 = vmatprep.subr.mxu0 0.0
      %v2748 = vand.u32 %v372, 4294901760
      %2749 = vmatpush1.msra.mxu0 %v2748
      %2750 = vmatprep.subr.mxu0 0.0
      %v2751 = vand.u32 %v373, 4294901760
      %2752 = vmatpush1.msra.mxu0 %v2751
      %2753 = vmatprep.subr.mxu0 0.0
      %2754 = vmatpush1.msra.mxu0 0.0
      %2755 = vmatprep.subr.mxu0 0.0
      %2756 = vmatpush1.msra.mxu0 0.0
      %2757 = vmatprep.subr.mxu0 0.0
      %2758 = vmatpush1.msra.mxu0 0.0
      %2759 = vmatprep.subr.mxu0 0.0
      %2760 = vmatpush1.msra.mxu0 0.0
      %2761 = vmatprep.subr.mxu0 0.0
      %2762 = vmatpush1.msra.mxu0 0.0
      %2763 = vmatprep.subr.mxu0 0.0
      %2764 = vmatpush1.msra.mxu0 0.0
      %2765 = vmatprep.subr.mxu0 0.0
      %2766 = vmatpush1.msra.mxu0 0.0
      %2767 = vmatprep.subr.mxu0 0.0
      %2768 = vmatpush1.msra.mxu0 0.0
      %2769 = vmatprep.subr.mxu0 0.0
      %2770 = vmatpush1.msra.mxu0 0.0
      %2771 = vmatprep.subr.mxu0 0.0
      %2772 = vmatpush1.msra.mxu0 0.0
      %2773 = vmatprep.subr.mxu0 0.0
      %2774 = vmatpush1.msra.mxu0 0.0
      %2775 = vmatprep.subr.mxu0 0.0
      %2776 = vmatpush1.msra.mxu0 0.0
      %2777 = vmatprep.subr.mxu0 0.0
      %2778 = vmatpush1.msra.mxu0 0.0
      %2779 = vmatprep.subr.mxu0 0.0
      %2780 = vmatpush1.msra.mxu0 0.0
      %2781 = vmatprep.subr.mxu0 0.0
      %2782 = vmatpush1.msra.mxu0 0.0
      %2783 = vmatprep.subr.mxu0 0.0
      %2784 = vmatpush1.msra.mxu0 0.0
      %2785 = vmatprep.subr.mxu0 0.0
      %2786 = vmatpush1.msra.mxu0 0.0
      %2787 = vmatprep.subr.mxu0 0.0
      %2788 = vmatpush1.msra.mxu0 0.0
      %2789 = vmatprep.subr.mxu0 0.0
      %2790 = vmatpush1.msra.mxu0 0.0
      %2791 = vmatprep.subr.mxu0 0.0
      %2792 = vmatpush1.msra.mxu0 0.0
      %2793 = vmatprep.mubr.f32.mxu0 0.0
      %v2794 = vand.u32 %v2129, 4294901760
      %2795 = vmatmul.mubr.f32.gmra.mrb[0].mxu0 %v2794
      %v2796 = vpop.f32.mrb[0].mxu0
      %v2797 = vadd.f32 %v2702, %v2796
      %v2798 = vpop.f32.mrb[0].mxu0
      %2799 = vmatprep.mubr.f32.mxu0 0.0
      %v2800 = vand.u32 %v2132, 4294901760
      %2801 = vmatmul.mubr.f32.gmra.mrb[0].mxu0 %v2800
      %v2802 = vpop.f32.mrb[0].mxu0
      %v2803 = vadd.f32 %v2708, %v2802
      %v2804 = vpop.f32.mrb[0].mxu0
      %2805 = vmatprep.mubr.f32.mxu0 0.0
      %v2806 = vand.u32 %v2135, 4294901760
      %2807 = vmatmul.mubr.f32.gmra.mrb[0].mxu0 %v2806
      %v2808 = vpop.f32.mrb[0].mxu0
      %v2809 = vadd.f32 %v2714, %v2808
      %v2810 = vpop.f32.mrb[0].mxu0
      %2811 = vdwg.mxu0
      %2812 = vst.msk [vmem:[%s337] sm:$0xff] %vm1335, %v2797
      %2813 = vst.msk [vmem:[%s337 + $0x8] sm:$0xff] %vm1335, %v2803
      %vm2814 = vcmask 61440
      %2815 = vst.msk [vmem:[%s337 + $0x10] sm:$0x1f] %vm2814, %v2809
      %v2817 = vsel %vm374, %v360, 0
      %v2820 = vsel %vm374, %v361, 0
      %2822 = vmatprep.subr.mxu0 0.0
      %v2823 = vand.u32 %v362, 4294901760
      %2824 = vmatpush1.msra.mxu0 %v2823
      %2825 = vmatprep.subr.mxu0 0.0
      %v2826 = vand.u32 %v363, 4294901760
      %2827 = vmatpush1.msra.mxu0 %v2826
      %2828 = vmatprep.subr.mxu0 0.0
      %v2829 = vand.u32 %v364, 4294901760
      %2830 = vmatpush1.msra.mxu0 %v2829
      %2831 = vmatprep.subr.mxu0 0.0
      %v2832 = vand.u32 %v365, 4294901760
      %2833 = vmatpush1.msra.mxu0 %v2832
      %2834 = vmatprep.subr.mxu0 0.0
      %v2835 = vand.u32 %v366, 4294901760
      %2836 = vmatpush1.msra.mxu0 %v2835
      %2837 = vmatprep.subr.mxu0 0.0
      %v2838 = vand.u32 %v367, 4294901760
      %2839 = vmatpush1.msra.mxu0 %v2838
      %2840 = vmatprep.subr.mxu0 0.0
      %v2841 = vand.u32 %v368, 4294901760
      %2842 = vmatpush1.msra.mxu0 %v2841
      %2843 = vmatprep.subr.mxu0 0.0
      %v2844 = vand.u32 %v369, 4294901760
      %2845 = vmatpush1.msra.mxu0 %v2844
      %2846 = vmatprep.subr.mxu0 0.0
      %v2847 = vand.u32 %v370, 4294901760
      %2848 = vmatpush1.msra.mxu0 %v2847
      %2849 = vmatprep.subr.mxu0 0.0
      %v2850 = vand.u32 %v371, 4294901760
      %2851 = vmatpush1.msra.mxu0 %v2850
      %2852 = vmatprep.subr.mxu0 0.0
      %v2853 = vand.u32 %v372, 4294901760
      %2854 = vmatpush1.msra.mxu0 %v2853
      %2855 = vmatprep.subr.mxu0 0.0
      %v2856 = vand.u32 %v373, 4294901760
      %2857 = vmatpush1.msra.mxu0 %v2856
      %2858 = vmatprep.subr.mxu0 0.0
      %2859 = vmatpush1.msra.mxu0 0.0
      %2860 = vmatprep.subr.mxu0 0.0
      %2861 = vmatpush1.msra.mxu0 0.0
      %2862 = vmatprep.subr.mxu0 0.0
      %2863 = vmatpush1.msra.mxu0 0.0
      %2864 = vmatprep.subr.mxu0 0.0
      %2865 = vmatpush1.msra.mxu0 0.0
      %2866 = vmatprep.subr.mxu0 0.0
      %2867 = vmatpush1.msra.mxu0 0.0
      %2868 = vmatprep.subr.mxu0 0.0
      %2869 = vmatpush1.msra.mxu0 0.0
      %2870 = vmatprep.subr.mxu0 0.0
      %2871 = vmatpush1.msra.mxu0 0.0
      %2872 = vmatprep.subr.mxu0 0.0
      %2873 = vmatpush1.msra.mxu0 0.0
      %2874 = vmatprep.subr.mxu0 0.0
      %2875 = vmatpush1.msra.mxu0 0.0
      %2876 = vmatprep.subr.mxu0 0.0
      %2877 = vmatpush1.msra.mxu0 0.0
      %2878 = vmatprep.subr.mxu0 0.0
      %2879 = vmatpush1.msra.mxu0 0.0
      %2880 = vmatprep.subr.mxu0 0.0
      %2881 = vmatpush1.msra.mxu0 0.0
      %2882 = vmatprep.subr.mxu0 0.0
      %2883 = vmatpush1.msra.mxu0 0.0
      %2884 = vmatprep.subr.mxu0 0.0
      %2885 = vmatpush1.msra.mxu0 0.0
      %2886 = vmatprep.subr.mxu0 0.0
      %2887 = vmatpush1.msra.mxu0 0.0
      %2888 = vmatprep.subr.mxu0 0.0
      %2889 = vmatpush1.msra.mxu0 0.0
      %2890 = vmatprep.subr.mxu0 0.0
      %2891 = vmatpush1.msra.mxu0 0.0
      %2892 = vmatprep.subr.mxu0 0.0
      %2893 = vmatpush1.msra.mxu0 0.0
      %2894 = vmatprep.subr.mxu0 0.0
      %2895 = vmatpush1.msra.mxu0 0.0
      %2896 = vmatprep.subr.mxu0 0.0
      %2897 = vmatpush1.msra.mxu0 0.0
      %2898 = vmatprep.mubr.f32.mxu0 0.0
      %v2899 = vand.u32 %v2817, 4294901760
      %v2900 = vsub.f32 %v2817, %v2899
      %v2901 = vand.u32 %v2900, 4294901760
      %v2902 = vsub.f32 %v2900, %v2901
      %v2903 = vand.u32 %v2902, 4294901760
      %2904 = vmatmul.mubr.f32.gmra.mrb[0].mxu0 %v2903
      %v2905 = vpop.f32.mrb[0].mxu0
      %v2906 = vadd.f32 0.0, %v2905
      %v2907 = vpop.f32.mrb[0].mxu0
      %2908 = vmatprep.mubr.f32.mxu0 0.0
      %v2909 = vand.u32 %v2820, 4294901760
      %v2910 = vsub.f32 %v2820, %v2909
      %v2911 = vand.u32 %v2910, 4294901760
      %v2912 = vsub.f32 %v2910, %v2911
      %v2913 = vand.u32 %v2912, 4294901760
      %2914 = vmatmul.mubr.f32.gmra.mrb[0].mxu0 %v2913
      %v2915 = vpop.f32.mrb[0].mxu0
      %v2916 = vadd.f32 0.0, %v2915
      %v2917 = vpop.f32.mrb[0].mxu0
      %2918 = vdwg.mxu0
      %2919 = vmatprep.subr.mxu0 0.0
      %v2920 = vand.u32 %v362, 4294901760
      %v2921 = vsub.f32 %v362, %v2920
      %v2922 = vand.u32 %v2921, 4294901760
      %v2923 = vsub.f32 %v2921, %v2922
      %v2924 = vand.u32 %v2923, 4294901760
      %2925 = vmatpush1.msra.mxu0 %v2924
      %2926 = vmatprep.subr.mxu0 0.0
      %v2927 = vand.u32 %v363, 4294901760
      %v2928 = vsub.f32 %v363, %v2927
      %v2929 = vand.u32 %v2928, 4294901760
      %v2930 = vsub.f32 %v2928, %v2929
      %v2931 = vand.u32 %v2930, 4294901760
      %2932 = vmatpush1.msra.mxu0 %v2931
      %2933 = vmatprep.subr.mxu0 0.0
      %v2934 = vand.u32 %v364, 4294901760
      %v2935 = vsub.f32 %v364, %v2934
      %v2936 = vand.u32 %v2935, 4294901760
      %v2937 = vsub.f32 %v2935, %v2936
      %v2938 = vand.u32 %v2937, 4294901760
      %2939 = vmatpush1.msra.mxu0 %v2938
      %2940 = vmatprep.subr.mxu0 0.0
      %v2941 = vand.u32 %v365, 4294901760
      %v2942 = vsub.f32 %v365, %v2941
      %v2943 = vand.u32 %v2942, 4294901760
      %v2944 = vsub.f32 %v2942, %v2943
      %v2945 = vand.u32 %v2944, 4294901760
      %2946 = vmatpush1.msra.mxu0 %v2945
      %2947 = vmatprep.subr.mxu0 0.0
      %v2948 = vand.u32 %v366, 4294901760
      %v2949 = vsub.f32 %v366, %v2948
      %v2950 = vand.u32 %v2949, 4294901760
      %v2951 = vsub.f32 %v2949, %v2950
      %v2952 = vand.u32 %v2951, 4294901760
      %2953 = vmatpush1.msra.mxu0 %v2952
      %2954 = vmatprep.subr.mxu0 0.0
      %v2955 = vand.u32 %v367, 4294901760
      %v2956 = vsub.f32 %v367, %v2955
      %v2957 = vand.u32 %v2956, 4294901760
      %v2958 = vsub.f32 %v2956, %v2957
      %v2959 = vand.u32 %v2958, 4294901760
      %2960 = vmatpush1.msra.mxu0 %v2959
      %2961 = vmatprep.subr.mxu0 0.0
      %v2962 = vand.u32 %v368, 4294901760
      %v2963 = vsub.f32 %v368, %v2962
      %v2964 = vand.u32 %v2963, 4294901760
      %v2965 = vsub.f32 %v2963, %v2964
      %v2966 = vand.u32 %v2965, 4294901760
      %2967 = vmatpush1.msra.mxu0 %v2966
      %2968 = vmatprep.subr.mxu0 0.0
      %v2969 = vand.u32 %v369, 4294901760
      %v2970 = vsub.f32 %v369, %v2969
      %v2971 = vand.u32 %v2970, 4294901760
      %v2972 = vsub.f32 %v2970, %v2971
      %v2973 = vand.u32 %v2972, 4294901760
      %2974 = vmatpush1.msra.mxu0 %v2973
      %2975 = vmatprep.subr.mxu0 0.0
      %v2976 = vand.u32 %v370, 4294901760
      %v2977 = vsub.f32 %v370, %v2976
      %v2978 = vand.u32 %v2977, 4294901760
      %v2979 = vsub.f32 %v2977, %v2978
      %v2980 = vand.u32 %v2979, 4294901760
      %2981 = vmatpush1.msra.mxu0 %v2980
      %2982 = vmatprep.subr.mxu0 0.0
      %v2983 = vand.u32 %v371, 4294901760
      %v2984 = vsub.f32 %v371, %v2983
      %v2985 = vand.u32 %v2984, 4294901760
      %v2986 = vsub.f32 %v2984, %v2985
      %v2987 = vand.u32 %v2986, 4294901760
      %2988 = vmatpush1.msra.mxu0 %v2987
      %2989 = vmatprep.subr.mxu0 0.0
      %v2990 = vand.u32 %v372, 4294901760
      %v2991 = vsub.f32 %v372, %v2990
      %v2992 = vand.u32 %v2991, 4294901760
      %v2993 = vsub.f32 %v2991, %v2992
      %v2994 = vand.u32 %v2993, 4294901760
      %2995 = vmatpush1.msra.mxu0 %v2994
      %2996 = vmatprep.subr.mxu0 0.0
      %v2997 = vand.u32 %v373, 4294901760
      %v2998 = vsub.f32 %v373, %v2997
      %v2999 = vand.u32 %v2998, 4294901760
      %v3000 = vsub.f32 %v2998, %v2999
      %v3001 = vand.u32 %v3000, 4294901760
      %3002 = vmatpush1.msra.mxu0 %v3001
      %3003 = vmatprep.subr.mxu0 0.0
      %3004 = vmatpush1.msra.mxu0 0.0
      %3005 = vmatprep.subr.mxu0 0.0
      %3006 = vmatpush1.msra.mxu0 0.0
      %3007 = vmatprep.subr.mxu0 0.0
      %3008 = vmatpush1.msra.mxu0 0.0
      %3009 = vmatprep.subr.mxu0 0.0
      %3010 = vmatpush1.msra.mxu0 0.0
      %3011 = vmatprep.subr.mxu0 0.0
      %3012 = vmatpush1.msra.mxu0 0.0
      %3013 = vmatprep.subr.mxu0 0.0
      %3014 = vmatpush1.msra.mxu0 0.0
      %3015 = vmatprep.subr.mxu0 0.0
      %3016 = vmatpush1.msra.mxu0 0.0
      %3017 = vmatprep.subr.mxu0 0.0
      %3018 = vmatpush1.msra.mxu0 0.0
      %3019 = vmatprep.subr.mxu0 0.0
      %3020 = vmatpush1.msra.mxu0 0.0
      %3021 = vmatprep.subr.mxu0 0.0
      %3022 = vmatpush1.msra.mxu0 0.0
      %3023 = vmatprep.subr.mxu0 0.0
      %3024 = vmatpush1.msra.mxu0 0.0
      %3025 = vmatprep.subr.mxu0 0.0
      %3026 = vmatpush1.msra.mxu0 0.0
      %3027 = vmatprep.subr.mxu0 0.0
      %3028 = vmatpush1.msra.mxu0 0.0
      %3029 = vmatprep.subr.mxu0 0.0
      %3030 = vmatpush1.msra.mxu0 0.0
      %3031 = vmatprep.subr.mxu0 0.0
      %3032 = vmatpush1.msra.mxu0 0.0
      %3033 = vmatprep.subr.mxu0 0.0
      %3034 = vmatpush1.msra.mxu0 0.0
      %3035 = vmatprep.subr.mxu0 0.0
      %3036 = vmatpush1.msra.mxu0 0.0
      %3037 = vmatprep.subr.mxu0 0.0
      %3038 = vmatpush1.msra.mxu0 0.0
      %3039 = vmatprep.subr.mxu0 0.0
      %3040 = vmatpush1.msra.mxu0 0.0
      %3041 = vmatprep.subr.mxu0 0.0
      %3042 = vmatpush1.msra.mxu0 0.0
      %3043 = vmatprep.mubr.f32.mxu0 0.0
      %v3044 = vand.u32 %v2817, 4294901760
      %3045 = vmatmul.mubr.f32.gmra.mrb[0].mxu0 %v3044
      %v3046 = vpop.f32.mrb[0].mxu0
      %v3047 = vadd.f32 %v2906, %v3046
      %v3048 = vpop.f32.mrb[0].mxu0
      %3049 = vmatprep.mubr.f32.mxu0 0.0
      %v3050 = vand.u32 %v2820, 4294901760
      %3051 = vmatmul.mubr.f32.gmra.mrb[0].mxu0 %v3050
      %v3052 = vpop.f32.mrb[0].mxu0
      %v3053 = vadd.f32 %v2916, %v3052
      %v3054 = vpop.f32.mrb[0].mxu0
      %3055 = vdwg.mxu0
      %3056 = vmatprep.subr.mxu0 0.0
      %v3057 = vand.u32 %v362, 4294901760
      %v3058 = vsub.f32 %v362, %v3057
      %3059 = vmatpush1.msra.mxu0 %v3058
      %3060 = vmatprep.subr.mxu0 0.0
      %v3061 = vand.u32 %v363, 4294901760
      %v3062 = vsub.f32 %v363, %v3061
      %3063 = vmatpush1.msra.mxu0 %v3062
      %3064 = vmatprep.subr.mxu0 0.0
      %v3065 = vand.u32 %v364, 4294901760
      %v3066 = vsub.f32 %v364, %v3065
      %3067 = vmatpush1.msra.mxu0 %v3066
      %3068 = vmatprep.subr.mxu0 0.0
      %v3069 = vand.u32 %v365, 4294901760
      %v3070 = vsub.f32 %v365, %v3069
      %3071 = vmatpush1.msra.mxu0 %v3070
      %3072 = vmatprep.subr.mxu0 0.0
      %v3073 = vand.u32 %v366, 4294901760
      %v3074 = vsub.f32 %v366, %v3073
      %3075 = vmatpush1.msra.mxu0 %v3074
      %3076 = vmatprep.subr.mxu0 0.0
      %v3077 = vand.u32 %v367, 4294901760
      %v3078 = vsub.f32 %v367, %v3077
      %3079 = vmatpush1.msra.mxu0 %v3078
      %3080 = vmatprep.subr.mxu0 0.0
      %v3081 = vand.u32 %v368, 4294901760
      %v3082 = vsub.f32 %v368, %v3081
      %3083 = vmatpush1.msra.mxu0 %v3082
      %3084 = vmatprep.subr.mxu0 0.0
      %v3085 = vand.u32 %v369, 4294901760
      %v3086 = vsub.f32 %v369, %v3085
      %3087 = vmatpush1.msra.mxu0 %v3086
      %3088 = vmatprep.subr.mxu0 0.0
      %v3089 = vand.u32 %v370, 4294901760
      %v3090 = vsub.f32 %v370, %v3089
      %3091 = vmatpush1.msra.mxu0 %v3090
      %3092 = vmatprep.subr.mxu0 0.0
      %v3093 = vand.u32 %v371, 4294901760
      %v3094 = vsub.f32 %v371, %v3093
      %3095 = vmatpush1.msra.mxu0 %v3094
      %3096 = vmatprep.subr.mxu0 0.0
      %v3097 = vand.u32 %v372, 4294901760
      %v3098 = vsub.f32 %v372, %v3097
      %3099 = vmatpush1.msra.mxu0 %v3098
      %3100 = vmatprep.subr.mxu0 0.0
      %v3101 = vand.u32 %v373, 4294901760
      %v3102 = vsub.f32 %v373, %v3101
      %3103 = vmatpush1.msra.mxu0 %v3102
      %3104 = vmatprep.subr.mxu0 0.0
      %3105 = vmatpush1.msra.mxu0 0.0
      %3106 = vmatprep.subr.mxu0 0.0
      %3107 = vmatpush1.msra.mxu0 0.0
      %3108 = vmatprep.subr.mxu0 0.0
      %3109 = vmatpush1.msra.mxu0 0.0
      %3110 = vmatprep.subr.mxu0 0.0
      %3111 = vmatpush1.msra.mxu0 0.0
      %3112 = vmatprep.subr.mxu0 0.0
      %3113 = vmatpush1.msra.mxu0 0.0
      %3114 = vmatprep.subr.mxu0 0.0
      %3115 = vmatpush1.msra.mxu0 0.0
      %3116 = vmatprep.subr.mxu0 0.0
      %3117 = vmatpush1.msra.mxu0 0.0
      %3118 = vmatprep.subr.mxu0 0.0
      %3119 = vmatpush1.msra.mxu0 0.0
      %3120 = vmatprep.subr.mxu0 0.0
      %3121 = vmatpush1.msra.mxu0 0.0
      %3122 = vmatprep.subr.mxu0 0.0
      %3123 = vmatpush1.msra.mxu0 0.0
      %3124 = vmatprep.subr.mxu0 0.0
      %3125 = vmatpush1.msra.mxu0 0.0
      %3126 = vmatprep.subr.mxu0 0.0
      %3127 = vmatpush1.msra.mxu0 0.0
      %3128 = vmatprep.subr.mxu0 0.0
      %3129 = vmatpush1.msra.mxu0 0.0
      %3130 = vmatprep.subr.mxu0 0.0
      %3131 = vmatpush1.msra.mxu0 0.0
      %3132 = vmatprep.subr.mxu0 0.0
      %3133 = vmatpush1.msra.mxu0 0.0
      %3134 = vmatprep.subr.mxu0 0.0
      %3135 = vmatpush1.msra.mxu0 0.0
      %3136 = vmatprep.subr.mxu0 0.0
      %3137 = vmatpush1.msra.mxu0 0.0
      %3138 = vmatprep.subr.mxu0 0.0
      %3139 = vmatpush1.msra.mxu0 0.0
      %3140 = vmatprep.subr.mxu0 0.0
      %3141 = vmatpush1.msra.mxu0 0.0
      %3142 = vmatprep.subr.mxu0 0.0
      %3143 = vmatpush1.msra.mxu0 0.0
      %3144 = vmatprep.mubr.f32.mxu0 0.0
      %v3145 = vand.u32 %v2817, 4294901760
      %v3146 = vsub.f32 %v2817, %v3145
      %3147 = vmatmul.mubr.f32.gmra.mrb[0].mxu0 %v3146
      %v3148 = vpop.f32.mrb[0].mxu0
      %v3149 = vadd.f32 %v3047, %v3148
      %v3150 = vpop.f32.mrb[0].mxu0
      %3151 = vmatprep.mubr.f32.mxu0 0.0
      %v3152 = vand.u32 %v2820, 4294901760
      %v3153 = vsub.f32 %v2820, %v3152
      %3154 = vmatmul.mubr.f32.gmra.mrb[0].mxu0 %v3153
      %v3155 = vpop.f32.mrb[0].mxu0
      %v3156 = vadd.f32 %v3053, %v3155
      %v3157 = vpop.f32.mrb[0].mxu0
      %3158 = vdwg.mxu0
      %3159 = vmatprep.subr.mxu0 0.0
      %v3160 = vand.u32 %v362, 4294901760
      %3161 = vmatpush1.msra.mxu0 %v3160
      %3162 = vmatprep.subr.mxu0 0.0
      %v3163 = vand.u32 %v363, 4294901760
      %3164 = vmatpush1.msra.mxu0 %v3163
      %3165 = vmatprep.subr.mxu0 0.0
      %v3166 = vand.u32 %v364, 4294901760
      %3167 = vmatpush1.msra.mxu0 %v3166
      %3168 = vmatprep.subr.mxu0 0.0
      %v3169 = vand.u32 %v365, 4294901760
      %3170 = vmatpush1.msra.mxu0 %v3169
      %3171 = vmatprep.subr.mxu0 0.0
      %v3172 = vand.u32 %v366, 4294901760
      %3173 = vmatpush1.msra.mxu0 %v3172
      %3174 = vmatprep.subr.mxu0 0.0
      %v3175 = vand.u32 %v367, 4294901760
      %3176 = vmatpush1.msra.mxu0 %v3175
      %3177 = vmatprep.subr.mxu0 0.0
      %v3178 = vand.u32 %v368, 4294901760
      %3179 = vmatpush1.msra.mxu0 %v3178
      %3180 = vmatprep.subr.mxu0 0.0
      %v3181 = vand.u32 %v369, 4294901760
      %3182 = vmatpush1.msra.mxu0 %v3181
      %3183 = vmatprep.subr.mxu0 0.0
      %v3184 = vand.u32 %v370, 4294901760
      %3185 = vmatpush1.msra.mxu0 %v3184
      %3186 = vmatprep.subr.mxu0 0.0
      %v3187 = vand.u32 %v371, 4294901760
      %3188 = vmatpush1.msra.mxu0 %v3187
      %3189 = vmatprep.subr.mxu0 0.0
      %v3190 = vand.u32 %v372, 4294901760
      %3191 = vmatpush1.msra.mxu0 %v3190
      %3192 = vmatprep.subr.mxu0 0.0
      %v3193 = vand.u32 %v373, 4294901760
      %3194 = vmatpush1.msra.mxu0 %v3193
      %3195 = vmatprep.subr.mxu0 0.0
      %3196 = vmatpush1.msra.mxu0 0.0
      %3197 = vmatprep.subr.mxu0 0.0
      %3198 = vmatpush1.msra.mxu0 0.0
      %3199 = vmatprep.subr.mxu0 0.0
      %3200 = vmatpush1.msra.mxu0 0.0
      %3201 = vmatprep.subr.mxu0 0.0
      %3202 = vmatpush1.msra.mxu0 0.0
      %3203 = vmatprep.subr.mxu0 0.0
      %3204 = vmatpush1.msra.mxu0 0.0
      %3205 = vmatprep.subr.mxu0 0.0
      %3206 = vmatpush1.msra.mxu0 0.0
      %3207 = vmatprep.subr.mxu0 0.0
      %3208 = vmatpush1.msra.mxu0 0.0
      %3209 = vmatprep.subr.mxu0 0.0
      %3210 = vmatpush1.msra.mxu0 0.0
      %3211 = vmatprep.subr.mxu0 0.0
      %3212 = vmatpush1.msra.mxu0 0.0
      %3213 = vmatprep.subr.mxu0 0.0
      %3214 = vmatpush1.msra.mxu0 0.0
      %3215 = vmatprep.subr.mxu0 0.0
      %3216 = vmatpush1.msra.mxu0 0.0
      %3217 = vmatprep.subr.mxu0 0.0
      %3218 = vmatpush1.msra.mxu0 0.0
      %3219 = vmatprep.subr.mxu0 0.0
      %3220 = vmatpush1.msra.mxu0 0.0
      %3221 = vmatprep.subr.mxu0 0.0
      %3222 = vmatpush1.msra.mxu0 0.0
      %3223 = vmatprep.subr.mxu0 0.0
      %3224 = vmatpush1.msra.mxu0 0.0
      %3225 = vmatprep.subr.mxu0 0.0
      %3226 = vmatpush1.msra.mxu0 0.0
      %3227 = vmatprep.subr.mxu0 0.0
      %3228 = vmatpush1.msra.mxu0 0.0
      %3229 = vmatprep.subr.mxu0 0.0
      %3230 = vmatpush1.msra.mxu0 0.0
      %3231 = vmatprep.subr.mxu0 0.0
      %3232 = vmatpush1.msra.mxu0 0.0
      %3233 = vmatprep.subr.mxu0 0.0
      %3234 = vmatpush1.msra.mxu0 0.0
      %3235 = vmatprep.mubr.f32.mxu0 0.0
      %v3236 = vand.u32 %v2817, 4294901760
      %v3237 = vsub.f32 %v2817, %v3236
      %v3238 = vand.u32 %v3237, 4294901760
      %3239 = vmatmul.mubr.f32.gmra.mrb[0].mxu0 %v3238
      %v3240 = vpop.f32.mrb[0].mxu0
      %v3241 = vadd.f32 %v3149, %v3240
      %v3242 = vpop.f32.mrb[0].mxu0
      %3243 = vmatprep.mubr.f32.mxu0 0.0
      %v3244 = vand.u32 %v2820, 4294901760
      %v3245 = vsub.f32 %v2820, %v3244
      %v3246 = vand.u32 %v3245, 4294901760
      %3247 = vmatmul.mubr.f32.gmra.mrb[0].mxu0 %v3246
      %v3248 = vpop.f32.mrb[0].mxu0
      %v3249 = vadd.f32 %v3156, %v3248
      %v3250 = vpop.f32.mrb[0].mxu0
      %3251 = vdwg.mxu0
      %3252 = vmatprep.subr.mxu0 0.0
      %v3253 = vand.u32 %v362, 4294901760
      %v3254 = vsub.f32 %v362, %v3253
      %v3255 = vand.u32 %v3254, 4294901760
      %3256 = vmatpush1.msra.mxu0 %v3255
      %3257 = vmatprep.subr.mxu0 0.0
      %v3258 = vand.u32 %v363, 4294901760
      %v3259 = vsub.f32 %v363, %v3258
      %v3260 = vand.u32 %v3259, 4294901760
      %3261 = vmatpush1.msra.mxu0 %v3260
      %3262 = vmatprep.subr.mxu0 0.0
      %v3263 = vand.u32 %v364, 4294901760
      %v3264 = vsub.f32 %v364, %v3263
      %v3265 = vand.u32 %v3264, 4294901760
      %3266 = vmatpush1.msra.mxu0 %v3265
      %3267 = vmatprep.subr.mxu0 0.0
      %v3268 = vand.u32 %v365, 4294901760
      %v3269 = vsub.f32 %v365, %v3268
      %v3270 = vand.u32 %v3269, 4294901760
      %3271 = vmatpush1.msra.mxu0 %v3270
      %3272 = vmatprep.subr.mxu0 0.0
      %v3273 = vand.u32 %v366, 4294901760
      %v3274 = vsub.f32 %v366, %v3273
      %v3275 = vand.u32 %v3274, 4294901760
      %3276 = vmatpush1.msra.mxu0 %v3275
      %3277 = vmatprep.subr.mxu0 0.0
      %v3278 = vand.u32 %v367, 4294901760
      %v3279 = vsub.f32 %v367, %v3278
      %v3280 = vand.u32 %v3279, 4294901760
      %3281 = vmatpush1.msra.mxu0 %v3280
      %3282 = vmatprep.subr.mxu0 0.0
      %v3283 = vand.u32 %v368, 4294901760
      %v3284 = vsub.f32 %v368, %v3283
      %v3285 = vand.u32 %v3284, 4294901760
      %3286 = vmatpush1.msra.mxu0 %v3285
      %3287 = vmatprep.subr.mxu0 0.0
      %v3288 = vand.u32 %v369, 4294901760
      %v3289 = vsub.f32 %v369, %v3288
      %v3290 = vand.u32 %v3289, 4294901760
      %3291 = vmatpush1.msra.mxu0 %v3290
      %3292 = vmatprep.subr.mxu0 0.0
      %v3293 = vand.u32 %v370, 4294901760
      %v3294 = vsub.f32 %v370, %v3293
      %v3295 = vand.u32 %v3294, 4294901760
      %3296 = vmatpush1.msra.mxu0 %v3295
      %3297 = vmatprep.subr.mxu0 0.0
      %v3298 = vand.u32 %v371, 4294901760
      %v3299 = vsub.f32 %v371, %v3298
      %v3300 = vand.u32 %v3299, 4294901760
      %3301 = vmatpush1.msra.mxu0 %v3300
      %3302 = vmatprep.subr.mxu0 0.0
      %v3303 = vand.u32 %v372, 4294901760
      %v3304 = vsub.f32 %v372, %v3303
      %v3305 = vand.u32 %v3304, 4294901760
      %3306 = vmatpush1.msra.mxu0 %v3305
      %3307 = vmatprep.subr.mxu0 0.0
      %v3308 = vand.u32 %v373, 4294901760
      %v3309 = vsub.f32 %v373, %v3308
      %v3310 = vand.u32 %v3309, 4294901760
      %3311 = vmatpush1.msra.mxu0 %v3310
      %3312 = vmatprep.subr.mxu0 0.0
      %3313 = vmatpush1.msra.mxu0 0.0
      %3314 = vmatprep.subr.mxu0 0.0
      %3315 = vmatpush1.msra.mxu0 0.0
      %3316 = vmatprep.subr.mxu0 0.0
      %3317 = vmatpush1.msra.mxu0 0.0
      %3318 = vmatprep.subr.mxu0 0.0
      %3319 = vmatpush1.msra.mxu0 0.0
      %3320 = vmatprep.subr.mxu0 0.0
      %3321 = vmatpush1.msra.mxu0 0.0
      %3322 = vmatprep.subr.mxu0 0.0
      %3323 = vmatpush1.msra.mxu0 0.0
      %3324 = vmatprep.subr.mxu0 0.0
      %3325 = vmatpush1.msra.mxu0 0.0
      %3326 = vmatprep.subr.mxu0 0.0
      %3327 = vmatpush1.msra.mxu0 0.0
      %3328 = vmatprep.subr.mxu0 0.0
      %3329 = vmatpush1.msra.mxu0 0.0
      %3330 = vmatprep.subr.mxu0 0.0
      %3331 = vmatpush1.msra.mxu0 0.0
      %3332 = vmatprep.subr.mxu0 0.0
      %3333 = vmatpush1.msra.mxu0 0.0
      %3334 = vmatprep.subr.mxu0 0.0
      %3335 = vmatpush1.msra.mxu0 0.0
      %3336 = vmatprep.subr.mxu0 0.0
      %3337 = vmatpush1.msra.mxu0 0.0
      %3338 = vmatprep.subr.mxu0 0.0
      %3339 = vmatpush1.msra.mxu0 0.0
      %3340 = vmatprep.subr.mxu0 0.0
      %3341 = vmatpush1.msra.mxu0 0.0
      %3342 = vmatprep.subr.mxu0 0.0
      %3343 = vmatpush1.msra.mxu0 0.0
      %3344 = vmatprep.subr.mxu0 0.0
      %3345 = vmatpush1.msra.mxu0 0.0
      %3346 = vmatprep.subr.mxu0 0.0
      %3347 = vmatpush1.msra.mxu0 0.0
      %3348 = vmatprep.subr.mxu0 0.0
      %3349 = vmatpush1.msra.mxu0 0.0
      %3350 = vmatprep.subr.mxu0 0.0
      %3351 = vmatpush1.msra.mxu0 0.0
      %3352 = vmatprep.mubr.f32.mxu0 0.0
      %v3353 = vand.u32 %v2817, 4294901760
      %3354 = vmatmul.mubr.f32.gmra.mrb[0].mxu0 %v3353
      %v3355 = vpop.f32.mrb[0].mxu0
      %v3356 = vadd.f32 %v3241, %v3355
      %v3357 = vpop.f32.mrb[0].mxu0
      %3358 = vmatprep.mubr.f32.mxu0 0.0
      %v3359 = vand.u32 %v2820, 4294901760
      %3360 = vmatmul.mubr.f32.gmra.mrb[0].mxu0 %v3359
      %v3361 = vpop.f32.mrb[0].mxu0
      %v3362 = vadd.f32 %v3249, %v3361
      %v3363 = vpop.f32.mrb[0].mxu0
      %3364 = vdwg.mxu0
      %3365 = vmatprep.subr.mxu0 0.0
      %v3366 = vand.u32 %v362, 4294901760
      %3367 = vmatpush1.msra.mxu0 %v3366
      %3368 = vmatprep.subr.mxu0 0.0
      %v3369 = vand.u32 %v363, 4294901760
      %3370 = vmatpush1.msra.mxu0 %v3369
      %3371 = vmatprep.subr.mxu0 0.0
      %v3372 = vand.u32 %v364, 4294901760
      %3373 = vmatpush1.msra.mxu0 %v3372
      %3374 = vmatprep.subr.mxu0 0.0
      %v3375 = vand.u32 %v365, 4294901760
      %3376 = vmatpush1.msra.mxu0 %v3375
      %3377 = vmatprep.subr.mxu0 0.0
      %v3378 = vand.u32 %v366, 4294901760
      %3379 = vmatpush1.msra.mxu0 %v3378
      %3380 = vmatprep.subr.mxu0 0.0
      %v3381 = vand.u32 %v367, 4294901760
      %3382 = vmatpush1.msra.mxu0 %v3381
      %3383 = vmatprep.subr.mxu0 0.0
      %v3384 = vand.u32 %v368, 4294901760
      %3385 = vmatpush1.msra.mxu0 %v3384
      %3386 = vmatprep.subr.mxu0 0.0
      %v3387 = vand.u32 %v369, 4294901760
      %3388 = vmatpush1.msra.mxu0 %v3387
      %3389 = vmatprep.subr.mxu0 0.0
      %v3390 = vand.u32 %v370, 4294901760
      %3391 = vmatpush1.msra.mxu0 %v3390
      %3392 = vmatprep.subr.mxu0 0.0
      %v3393 = vand.u32 %v371, 4294901760
      %3394 = vmatpush1.msra.mxu0 %v3393
      %3395 = vmatprep.subr.mxu0 0.0
      %v3396 = vand.u32 %v372, 4294901760
      %3397 = vmatpush1.msra.mxu0 %v3396
      %3398 = vmatprep.subr.mxu0 0.0
      %v3399 = vand.u32 %v373, 4294901760
      %3400 = vmatpush1.msra.mxu0 %v3399
      %3401 = vmatprep.subr.mxu0 0.0
      %3402 = vmatpush1.msra.mxu0 0.0
      %3403 = vmatprep.subr.mxu0 0.0
      %3404 = vmatpush1.msra.mxu0 0.0
      %3405 = vmatprep.subr.mxu0 0.0
      %3406 = vmatpush1.msra.mxu0 0.0
      %3407 = vmatprep.subr.mxu0 0.0
      %3408 = vmatpush1.msra.mxu0 0.0
      %3409 = vmatprep.subr.mxu0 0.0
      %3410 = vmatpush1.msra.mxu0 0.0
      %3411 = vmatprep.subr.mxu0 0.0
      %3412 = vmatpush1.msra.mxu0 0.0
      %3413 = vmatprep.subr.mxu0 0.0
      %3414 = vmatpush1.msra.mxu0 0.0
      %3415 = vmatprep.subr.mxu0 0.0
      %3416 = vmatpush1.msra.mxu0 0.0
      %3417 = vmatprep.subr.mxu0 0.0
      %3418 = vmatpush1.msra.mxu0 0.0
      %3419 = vmatprep.subr.mxu0 0.0
      %3420 = vmatpush1.msra.mxu0 0.0
      %3421 = vmatprep.subr.mxu0 0.0
      %3422 = vmatpush1.msra.mxu0 0.0
      %3423 = vmatprep.subr.mxu0 0.0
      %3424 = vmatpush1.msra.mxu0 0.0
      %3425 = vmatprep.subr.mxu0 0.0
      %3426 = vmatpush1.msra.mxu0 0.0
      %3427 = vmatprep.subr.mxu0 0.0
      %3428 = vmatpush1.msra.mxu0 0.0
      %3429 = vmatprep.subr.mxu0 0.0
      %3430 = vmatpush1.msra.mxu0 0.0
      %3431 = vmatprep.subr.mxu0 0.0
      %3432 = vmatpush1.msra.mxu0 0.0
      %3433 = vmatprep.subr.mxu0 0.0
      %3434 = vmatpush1.msra.mxu0 0.0
      %3435 = vmatprep.subr.mxu0 0.0
      %3436 = vmatpush1.msra.mxu0 0.0
      %3437 = vmatprep.subr.mxu0 0.0
      %3438 = vmatpush1.msra.mxu0 0.0
      %3439 = vmatprep.subr.mxu0 0.0
      %3440 = vmatpush1.msra.mxu0 0.0
      %3441 = vmatprep.mubr.f32.mxu0 0.0
      %v3442 = vand.u32 %v2817, 4294901760
      %3443 = vmatmul.mubr.f32.gmra.mrb[0].mxu0 %v3442
      %v3444 = vpop.f32.mrb[0].mxu0
      %v3445 = vadd.f32 %v3356, %v3444
      %v3446 = vpop.f32.mrb[0].mxu0
      %3447 = vmatprep.mubr.f32.mxu0 0.0
      %v3448 = vand.u32 %v2820, 4294901760
      %3449 = vmatmul.mubr.f32.gmra.mrb[0].mxu0 %v3448
      %v3450 = vpop.f32.mrb[0].mxu0
      %v3451 = vadd.f32 %v3362, %v3450
      %v3452 = vpop.f32.mrb[0].mxu0
      %3453 = vdwg.mxu0
      %3454 = vst.msk [vmem:[%s342] sm:$0xff] %vm1335, %v3445
      %3455 = vst.msk [vmem:[%s342 + $0x8] sm:$0xf] %vm2126, %v3451
      %p3456 = scmp.lt.s32.totalorder %s20, 1
      %s3457 = scalar_select %p3456, %s20, 1
      %s3458 = smul.addr %s3457, 9
      %s3459 = smul.addr %s3458, 8
      %s3460 = scalar_lea.vmem %s5, %s3459
      %p3461 = scmp.lt.s32.totalorder %s20, 1
      %s3462 = scalar_select %p3461, %s20, 1
      %s3463 = smul.addr %s3462, 5
      %s3464 = smul.addr %s3463, 8
      %s3465 = scalar_lea.vmem %s6, %s3464
      %p3466 = scmp.lt.s32.totalorder %s20, 1
      %s3467 = scalar_select %p3466, %s20, 1
      %s3468 = smul.addr %s3467, 3
      %s3469 = smul.addr %s3468, 8
      %s3470 = scalar_lea.vmem %s7, %s3469
      %p3471 = scmp.lt.s32.totalorder %s20, 1
      %s3472 = scalar_select %p3471, %s20, 1
      %s3473 = smul.addr %s3472, 2
      %s3474 = smul.addr %s3473, 8
      %s3475 = scalar_lea.vmem %s8, %s3474
      // Predicated region
      $region41: #{_lambda_.1} parent=39 // pred_check
        %p3476 = pneg %p148
      $region42: #{_lambda_.1} parent=39 // pred_check_branch
        %3478 = sbr.rel (%p3476) target = $region44
      $region43: #{_lambda_.1} parent=39 // pred_region
        _
      $region44: #{_lambda_.1} parent=39 // pred_fallthru
        _
      // Predicated region
      $region45: #{_lambda_.1} parent=39 // pred_check
        %p3479 = pneg %p174
      $region46: #{_lambda_.1} parent=39 // pred_check_branch
        %3481 = sbr.rel (%p3479) target = $region48
      $region47: #{_lambda_.1} parent=39 // pred_region
        _
      $region48: #{_lambda_.1} parent=39 // pred_fallthru
        _
      // Predicated region
      $region49: #{_lambda_.1} parent=39 // pred_check
        %p3482 = pneg %p200
      $region50: #{_lambda_.1} parent=39 // pred_check_branch
        %3484 = sbr.rel (%p3482) target = $region52
      $region51: #{_lambda_.1} parent=39 // pred_region
        _
      $region52: #{_lambda_.1} parent=39 // pred_fallthru
        _
      // Predicated region
      $region53: #{_lambda_.1} parent=39 // pred_check
        %p3485 = pneg %p226
      $region54: #{_lambda_.1} parent=39 // pred_check_branch
        %3487 = sbr.rel (%p3485) target = $region56
      $region55: #{_lambda_.1} parent=39 // pred_region
        _
      $region56: #{_lambda_.1} parent=39 // pred_fallthru
        _
    $region40: #{_lambda_.1} parent=5 // pred_fallthru
      _
    %p3488 = scmp.le.s32.totalorder 2, %s15
    // Predicated region
    $region57: #{_lambda_.1} parent=5 // pred_check
      %p3489 = pneg %p3488
    $region58: #{_lambda_.1} parent=5 // pred_check_branch
      %3491 = sbr.rel (%p3489) target = $region60
    $region59: #{_lambda_.1} parent=5 // pred_region
      %s3492 = ssub.s32 %s15, 2
      // Predicated region
      $region61: #{_lambda_.1} parent=59 // pred_check
        %p3493 = pneg %p154
      $region62: #{_lambda_.1} parent=59 // pred_check_branch
        %3495 = sbr.rel (%p3493) target = $region64
      $region63: #{_lambda_.1} parent=59 // pred_region
        %p3496 = scmp.lt.s32.totalorder %s21, 1
        %s3497 = scalar_select %p3496, %s21, 1
        %s3498 = smul.addr %s3497, 9
        %s3499 = smul.addr %s3498, 8
        %s3500 = scalar_lea.vmem %s5, %s3499
      $region64: #{_lambda_.1} parent=59 // pred_fallthru
        _
      // Predicated region
      $region65: #{_lambda_.1} parent=59 // pred_check
        %p3501 = pneg %p180
      $region66: #{_lambda_.1} parent=59 // pred_check_branch
        %3503 = sbr.rel (%p3501) target = $region68
      $region67: #{_lambda_.1} parent=59 // pred_region
        %p3504 = scmp.lt.s32.totalorder %s21, 1
        %s3505 = scalar_select %p3504, %s21, 1
        %s3506 = smul.addr %s3505, 5
        %s3507 = smul.addr %s3506, 8
        %s3508 = scalar_lea.vmem %s6, %s3507
      $region68: #{_lambda_.1} parent=59 // pred_fallthru
        _
      // Predicated region
      $region69: #{_lambda_.1} parent=59 // pred_check
        %p3509 = pneg %p206
      $region70: #{_lambda_.1} parent=59 // pred_check_branch
        %3511 = sbr.rel (%p3509) target = $region72
      $region71: #{_lambda_.1} parent=59 // pred_region
        %p3512 = scmp.lt.s32.totalorder %s21, 1
        %s3513 = scalar_select %p3512, %s21, 1
        %s3514 = smul.addr %s3513, 3
        %s3515 = smul.addr %s3514, 8
        %s3516 = scalar_lea.vmem %s7, %s3515
      $region72: #{_lambda_.1} parent=59 // pred_fallthru
        _
      // Predicated region
      $region73: #{_lambda_.1} parent=59 // pred_check
        %p3517 = pneg %p232
      $region74: #{_lambda_.1} parent=59 // pred_check_branch
        %3519 = sbr.rel (%p3517) target = $region76
      $region75: #{_lambda_.1} parent=59 // pred_region
        %p3520 = scmp.lt.s32.totalorder %s21, 1
        %s3521 = scalar_select %p3520, %s21, 1
        %s3522 = smul.addr %s3521, 2
        %s3523 = smul.addr %s3522, 8
        %s3524 = scalar_lea.vmem %s8, %s3523
      $region76: #{_lambda_.1} parent=59 // pred_fallthru
        _
    $region60: #{_lambda_.1} parent=5 // pred_fallthru
      _
  $region6: #{_lambda_.1} parent=0 // loop_footer
    %s19 = sadd.s32 1, %s15
  $region7: #{_lambda_.1} parent=0 // loop_footer_branch
    %14 = sbr.rel target = $region3
  $region8: #{_lambda_.1} parent=0 // loop_exit
    _

</llo_original>
